<compile_context>
chip_gen: v5e
topology: v5e:2x2
jax: 0.10.0
libtpu: 0.0.40
codegen_flags: <defaults>
</compile_context>

<pallas_src>
import functools
import math

import jax
import jax.numpy as jnp
import numpy as np
from jax.experimental import pallas as pl
from jax.experimental.pallas import tpu as pltpu


def _attention_pooling_lnorm_kernel(
    x_ref,       # (BB, S, D)    input feature block
    pe_ref,      # (S, D)        positional-encoding table
    wpool_ref,   # (1, L, D)     attention-pooling weights (all layers)
    wenc_ref,    # (D, D4)       shared encoder weight (transposed torch layout)
    benc_ref,    # (1, D4)       shared encoder bias
    lnw_ref,     # (L, 1, D4)    LayerNorm weight (per-layer scalar, broadcast to D4)
    lnb_ref,     # (L, 1, D4)    LayerNorm bias
    wcls_ref,    # (L, D4, Cp)   classifier weight, per-layer permuted, C padded to Cp
    bcls_ref,    # (1, Cp)       classifier bias (padded)
    o_ref,       # (BB, Cp)      output logits block
    xpe_ref,     # (BB, S, D)    VMEM scratch: x + positional encoding
    *, num_layers, eps):
    # TODO(synk): nn.Dropout (on positional encoding and on attention weights) is
    # identity in eval mode; training-mode stochastic masking is not implemented.
    bb, s, d = x_ref.shape

    # (1) x + positional encoding, materialized once into an explicit VMEM scratch;
    #     both fused MXU contractions below stream from this single buffer.
    xpe_ref[...] = x_ref[...] + pe_ref[...]
    x = xpe_ref[...]                                             # (BB, S, D)

    # (2) All-layer attention scores in ONE batched MXU contraction (was L VPU
    #     multiply + cross-lane reduce passes).  S lands on the lane axis.
    wpool_b = jnp.broadcast_to(wpool_ref[...], (bb, num_layers, d))
    scores = jnp.einsum("bld,bsd->bls", wpool_b, x,
                        preferred_element_type=jnp.float32)      # (BB, L, S)

    # (3) Numerically-stable softmax over S (lane axis -> full-width reduces).
    m = jnp.max(scores, axis=-1, keepdims=True)                  # (BB, L, 1)
    p = jnp.exp(scores - m)
    attn = p / jnp.sum(p, axis=-1, keepdims=True)                # (BB, L, S)

    # (4) All-layer attention-weighted pooling in ONE batched MXU contraction
    #     (was L VPU multiply + sublane-reduce passes over the big slab).
    att = jnp.einsum("bls,bsd->bld", attn, x,
                     preferred_element_type=jnp.float32)         # (BB, L, D)

    # (5) Shared encoder Linear(D, D/4) + ReLU per layer (small 2-D MXU matmuls on
    #     the already-pooled (BB, D) rows; negligible vs. the fused passes above).
    wenc = wenc_ref[...]                                         # (D, D4)
    benc = benc_ref[...]                                         # (1, D4)
    enc = []
    for l in range(num_layers):
        e = jnp.dot(att[:, l, :], wenc, preferred_element_type=jnp.float32) + benc
        enc.append(jnp.maximum(e, 0.0))                          # (BB, D4)

    # (6) LayerNorm across the num_layers axis (per (batch, d4), biased variance).
    inv_n = 1.0 / num_layers
    mean = enc[0]
    for e in enc[1:]:
        mean = mean + e
    mean = mean * inv_n
    var = jnp.zeros_like(mean)
    for e in enc:
        dlt = e - mean
        var = var + dlt * dlt
    var = var * inv_n
    inv = jax.lax.rsqrt(var + eps)

    # (7) Final classifier; the torch d4-major/layer-minor flatten is baked into the
    #     pre-permuted wcls layout, so this is L small (BB,D4)x(D4,Cp) accumulations.
    logits = bcls_ref[...]                                       # (1, Cp)
    for l in range(num_layers):
        normed = (enc[l] - mean) * inv * lnw_ref[l] + lnb_ref[l] # (BB, D4)
        logits = logits + jnp.dot(normed, wcls_ref[l],
                                  preferred_element_type=jnp.float32)
    o_ref[...] = logits.astype(o_ref.dtype)                      # (BB, Cp)


def attention_pooling_lnorm(
    x, wpool, wenc, benc, ln_w, ln_b, wcls, bcls, *,
    num_segments, num_features, num_layers=3, eps=1e-5, block_b=None):
    """Forward pass of AttentionPoolingLnorm (eval mode).

    x:     (nt, chw) float32, nt = B * num_segments, chw = num_features * h * h
    wpool: (num_layers, D)                   stacked Linear(D, 1, bias=False) weights
    wenc:  (D4, D), benc: (D4,)              shared encoder Linear (torch layout)
    ln_w, ln_b: (num_layers,)                LayerNorm(num_layers) affine params
    wcls:  (C, D4 * num_layers), bcls: (C,)  final classifier (torch layout)
    """
    nt, chw = x.shape
    D = num_features
    h = int(round(math.sqrt(chw / D)))
    assert D * h * h == chw, "chw must equal num_features * h * h"
    S = num_segments * h * h
    D4 = D // 4
    B = (nt * chw) // (S * D)
    assert B * S * D == nt * chw
    C = wcls.shape[0]
    C_pad = ((C + 127) // 128) * 128

    x3 = jnp.asarray(x, jnp.float32).reshape(B, S, D)

    # Positional-encoding table for the first S positions (same formula as torch).
    pos = np.arange(S, dtype=np.float32)[:, None]
    div = np.exp(np.arange(0, D, 2, dtype=np.float32) * (-math.log(10000.0) / D))
    pe = np.zeros((S, D), dtype=np.float32)
    pe[:, 0::2] = np.sin(pos * div)
    pe[:, 1::2] = np.cos(pos * div)
    pe = jnp.asarray(pe)

    wpool_k = jnp.asarray(wpool, jnp.float32).reshape(1, num_layers, D)
    wenc_k = jnp.asarray(wenc, jnp.float32).T                       # (D, D4)
    benc_k = jnp.asarray(benc, jnp.float32).reshape(1, D4)
    lnw_k = jnp.broadcast_to(
        jnp.asarray(ln_w, jnp.float32).reshape(num_layers, 1, 1), (num_layers, 1, D4))
    lnb_k = jnp.broadcast_to(
        jnp.asarray(ln_b, jnp.float32).reshape(num_layers, 1, 1), (num_layers, 1, D4))
    # Torch flattens (B, D4, L) d4-major / layer-minor; bake that permutation into
    # the classifier weight:  wcls_k[l, d4, c] = wcls[c, d4 * L + l], pad C -> C_pad.
    wcls_k = jnp.asarray(wcls, jnp.float32).reshape(C, D4, num_layers)
    wcls_k = jnp.transpose(wcls_k, (2, 1, 0))                       # (L, D4, C)
    wcls_k = jnp.pad(wcls_k, ((0, 0), (0, 0), (0, C_pad - C)))
    bcls_k = jnp.pad(jnp.asarray(bcls, jnp.float32), (0, C_pad - C)).reshape(1, C_pad)

    # ---- per-generation sizing ------------------------------------------------
    try:
        vmem_cap = int(pltpu.get_tpu_info().vmem_capacity_bytes)
    except Exception:
        vmem_cap = 64 * 1024 * 1024          # conservative (v7x: 64 MiB / TensorCore)
    try:
        num_tc = max(1, min(2, int(getattr(jax.devices()[0], "num_cores", 1) or 1)))
    except Exception:
        num_tc = 1

    const_bytes = 4 * (S * D + num_layers * D + D * D4 + D4
                       + 2 * num_layers * D4 + num_layers * D4 * C_pad + C_pad)
    row_bytes = 4 * S * D
    if block_b is None:
        # Budget: 2x double-buffered x input + 1x (x+pe) scratch + ~1x compiler
        # temps ~= 4x the x block, plus constants; target 8-16 MiB x blocks.
        usable = max(8 << 20, int(0.70 * vmem_cap) - 2 * const_bytes)
        x_budget = min(12 << 20, usable // 4)
        block_b = max(1, x_budget // row_bytes)
        block_b = min(block_b, ((B + 7) // 8) * 8)
        if block_b >= 8:
            block_b = (block_b // 8) * 8      # sublane-aligned -> unmasked stores
    num_blocks = -(-B // block_b)
    # On 2-TensorCore chips keep the 'parallel' grid length a multiple of the core
    # count so megacore splits it evenly (no-op on single-core chips / 1-block grids).
    if num_blocks > 1 and num_tc > 1 and (num_blocks % num_tc):
        num_blocks += num_tc - (num_blocks % num_tc)
    B_pad = num_blocks * block_b
    if B_pad != B:
        # Zero-pad the batch so every block is full; padded rows stay finite
        # (x = pe only) and are sliced off below.
        x3 = jnp.pad(x3, ((0, B_pad - B), (0, 0), (0, 0)))

    x_block_bytes = block_b * row_bytes
    temps_bytes = 4 * block_b * (3 * num_layers * S + 2 * num_layers * D
                                 + 6 * num_layers * D4 + 2 * C_pad)
    vmem_limit = 4 * x_block_bytes + 2 * const_bytes + temps_bytes + (4 << 20)
    vmem_limit = int(min(vmem_cap, max(32 << 20, vmem_limit)))

    kernel = functools.partial(
        _attention_pooling_lnorm_kernel, num_layers=num_layers, eps=eps)

    def _make_in_specs(single_buffer_consts):
        cm = {"pipeline_mode": pl.Buffered(1)} if single_buffer_consts else {}
        return [
            pl.BlockSpec((block_b, S, D), lambda i: (i, 0, 0)),
            pl.BlockSpec((S, D), lambda i: (0, 0), **cm),
            pl.BlockSpec((1, num_layers, D), lambda i: (0, 0, 0), **cm),
            pl.BlockSpec((D, D4), lambda i: (0, 0), **cm),
            pl.BlockSpec((1, D4), lambda i: (0, 0), **cm),
            pl.BlockSpec((num_layers, 1, D4), lambda i: (0, 0, 0), **cm),
            pl.BlockSpec((num_layers, 1, D4), lambda i: (0, 0, 0), **cm),
            pl.BlockSpec((num_layers, D4, C_pad), lambda i: (0, 0, 0), **cm),
            pl.BlockSpec((1, C_pad), lambda i: (0, 0), **cm),
        ]

    def _run(single_buffer_consts):
        return pl.pallas_call(
            kernel,
            out_shape=jax.ShapeDtypeStruct((B_pad, C_pad), jnp.float32),
            grid=(num_blocks,),
            in_specs=_make_in_specs(single_buffer_consts),
            out_specs=pl.BlockSpec((block_b, C_pad), lambda i: (i, 0)),
            scratch_shapes=[pltpu.VMEM((block_b, S, D), jnp.float32)],
            compiler_params=pltpu.CompilerParams(
                dimension_semantics=("parallel",),
                vmem_limit_bytes=vmem_limit),
        )(x3, pe, wpool_k, wenc_k, benc_k, lnw_k, lnb_k, wcls_k, bcls_k)

    try:
        out = _run(True)      # constants single-buffered (frees VMEM for x blocks)
    except Exception:
        out = _run(False)     # fall back to default double-buffering if rejected
    return out[:B, :C]


if __name__ == "__main__":
    # Small shapes consistent with the module.
    B = 2            # batch
    T = 8            # num_segments (num_clips)
    D = 32           # num_features (= hidden_dim)
    H = 4            # spatial size (h == w)  ->  S = T*H*H = 128
    L = 3            # num_layers
    C = 10           # num_classes
    D4 = D // 4

    nt = B * T
    chw = D * H * H

    key = jax.random.PRNGKey(0)
    ks = jax.random.split(key, 8)

    x = jax.random.normal(ks[0], (nt, chw), dtype=jnp.float32)

    # Deterministic parameters (pooling weights scaled up so softmax is non-trivial).
    wpool = 0.5 * jax.random.normal(ks[1], (L, D), dtype=jnp.float32)
    bnd = 1.0 / math.sqrt(D)
    wenc = jax.random.uniform(ks[2], (D4, D), jnp.float32, -bnd, bnd)
    benc = jax.random.uniform(ks[3], (D4,), jnp.float32, -bnd, bnd)
    ln_w = 1.0 + 0.1 * jax.random.normal(ks[4], (L,), dtype=jnp.float32)
    ln_b = 0.1 * jax.random.normal(ks[5], (L,), dtype=jnp.float32)
    bnd_c = 1.0 / math.sqrt(D4 * L)
    wcls = jax.random.uniform(ks[6], (C, D4 * L), jnp.float32, -bnd_c, bnd_c)
    bcls = jax.random.uniform(ks[7], (C,), jnp.float32, -bnd_c, bnd_c)

    out = attention_pooling_lnorm(
        x, wpool, wenc, benc, ln_w, ln_b, wcls, bcls,
        num_segments=T, num_features=D, num_layers=L)
    out = jax.block_until_ready(out)

    # Pure-JAX reference mirroring the PyTorch forward (eval mode).
    S = T * H * H
    pos = np.arange(S, dtype=np.float32)[:, None]
    div = np.exp(np.arange(0, D, 2, dtype=np.float32) * (-math.log(10000.0) / D))
    pe = np.zeros((S, D), dtype=np.float32)
    pe[:, 0::2] = np.sin(pos * div)
    pe[:, 1::2] = np.cos(pos * div)

    hp = jax.lax.Precision.HIGHEST
    feats = x.reshape(B, S, D) + jnp.asarray(pe)[None]
    encs = []
    for l in range(L):
        scores = jnp.einsum("bsd,d->bs", feats, wpool[l], precision=hp)
        attn = jax.nn.softmax(scores, axis=-1)
        att = jnp.einsum("bs,bsd->bd", attn, feats, precision=hp)
        encs.append(jnp.maximum(jnp.dot(att, wenc.T, precision=hp) + benc, 0.0))
    ff = jnp.stack(encs, axis=-1)                           # (B, D4, L)
    mean = jnp.mean(ff, axis=-1, keepdims=True)
    var = jnp.mean((ff - mean) ** 2, axis=-1, keepdims=True)
    ffn = (ff - mean) / jnp.sqrt(var + 1e-5) * ln_w + ln_b
    ref = jnp.dot(ffn.reshape(B, D4 * L), wcls.T, precision=hp) + bcls

    np.testing.assert_allclose(np.asarray(out), np.asarray(ref), rtol=2e-4, atol=2e-4)
    print("KERNEL_OK")
</pallas_src>

<mosaic_0001>
module attributes {stable_mosaic.version = 11 : i64} {
  func.func @_attention_pooling_lnorm_kernel(%arg0: i32, %arg1: memref<8x128x32xf32, #tpu.memory_space<vmem>>, %arg2: memref<128x32xf32, #tpu.memory_space<vmem>>, %arg3: memref<1x3x32xf32, #tpu.memory_space<vmem>>, %arg4: memref<32x8xf32, #tpu.memory_space<vmem>>, %arg5: memref<1x8xf32, #tpu.memory_space<vmem>>, %arg6: memref<3x1x8xf32, #tpu.memory_space<vmem>>, %arg7: memref<3x1x8xf32, #tpu.memory_space<vmem>>, %arg8: memref<3x8x128xf32, #tpu.memory_space<vmem>>, %arg9: memref<1x128xf32, #tpu.memory_space<vmem>>, %arg10: memref<8x128xf32, #tpu.memory_space<vmem>>, %arg11: memref<8x128x32xf32, #tpu.memory_space<vmem>>) attributes {dimension_semantics = [#tpu.dimension_semantics<parallel>], iteration_bounds = array<i64: 1>, scalar_prefetch = 0 : i64, scratch_operands = 1 : i64, tpu.core_type = #tpu.core_type<tc>, window_params = [{transform_indices = @transform_0, window_bounds = array<i64: 8, 128, 32>}, {pipeline_mode = #tpu.pipeline_mode<synchronous>, transform_indices = @transform_1, window_bounds = array<i64: 128, 32>}, {pipeline_mode = #tpu.pipeline_mode<synchronous>, transform_indices = @transform_2, window_bounds = array<i64: 1, 3, 32>}, {pipeline_mode = #tpu.pipeline_mode<synchronous>, transform_indices = @transform_3, window_bounds = array<i64: 32, 8>}, {pipeline_mode = #tpu.pipeline_mode<synchronous>, transform_indices = @transform_4, window_bounds = array<i64: 1, 8>}, {pipeline_mode = #tpu.pipeline_mode<synchronous>, transform_indices = @transform_5, window_bounds = array<i64: 3, 1, 8>}, {pipeline_mode = #tpu.pipeline_mode<synchronous>, transform_indices = @transform_6, window_bounds = array<i64: 3, 1, 8>}, {pipeline_mode = #tpu.pipeline_mode<synchronous>, transform_indices = @transform_7, window_bounds = array<i64: 3, 8, 128>}, {pipeline_mode = #tpu.pipeline_mode<synchronous>, transform_indices = @transform_8, window_bounds = array<i64: 1, 128>}, {transform_indices = @transform_9, window_bounds = array<i64: 8, 128>}]} {
    %c0 = arith.constant 0 : index
    %c0_0 = arith.constant 0 : index
    %c0_1 = arith.constant 0 : index
    %0 = vector.load %arg1[%c0, %c0_0, %c0_1] : memref<8x128x32xf32, #tpu.memory_space<vmem>>, vector<8x128x32xf32>
    %c0_2 = arith.constant 0 : index
    %c0_3 = arith.constant 0 : index
    %1 = vector.load %arg2[%c0_2, %c0_3] : memref<128x32xf32, #tpu.memory_space<vmem>>, vector<128x32xf32>
    %2 = vector.shape_cast %1 : vector<128x32xf32> to vector<1x128x32xf32>
    %3 = vector.broadcast %2 : vector<1x128x32xf32> to vector<8x128x32xf32>
    %4 = arith.addf %0, %3 : vector<8x128x32xf32>
    %c0_4 = arith.constant 0 : index
    %c0_5 = arith.constant 0 : index
    %c0_6 = arith.constant 0 : index
    %5 = vector.load %arg11[%c0_4, %c0_5, %c0_6] : memref<8x128x32xf32, #tpu.memory_space<vmem>>, vector<8x128x32xf32>
    tpu.vector_store %arg11[%c0_4, %c0_5, %c0_6], %4 {strides = array<i32>} : memref<8x128x32xf32, #tpu.memory_space<vmem>>, vector<8x128x32xf32>,
    %c0_7 = arith.constant 0 : index
    %c0_8 = arith.constant 0 : index
    %c0_9 = arith.constant 0 : index
    %6 = vector.load %arg11[%c0_7, %c0_8, %c0_9] : memref<8x128x32xf32, #tpu.memory_space<vmem>>, vector<8x128x32xf32>
    %c0_10 = arith.constant 0 : index
    %c0_11 = arith.constant 0 : index
    %c0_12 = arith.constant 0 : index
    %7 = vector.load %arg3[%c0_10, %c0_11, %c0_12] : memref<1x3x32xf32, #tpu.memory_space<vmem>>, vector<1x3x32xf32>
    %8 = vector.shape_cast %7 : vector<1x3x32xf32> to vector<1x3x32xf32>
    %9 = vector.broadcast %8 : vector<1x3x32xf32> to vector<8x3x32xf32>
    "tpu.trace_start"() <{level = 10 : i32, message = "bld,bsd->bls"}> : () -> ()
    %cst = arith.constant dense<0.000000e+00> : vector<8x3x128xf32>
    %10 = tpu.matmul %9, %6, %cst {dimension_numbers = #tpu.dot_dimension_numbers<[2], [2], [1], [1], [0, 0, 0, 1, 1, 1], [0], [0]>} : vector<8x3x32xf32>, vector<8x128x32xf32>, vector<8x3x128xf32> -> vector<8x3x128xf32>
    "tpu.trace_stop"() : () -> ()
    %cst_13 = arith.constant dense<0xFF800000> : vector<8x3xf32>
    %11 = vector.multi_reduction <maximumf>, %10, %cst_13 [2] : vector<8x3x128xf32> to vector<8x3xf32>
    %12 = vector.shape_cast %11 : vector<8x3xf32> to vector<8x3x1xf32>
    %13 = vector.broadcast %12 : vector<8x3x1xf32> to vector<8x3x128xf32>
    %14 = arith.subf %10, %13 : vector<8x3x128xf32>
    %15 = math.exp %14 : vector<8x3x128xf32>
    %cst_14 = arith.constant dense<0.000000e+00> : vector<8x3xf32>
    %16 = vector.multi_reduction <add>, %15, %cst_14 [2] : vector<8x3x128xf32> to vector<8x3xf32>
    %17 = vector.shape_cast %16 : vector<8x3xf32> to vector<8x3x1xf32>
    %18 = vector.broadcast %17 : vector<8x3x1xf32> to vector<8x3x128xf32>
    %19 = arith.divf %15, %18 : vector<8x3x128xf32>
    "tpu.trace_start"() <{level = 10 : i32, message = "bls,bsd->bld"}> : () -> ()
    %cst_15 = arith.constant dense<0.000000e+00> : vector<8x3x32xf32>
    %20 = tpu.matmul %19, %6, %cst_15 {dimension_numbers = #tpu.dot_dimension_numbers<[2], [1], [1], [2], [0, 0, 0, 1, 1, 2], [0], [0]>} : vector<8x3x128xf32>, vector<8x128x32xf32>, vector<8x3x32xf32> -> vector<8x3x32xf32>
    "tpu.trace_stop"() : () -> ()
    %c0_16 = arith.constant 0 : index
    %c0_17 = arith.constant 0 : index
    %21 = vector.load %arg4[%c0_16, %c0_17] : memref<32x8xf32, #tpu.memory_space<vmem>>, vector<32x8xf32>
    %c0_18 = arith.constant 0 : index
    %c0_19 = arith.constant 0 : index
    %22 = vector.load %arg5[%c0_18, %c0_19] : memref<1x8xf32, #tpu.memory_space<vmem>>, vector<1x8xf32>
    %23 = vector.extract_strided_slice %20 {offsets = [0, 0, 0], sizes = [8, 1, 32], strides = [1, 1, 1]} : vector<8x3x32xf32> to vector<8x1x32xf32>
    %24 = vector.shape_cast %23 : vector<8x1x32xf32> to vector<8x32xf32>
    %cst_20 = arith.constant dense<0.000000e+00> : vector<8x8xf32>
    %25 = tpu.matmul %24, %21, %cst_20 {dimension_numbers = #tpu.dot_dimension_numbers<[1], [0], [0], [1], [0, 0, 1, 1], [], []>} : vector<8x32xf32>, vector<32x8xf32>, vector<8x8xf32> -> vector<8x8xf32>
    %26 = vector.broadcast %22 : vector<1x8xf32> to vector<8x8xf32>
    %27 = arith.addf %25, %26 : vector<8x8xf32>
    %cst_21 = arith.constant 0.000000e+00 : f32
    %28 = vector.broadcast %cst_21 : f32 to vector<8x8xf32>
    %29 = arith.maximumf %27, %28 : vector<8x8xf32>
    %30 = vector.extract_strided_slice %20 {offsets = [0, 1, 0], sizes = [8, 1, 32], strides = [1, 1, 1]} : vector<8x3x32xf32> to vector<8x1x32xf32>
    %31 = vector.shape_cast %30 : vector<8x1x32xf32> to vector<8x32xf32>
    %cst_22 = arith.constant dense<0.000000e+00> : vector<8x8xf32>
    %32 = tpu.matmul %31, %21, %cst_22 {dimension_numbers = #tpu.dot_dimension_numbers<[1], [0], [0], [1], [0, 0, 1, 1], [], []>} : vector<8x32xf32>, vector<32x8xf32>, vector<8x8xf32> -> vector<8x8xf32>
    %33 = vector.broadcast %22 : vector<1x8xf32> to vector<8x8xf32>
    %34 = arith.addf %32, %33 : vector<8x8xf32>
    %cst_23 = arith.constant 0.000000e+00 : f32
    %35 = vector.broadcast %cst_23 : f32 to vector<8x8xf32>
    %36 = arith.maximumf %34, %35 : vector<8x8xf32>
    %37 = vector.extract_strided_slice %20 {offsets = [0, 2, 0], sizes = [8, 1, 32], strides = [1, 1, 1]} : vector<8x3x32xf32> to vector<8x1x32xf32>
    %38 = vector.shape_cast %37 : vector<8x1x32xf32> to vector<8x32xf32>
    %cst_24 = arith.constant dense<0.000000e+00> : vector<8x8xf32>
    %39 = tpu.matmul %38, %21, %cst_24 {dimension_numbers = #tpu.dot_dimension_numbers<[1], [0], [0], [1], [0, 0, 1, 1], [], []>} : vector<8x32xf32>, vector<32x8xf32>, vector<8x8xf32> -> vector<8x8xf32>
    %40 = vector.broadcast %22 : vector<1x8xf32> to vector<8x8xf32>
    %41 = arith.addf %39, %40 : vector<8x8xf32>
    %cst_25 = arith.constant 0.000000e+00 : f32
    %42 = vector.broadcast %cst_25 : f32 to vector<8x8xf32>
    %43 = arith.maximumf %41, %42 : vector<8x8xf32>
    %44 = arith.addf %29, %36 : vector<8x8xf32>
    %45 = arith.addf %44, %43 : vector<8x8xf32>
    %cst_26 = arith.constant 0.333333343 : f32
    %46 = vector.broadcast %cst_26 : f32 to vector<8x8xf32>
    %47 = arith.mulf %45, %46 : vector<8x8xf32>
    %cst_27 = arith.constant 0.000000e+00 : f32
    %48 = vector.broadcast %cst_27 : f32 to vector<8x8xf32>
    %49 = arith.subf %29, %47 : vector<8x8xf32>
    %50 = arith.mulf %49, %49 : vector<8x8xf32>
    %51 = arith.addf %48, %50 : vector<8x8xf32>
    %52 = arith.subf %36, %47 : vector<8x8xf32>
    %53 = arith.mulf %52, %52 : vector<8x8xf32>
    %54 = arith.addf %51, %53 : vector<8x8xf32>
    %55 = arith.subf %43, %47 : vector<8x8xf32>
    %56 = arith.mulf %55, %55 : vector<8x8xf32>
    %57 = arith.addf %54, %56 : vector<8x8xf32>
    %cst_28 = arith.constant 0.333333343 : f32
    %58 = vector.broadcast %cst_28 : f32 to vector<8x8xf32>
    %59 = arith.mulf %57, %58 : vector<8x8xf32>
    %cst_29 = arith.constant 9.99999974E-6 : f32
    %60 = vector.broadcast %cst_29 : f32 to vector<8x8xf32>
    %61 = arith.addf %59, %60 : vector<8x8xf32>
    %62 = math.rsqrt %61 : vector<8x8xf32>
    %c0_30 = arith.constant 0 : index
    %c0_31 = arith.constant 0 : index
    %63 = vector.load %arg9[%c0_30, %c0_31] : memref<1x128xf32, #tpu.memory_space<vmem>>, vector<1x128xf32>
    %64 = arith.subf %29, %47 : vector<8x8xf32>
    %65 = arith.mulf %64, %62 : vector<8x8xf32>
    %c0_32 = arith.constant 0 : index
    %c0_33 = arith.constant 0 : index
    %c0_34 = arith.constant 0 : index
    %66 = vector.load %arg6[%c0_32, %c0_33, %c0_34] : memref<3x1x8xf32, #tpu.memory_space<vmem>>, vector<1x1x8xf32>
    %67 = vector.shape_cast %66 : vector<1x1x8xf32> to vector<1x8xf32>
    %68 = vector.broadcast %67 : vector<1x8xf32> to vector<8x8xf32>
    %69 = arith.mulf %65, %68 : vector<8x8xf32>
    %c0_35 = arith.constant 0 : index
    %c0_36 = arith.constant 0 : index
    %c0_37 = arith.constant 0 : index
    %70 = vector.load %arg7[%c0_35, %c0_36, %c0_37] : memref<3x1x8xf32, #tpu.memory_space<vmem>>, vector<1x1x8xf32>
    %71 = vector.shape_cast %70 : vector<1x1x8xf32> to vector<1x8xf32>
    %72 = vector.broadcast %71 : vector<1x8xf32> to vector<8x8xf32>
    %73 = arith.addf %69, %72 : vector<8x8xf32>
    %c0_38 = arith.constant 0 : index
    %c0_39 = arith.constant 0 : index
    %c0_40 = arith.constant 0 : index
    %74 = vector.load %arg8[%c0_38, %c0_39, %c0_40] : memref<3x8x128xf32, #tpu.memory_space<vmem>>, vector<1x8x128xf32>
    %75 = vector.shape_cast %74 : vector<1x8x128xf32> to vector<8x128xf32>
    %cst_41 = arith.constant dense<0.000000e+00> : vector<8x128xf32>
    %76 = tpu.matmul %73, %75, %cst_41 {dimension_numbers = #tpu.dot_dimension_numbers<[1], [0], [0], [1], [0, 0, 1, 1], [], []>} : vector<8x8xf32>, vector<8x128xf32>, vector<8x128xf32> -> vector<8x128xf32>
    %77 = vector.broadcast %63 : vector<1x128xf32> to vector<8x128xf32>
    %78 = arith.addf %77, %76 : vector<8x128xf32>
    %79 = arith.subf %36, %47 : vector<8x8xf32>
    %80 = arith.mulf %79, %62 : vector<8x8xf32>
    %c1 = arith.constant 1 : index
    %c0_42 = arith.constant 0 : index
    %c0_43 = arith.constant 0 : index
    %81 = vector.load %arg6[%c1, %c0_42, %c0_43] : memref<3x1x8xf32, #tpu.memory_space<vmem>>, vector<1x1x8xf32>
    %82 = vector.shape_cast %81 : vector<1x1x8xf32> to vector<1x8xf32>
    %83 = vector.broadcast %82 : vector<1x8xf32> to vector<8x8xf32>
    %84 = arith.mulf %80, %83 : vector<8x8xf32>
    %c1_44 = arith.constant 1 : index
    %c0_45 = arith.constant 0 : index
    %c0_46 = arith.constant 0 : index
    %85 = vector.load %arg7[%c1_44, %c0_45, %c0_46] : memref<3x1x8xf32, #tpu.memory_space<vmem>>, vector<1x1x8xf32>
    %86 = vector.shape_cast %85 : vector<1x1x8xf32> to vector<1x8xf32>
    %87 = vector.broadcast %86 : vector<1x8xf32> to vector<8x8xf32>
    %88 = arith.addf %84, %87 : vector<8x8xf32>
    %c1_47 = arith.constant 1 : index
    %c0_48 = arith.constant 0 : index
    %c0_49 = arith.constant 0 : index
    %89 = vector.load %arg8[%c1_47, %c0_48, %c0_49] : memref<3x8x128xf32, #tpu.memory_space<vmem>>, vector<1x8x128xf32>
    %90 = vector.shape_cast %89 : vector<1x8x128xf32> to vector<8x128xf32>
    %cst_50 = arith.constant dense<0.000000e+00> : vector<8x128xf32>
    %91 = tpu.matmul %88, %90, %cst_50 {dimension_numbers = #tpu.dot_dimension_numbers<[1], [0], [0], [1], [0, 0, 1, 1], [], []>} : vector<8x8xf32>, vector<8x128xf32>, vector<8x128xf32> -> vector<8x128xf32>
    %92 = arith.addf %78, %91 : vector<8x128xf32>
    %93 = arith.subf %43, %47 : vector<8x8xf32>
    %94 = arith.mulf %93, %62 : vector<8x8xf32>
    %c2 = arith.constant 2 : index
    %c0_51 = arith.constant 0 : index
    %c0_52 = arith.constant 0 : index
    %95 = vector.load %arg6[%c2, %c0_51, %c0_52] : memref<3x1x8xf32, #tpu.memory_space<vmem>>, vector<1x1x8xf32>
    %96 = vector.shape_cast %95 : vector<1x1x8xf32> to vector<1x8xf32>
    %97 = vector.broadcast %96 : vector<1x8xf32> to vector<8x8xf32>
    %98 = arith.mulf %94, %97 : vector<8x8xf32>
    %c2_53 = arith.constant 2 : index
    %c0_54 = arith.constant 0 : index
    %c0_55 = arith.constant 0 : index
    %99 = vector.load %arg7[%c2_53, %c0_54, %c0_55] : memref<3x1x8xf32, #tpu.memory_space<vmem>>, vector<1x1x8xf32>
    %100 = vector.shape_cast %99 : vector<1x1x8xf32> to vector<1x8xf32>
    %101 = vector.broadcast %100 : vector<1x8xf32> to vector<8x8xf32>
    %102 = arith.addf %98, %101 : vector<8x8xf32>
    %c2_56 = arith.constant 2 : index
    %c0_57 = arith.constant 0 : index
    %c0_58 = arith.constant 0 : index
    %103 = vector.load %arg8[%c2_56, %c0_57, %c0_58] : memref<3x8x128xf32, #tpu.memory_space<vmem>>, vector<1x8x128xf32>
    %104 = vector.shape_cast %103 : vector<1x8x128xf32> to vector<8x128xf32>
    %cst_59 = arith.constant dense<0.000000e+00> : vector<8x128xf32>
    %105 = tpu.matmul %102, %104, %cst_59 {dimension_numbers = #tpu.dot_dimension_numbers<[1], [0], [0], [1], [0, 0, 1, 1], [], []>} : vector<8x8xf32>, vector<8x128xf32>, vector<8x128xf32> -> vector<8x128xf32>
    %106 = arith.addf %92, %105 : vector<8x128xf32>
    %c0_60 = arith.constant 0 : index
    %c0_61 = arith.constant 0 : index
    %107 = vector.load %arg10[%c0_60, %c0_61] : memref<8x128xf32, #tpu.memory_space<vmem>>, vector<8x128xf32>
    tpu.vector_store %arg10[%c0_60, %c0_61], %106 {strides = array<i32>} : memref<8x128xf32, #tpu.memory_space<vmem>>, vector<8x128xf32>,
    return
  }
  func.func @transform_0(%arg0: i32) -> (i32, i32, i32) {
    %c0_i32 = arith.constant 0 : i32
    %c0_i32_0 = arith.constant 0 : i32
    %c0_i32_1 = arith.constant 0 : i32
    return %arg0, %c0_i32, %c0_i32_0 : i32, i32, i32
  }
  func.func @transform_1(%arg0: i32) -> (i32, i32) {
    %c0_i32 = arith.constant 0 : i32
    %c0_i32_0 = arith.constant 0 : i32
    %c0_i32_1 = arith.constant 0 : i32
    return %c0_i32, %c0_i32_0 : i32, i32
  }
  func.func @transform_2(%arg0: i32) -> (i32, i32, i32) {
    %c0_i32 = arith.constant 0 : i32
    %c0_i32_0 = arith.constant 0 : i32
    %c0_i32_1 = arith.constant 0 : i32
    %c0_i32_2 = arith.constant 0 : i32
    return %c0_i32, %c0_i32_0, %c0_i32_1 : i32, i32, i32
  }
  func.func @transform_3(%arg0: i32) -> (i32, i32) {
    %c0_i32 = arith.constant 0 : i32
    %c0_i32_0 = arith.constant 0 : i32
    %c0_i32_1 = arith.constant 0 : i32
    return %c0_i32, %c0_i32_0 : i32, i32
  }
  func.func @transform_4(%arg0: i32) -> (i32, i32) {
    %c0_i32 = arith.constant 0 : i32
    %c0_i32_0 = arith.constant 0 : i32
    %c0_i32_1 = arith.constant 0 : i32
    return %c0_i32, %c0_i32_0 : i32, i32
  }
  func.func @transform_5(%arg0: i32) -> (i32, i32, i32) {
    %c0_i32 = arith.constant 0 : i32
    %c0_i32_0 = arith.constant 0 : i32
    %c0_i32_1 = arith.constant 0 : i32
    %c0_i32_2 = arith.constant 0 : i32
    return %c0_i32, %c0_i32_0, %c0_i32_1 : i32, i32, i32
  }
  func.func @transform_6(%arg0: i32) -> (i32, i32, i32) {
    %c0_i32 = arith.constant 0 : i32
    %c0_i32_0 = arith.constant 0 : i32
    %c0_i32_1 = arith.constant 0 : i32
    %c0_i32_2 = arith.constant 0 : i32
    return %c0_i32, %c0_i32_0, %c0_i32_1 : i32, i32, i32
  }
  func.func @transform_7(%arg0: i32) -> (i32, i32, i32) {
    %c0_i32 = arith.constant 0 : i32
    %c0_i32_0 = arith.constant 0 : i32
    %c0_i32_1 = arith.constant 0 : i32
    %c0_i32_2 = arith.constant 0 : i32
    return %c0_i32, %c0_i32_0, %c0_i32_1 : i32, i32, i32
  }
  func.func @transform_8(%arg0: i32) -> (i32, i32) {
    %c0_i32 = arith.constant 0 : i32
    %c0_i32_0 = arith.constant 0 : i32
    %c0_i32_1 = arith.constant 0 : i32
    return %c0_i32, %c0_i32_0 : i32, i32
  }
  func.func @transform_9(%arg0: i32) -> (i32, i32) {
    %c0_i32 = arith.constant 0 : i32
    %c0_i32_0 = arith.constant 0 : i32
    return %arg0, %c0_i32 : i32, i32
  }
}

module attributes {stable_mosaic.version = 11 : i64} {
  func.func @_attention_pooling_lnorm_kernel(%arg0: i32, %arg1: memref<8x128x32xf32, #tpu.memory_space<vmem>>, %arg2: memref<128x32xf32, #tpu.memory_space<vmem>>, %arg3: memref<1x3x32xf32, #tpu.memory_space<vmem>>, %arg4: memref<32x8xf32, #tpu.memory_space<vmem>>, %arg5: memref<1x8xf32, #tpu.memory_space<vmem>>, %arg6: memref<3x1x8xf32, #tpu.memory_space<vmem>>, %arg7: memref<3x1x8xf32, #tpu.memory_space<vmem>>, %arg8: memref<3x8x128xf32, #tpu.memory_space<vmem>>, %arg9: memref<1x128xf32, #tpu.memory_space<vmem>>, %arg10: memref<8x128xf32, #tpu.memory_space<vmem>>, %arg11: memref<8x128x32xf32, #tpu.memory_space<vmem>>) attributes {dimension_semantics = [#tpu.dimension_semantics<parallel>], iteration_bounds = array<i64: 1>, scalar_prefetch = 0 : i64, scratch_operands = 1 : i64, tpu.core_type = #tpu.core_type<tc>, window_params = [{transform_indices = @transform_0, window_bounds = array<i64: 8, 128, 32>}, {pipeline_mode = #tpu.pipeline_mode<synchronous>, transform_indices = @transform_1, window_bounds = array<i64: 128, 32>}, {pipeline_mode = #tpu.pipeline_mode<synchronous>, transform_indices = @transform_2, window_bounds = array<i64: 1, 3, 32>}, {pipeline_mode = #tpu.pipeline_mode<synchronous>, transform_indices = @transform_3, window_bounds = array<i64: 32, 8>}, {pipeline_mode = #tpu.pipeline_mode<synchronous>, transform_indices = @transform_4, window_bounds = array<i64: 1, 8>}, {pipeline_mode = #tpu.pipeline_mode<synchronous>, transform_indices = @transform_5, window_bounds = array<i64: 3, 1, 8>}, {pipeline_mode = #tpu.pipeline_mode<synchronous>, transform_indices = @transform_6, window_bounds = array<i64: 3, 1, 8>}, {pipeline_mode = #tpu.pipeline_mode<synchronous>, transform_indices = @transform_7, window_bounds = array<i64: 3, 8, 128>}, {pipeline_mode = #tpu.pipeline_mode<synchronous>, transform_indices = @transform_8, window_bounds = array<i64: 1, 128>}, {transform_indices = @transform_9, window_bounds = array<i64: 8, 128>}]} {
    %c0 = arith.constant 0 : index
    %c0_0 = arith.constant 0 : index
    %c0_1 = arith.constant 0 : index
    %0 = vector.load %arg1[%c0, %c0_0, %c0_1] : memref<8x128x32xf32, #tpu.memory_space<vmem>>, vector<8x128x32xf32>
    %c0_2 = arith.constant 0 : index
    %c0_3 = arith.constant 0 : index
    %1 = vector.load %arg2[%c0_2, %c0_3] : memref<128x32xf32, #tpu.memory_space<vmem>>, vector<128x32xf32>
    %2 = vector.shape_cast %1 : vector<128x32xf32> to vector<1x128x32xf32>
    %3 = vector.broadcast %2 : vector<1x128x32xf32> to vector<8x128x32xf32>
    %4 = arith.addf %0, %3 : vector<8x128x32xf32>
    %c0_4 = arith.constant 0 : index
    %c0_5 = arith.constant 0 : index
    %c0_6 = arith.constant 0 : index
    %5 = vector.load %arg11[%c0_4, %c0_5, %c0_6] : memref<8x128x32xf32, #tpu.memory_space<vmem>>, vector<8x128x32xf32>
    tpu.vector_store %arg11[%c0_4, %c0_5, %c0_6], %4 {strides = array<i32>} : memref<8x128x32xf32, #tpu.memory_space<vmem>>, vector<8x128x32xf32>,
    %c0_7 = arith.constant 0 : index
    %c0_8 = arith.constant 0 : index
    %c0_9 = arith.constant 0 : index
    %6 = vector.load %arg11[%c0_7, %c0_8, %c0_9] : memref<8x128x32xf32, #tpu.memory_space<vmem>>, vector<8x128x32xf32>
    %c0_10 = arith.constant 0 : index
    %c0_11 = arith.constant 0 : index
    %c0_12 = arith.constant 0 : index
    %7 = vector.load %arg3[%c0_10, %c0_11, %c0_12] : memref<1x3x32xf32, #tpu.memory_space<vmem>>, vector<1x3x32xf32>
    %8 = vector.shape_cast %7 : vector<1x3x32xf32> to vector<1x3x32xf32>
    %9 = vector.broadcast %8 : vector<1x3x32xf32> to vector<8x3x32xf32>
    "tpu.trace_start"() <{level = 10 : i32, message = "bld,bsd->bls"}> : () -> ()
    %cst = arith.constant dense<0.000000e+00> : vector<8x3x128xf32>
    %10 = tpu.matmul %9, %6, %cst {dimension_numbers = #tpu.dot_dimension_numbers<[2], [2], [1], [1], [0, 0, 0, 1, 1, 1], [0], [0]>} : vector<8x3x32xf32>, vector<8x128x32xf32>, vector<8x3x128xf32> -> vector<8x3x128xf32>
    "tpu.trace_stop"() : () -> ()
    %cst_13 = arith.constant dense<0xFF800000> : vector<8x3xf32>
    %11 = vector.multi_reduction <maximumf>, %10, %cst_13 [2] : vector<8x3x128xf32> to vector<8x3xf32>
    %12 = vector.shape_cast %11 : vector<8x3xf32> to vector<8x3x1xf32>
    %13 = vector.broadcast %12 : vector<8x3x1xf32> to vector<8x3x128xf32>
    %14 = arith.subf %10, %13 : vector<8x3x128xf32>
    %15 = math.exp %14 : vector<8x3x128xf32>
    %cst_14 = arith.constant dense<0.000000e+00> : vector<8x3xf32>
    %16 = vector.multi_reduction <add>, %15, %cst_14 [2] : vector<8x3x128xf32> to vector<8x3xf32>
    %17 = vector.shape_cast %16 : vector<8x3xf32> to vector<8x3x1xf32>
    %18 = vector.broadcast %17 : vector<8x3x1xf32> to vector<8x3x128xf32>
    %19 = arith.divf %15, %18 : vector<8x3x128xf32>
    "tpu.trace_start"() <{level = 10 : i32, message = "bls,bsd->bld"}> : () -> ()
    %cst_15 = arith.constant dense<0.000000e+00> : vector<8x3x32xf32>
    %20 = tpu.matmul %19, %6, %cst_15 {dimension_numbers = #tpu.dot_dimension_numbers<[2], [1], [1], [2], [0, 0, 0, 1, 1, 2], [0], [0]>} : vector<8x3x128xf32>, vector<8x128x32xf32>, vector<8x3x32xf32> -> vector<8x3x32xf32>
    "tpu.trace_stop"() : () -> ()
    %c0_16 = arith.constant 0 : index
    %c0_17 = arith.constant 0 : index
    %21 = vector.load %arg4[%c0_16, %c0_17] : memref<32x8xf32, #tpu.memory_space<vmem>>, vector<32x8xf32>
    %c0_18 = arith.constant 0 : index
    %c0_19 = arith.constant 0 : index
    %22 = vector.load %arg5[%c0_18, %c0_19] : memref<1x8xf32, #tpu.memory_space<vmem>>, vector<1x8xf32>
    %23 = vector.extract_strided_slice %20 {offsets = [0, 0, 0], sizes = [8, 1, 32], strides = [1, 1, 1]} : vector<8x3x32xf32> to vector<8x1x32xf32>
    %24 = vector.shape_cast %23 : vector<8x1x32xf32> to vector<8x32xf32>
    %cst_20 = arith.constant dense<0.000000e+00> : vector<8x8xf32>
    %25 = tpu.matmul %24, %21, %cst_20 {dimension_numbers = #tpu.dot_dimension_numbers<[1], [0], [0], [1], [0, 0, 1, 1], [], []>} : vector<8x32xf32>, vector<32x8xf32>, vector<8x8xf32> -> vector<8x8xf32>
    %26 = vector.broadcast %22 : vector<1x8xf32> to vector<8x8xf32>
    %27 = arith.addf %25, %26 : vector<8x8xf32>
    %cst_21 = arith.constant 0.000000e+00 : f32
    %28 = vector.broadcast %cst_21 : f32 to vector<8x8xf32>
    %29 = arith.maximumf %27, %28 : vector<8x8xf32>
    %30 = vector.extract_strided_slice %20 {offsets = [0, 1, 0], sizes = [8, 1, 32], strides = [1, 1, 1]} : vector<8x3x32xf32> to vector<8x1x32xf32>
    %31 = vector.shape_cast %30 : vector<8x1x32xf32> to vector<8x32xf32>
    %cst_22 = arith.constant dense<0.000000e+00> : vector<8x8xf32>
    %32 = tpu.matmul %31, %21, %cst_22 {dimension_numbers = #tpu.dot_dimension_numbers<[1], [0], [0], [1], [0, 0, 1, 1], [], []>} : vector<8x32xf32>, vector<32x8xf32>, vector<8x8xf32> -> vector<8x8xf32>
    %33 = vector.broadcast %22 : vector<1x8xf32> to vector<8x8xf32>
    %34 = arith.addf %32, %33 : vector<8x8xf32>
    %cst_23 = arith.constant 0.000000e+00 : f32
    %35 = vector.broadcast %cst_23 : f32 to vector<8x8xf32>
    %36 = arith.maximumf %34, %35 : vector<8x8xf32>
    %37 = vector.extract_strided_slice %20 {offsets = [0, 2, 0], sizes = [8, 1, 32], strides = [1, 1, 1]} : vector<8x3x32xf32> to vector<8x1x32xf32>
    %38 = vector.shape_cast %37 : vector<8x1x32xf32> to vector<8x32xf32>
    %cst_24 = arith.constant dense<0.000000e+00> : vector<8x8xf32>
    %39 = tpu.matmul %38, %21, %cst_24 {dimension_numbers = #tpu.dot_dimension_numbers<[1], [0], [0], [1], [0, 0, 1, 1], [], []>} : vector<8x32xf32>, vector<32x8xf32>, vector<8x8xf32> -> vector<8x8xf32>
    %40 = vector.broadcast %22 : vector<1x8xf32> to vector<8x8xf32>
    %41 = arith.addf %39, %40 : vector<8x8xf32>
    %cst_25 = arith.constant 0.000000e+00 : f32
    %42 = vector.broadcast %cst_25 : f32 to vector<8x8xf32>
    %43 = arith.maximumf %41, %42 : vector<8x8xf32>
    %44 = arith.addf %29, %36 : vector<8x8xf32>
    %45 = arith.addf %44, %43 : vector<8x8xf32>
    %cst_26 = arith.constant 0.333333343 : f32
    %46 = vector.broadcast %cst_26 : f32 to vector<8x8xf32>
    %47 = arith.mulf %45, %46 : vector<8x8xf32>
    %cst_27 = arith.constant 0.000000e+00 : f32
    %48 = vector.broadcast %cst_27 : f32 to vector<8x8xf32>
    %49 = arith.subf %29, %47 : vector<8x8xf32>
    %50 = arith.mulf %49, %49 : vector<8x8xf32>
    %51 = arith.addf %48, %50 : vector<8x8xf32>
    %52 = arith.subf %36, %47 : vector<8x8xf32>
    %53 = arith.mulf %52, %52 : vector<8x8xf32>
    %54 = arith.addf %51, %53 : vector<8x8xf32>
    %55 = arith.subf %43, %47 : vector<8x8xf32>
    %56 = arith.mulf %55, %55 : vector<8x8xf32>
    %57 = arith.addf %54, %56 : vector<8x8xf32>
    %cst_28 = arith.constant 0.333333343 : f32
    %58 = vector.broadcast %cst_28 : f32 to vector<8x8xf32>
    %59 = arith.mulf %57, %58 : vector<8x8xf32>
    %cst_29 = arith.constant 9.99999974E-6 : f32
    %60 = vector.broadcast %cst_29 : f32 to vector<8x8xf32>
    %61 = arith.addf %59, %60 : vector<8x8xf32>
    %62 = math.rsqrt %61 : vector<8x8xf32>
    %c0_30 = arith.constant 0 : index
    %c0_31 = arith.constant 0 : index
    %63 = vector.load %arg9[%c0_30, %c0_31] : memref<1x128xf32, #tpu.memory_space<vmem>>, vector<1x128xf32>
    %64 = arith.subf %29, %47 : vector<8x8xf32>
    %65 = arith.mulf %64, %62 : vector<8x8xf32>
    %c0_32 = arith.constant 0 : index
    %c0_33 = arith.constant 0 : index
    %c0_34 = arith.constant 0 : index
    %66 = vector.load %arg6[%c0_32, %c0_33, %c0_34] : memref<3x1x8xf32, #tpu.memory_space<vmem>>, vector<1x1x8xf32>
    %67 = vector.shape_cast %66 : vector<1x1x8xf32> to vector<1x8xf32>
    %68 = vector.broadcast %67 : vector<1x8xf32> to vector<8x8xf32>
    %69 = arith.mulf %65, %68 : vector<8x8xf32>
    %c0_35 = arith.constant 0 : index
    %c0_36 = arith.constant 0 : index
    %c0_37 = arith.constant 0 : index
    %70 = vector.load %arg7[%c0_35, %c0_36, %c0_37] : memref<3x1x8xf32, #tpu.memory_space<vmem>>, vector<1x1x8xf32>
    %71 = vector.shape_cast %70 : vector<1x1x8xf32> to vector<1x8xf32>
    %72 = vector.broadcast %71 : vector<1x8xf32> to vector<8x8xf32>
    %73 = arith.addf %69, %72 : vector<8x8xf32>
    %c0_38 = arith.constant 0 : index
    %c0_39 = arith.constant 0 : index
    %c0_40 = arith.constant 0 : index
    %74 = vector.load %arg8[%c0_38, %c0_39, %c0_40] : memref<3x8x128xf32, #tpu.memory_space<vmem>>, vector<1x8x128xf32>
    %75 = vector.shape_cast %74 : vector<1x8x128xf32> to vector<8x128xf32>
    %cst_41 = arith.constant dense<0.000000e+00> : vector<8x128xf32>
    %76 = tpu.matmul %73, %75, %cst_41 {dimension_numbers = #tpu.dot_dimension_numbers<[1], [0], [0], [1], [0, 0, 1, 1], [], []>} : vector<8x8xf32>, vector<8x128xf32>, vector<8x128xf32> -> vector<8x128xf32>
    %77 = vector.broadcast %63 : vector<1x128xf32> to vector<8x128xf32>
    %78 = arith.addf %77, %76 : vector<8x128xf32>
    %79 = arith.subf %36, %47 : vector<8x8xf32>
    %80 = arith.mulf %79, %62 : vector<8x8xf32>
    %c1 = arith.constant 1 : index
    %c0_42 = arith.constant 0 : index
    %c0_43 = arith.constant 0 : index
    %81 = vector.load %arg6[%c1, %c0_42, %c0_43] : memref<3x1x8xf32, #tpu.memory_space<vmem>>, vector<1x1x8xf32>
    %82 = vector.shape_cast %81 : vector<1x1x8xf32> to vector<1x8xf32>
    %83 = vector.broadcast %82 : vector<1x8xf32> to vector<8x8xf32>
    %84 = arith.mulf %80, %83 : vector<8x8xf32>
    %c1_44 = arith.constant 1 : index
    %c0_45 = arith.constant 0 : index
    %c0_46 = arith.constant 0 : index
    %85 = vector.load %arg7[%c1_44, %c0_45, %c0_46] : memref<3x1x8xf32, #tpu.memory_space<vmem>>, vector<1x1x8xf32>
    %86 = vector.shape_cast %85 : vector<1x1x8xf32> to vector<1x8xf32>
    %87 = vector.broadcast %86 : vector<1x8xf32> to vector<8x8xf32>
    %88 = arith.addf %84, %87 : vector<8x8xf32>
    %c1_47 = arith.constant 1 : index
    %c0_48 = arith.constant 0 : index
    %c0_49 = arith.constant 0 : index
    %89 = vector.load %arg8[%c1_47, %c0_48, %c0_49] : memref<3x8x128xf32, #tpu.memory_space<vmem>>, vector<1x8x128xf32>
    %90 = vector.shape_cast %89 : vector<1x8x128xf32> to vector<8x128xf32>
    %cst_50 = arith.constant dense<0.000000e+00> : vector<8x128xf32>
    %91 = tpu.matmul %88, %90, %cst_50 {dimension_numbers = #tpu.dot_dimension_numbers<[1], [0], [0], [1], [0, 0, 1, 1], [], []>} : vector<8x8xf32>, vector<8x128xf32>, vector<8x128xf32> -> vector<8x128xf32>
    %92 = arith.addf %78, %91 : vector<8x128xf32>
    %93 = arith.subf %43, %47 : vector<8x8xf32>
    %94 = arith.mulf %93, %62 : vector<8x8xf32>
    %c2 = arith.constant 2 : index
    %c0_51 = arith.constant 0 : index
    %c0_52 = arith.constant 0 : index
    %95 = vector.load %arg6[%c2, %c0_51, %c0_52] : memref<3x1x8xf32, #tpu.memory_space<vmem>>, vector<1x1x8xf32>
    %96 = vector.shape_cast %95 : vector<1x1x8xf32> to vector<1x8xf32>
    %97 = vector.broadcast %96 : vector<1x8xf32> to vector<8x8xf32>
    %98 = arith.mulf %94, %97 : vector<8x8xf32>
    %c2_53 = arith.constant 2 : index
    %c0_54 = arith.constant 0 : index
    %c0_55 = arith.constant 0 : index
    %99 = vector.load %arg7[%c2_53, %c0_54, %c0_55] : memref<3x1x8xf32, #tpu.memory_space<vmem>>, vector<1x1x8xf32>
    %100 = vector.shape_cast %99 : vector<1x1x8xf32> to vector<1x8xf32>
    %101 = vector.broadcast %100 : vector<1x8xf32> to vector<8x8xf32>
    %102 = arith.addf %98, %101 : vector<8x8xf32>
    %c2_56 = arith.constant 2 : index
    %c0_57 = arith.constant 0 : index
    %c0_58 = arith.constant 0 : index
    %103 = vector.load %arg8[%c2_56, %c0_57, %c0_58] : memref<3x8x128xf32, #tpu.memory_space<vmem>>, vector<1x8x128xf32>
    %104 = vector.shape_cast %103 : vector<1x8x128xf32> to vector<8x128xf32>
    %cst_59 = arith.constant dense<0.000000e+00> : vector<8x128xf32>
    %105 = tpu.matmul %102, %104, %cst_59 {dimension_numbers = #tpu.dot_dimension_numbers<[1], [0], [0], [1], [0, 0, 1, 1], [], []>} : vector<8x8xf32>, vector<8x128xf32>, vector<8x128xf32> -> vector<8x128xf32>
    %106 = arith.addf %92, %105 : vector<8x128xf32>
    %c0_60 = arith.constant 0 : index
    %c0_61 = arith.constant 0 : index
    %107 = vector.load %arg10[%c0_60, %c0_61] : memref<8x128xf32, #tpu.memory_space<vmem>>, vector<8x128xf32>
    tpu.vector_store %arg10[%c0_60, %c0_61], %106 {strides = array<i32>} : memref<8x128xf32, #tpu.memory_space<vmem>>, vector<8x128xf32>,
    return
  }
  func.func @transform_0(%arg0: i32) -> (i32, i32, i32) {
    %c0_i32 = arith.constant 0 : i32
    %c0_i32_0 = arith.constant 0 : i32
    %c0_i32_1 = arith.constant 0 : i32
    return %arg0, %c0_i32, %c0_i32_0 : i32, i32, i32
  }
  func.func @transform_1(%arg0: i32) -> (i32, i32) {
    %c0_i32 = arith.constant 0 : i32
    %c0_i32_0 = arith.constant 0 : i32
    %c0_i32_1 = arith.constant 0 : i32
    return %c0_i32, %c0_i32_0 : i32, i32
  }
  func.func @transform_2(%arg0: i32) -> (i32, i32, i32) {
    %c0_i32 = arith.constant 0 : i32
    %c0_i32_0 = arith.constant 0 : i32
    %c0_i32_1 = arith.constant 0 : i32
    %c0_i32_2 = arith.constant 0 : i32
    return %c0_i32, %c0_i32_0, %c0_i32_1 : i32, i32, i32
  }
  func.func @transform_3(%arg0: i32) -> (i32, i32) {
    %c0_i32 = arith.constant 0 : i32
    %c0_i32_0 = arith.constant 0 : i32
    %c0_i32_1 = arith.constant 0 : i32
    return %c0_i32, %c0_i32_0 : i32, i32
  }
  func.func @transform_4(%arg0: i32) -> (i32, i32) {
    %c0_i32 = arith.constant 0 : i32
    %c0_i32_0 = arith.constant 0 : i32
    %c0_i32_1 = arith.constant 0 : i32
    return %c0_i32, %c0_i32_0 : i32, i32
  }
  func.func @transform_5(%arg0: i32) -> (i32, i32, i32) {
    %c0_i32 = arith.constant 0 : i32
    %c0_i32_0 = arith.constant 0 : i32
    %c0_i32_1 = arith.constant 0 : i32
    %c0_i32_2 = arith.constant 0 : i32
    return %c0_i32, %c0_i32_0, %c0_i32_1 : i32, i32, i32
  }
  func.func @transform_6(%arg0: i32) -> (i32, i32, i32) {
    %c0_i32 = arith.constant 0 : i32
    %c0_i32_0 = arith.constant 0 : i32
    %c0_i32_1 = arith.constant 0 : i32
    %c0_i32_2 = arith.constant 0 : i32
    return %c0_i32, %c0_i32_0, %c0_i32_1 : i32, i32, i32
  }
  func.func @transform_7(%arg0: i32) -> (i32, i32, i32) {
    %c0_i32 = arith.constant 0 : i32
    %c0_i32_0 = arith.constant 0 : i32
    %c0_i32_1 = arith.constant 0 : i32
    %c0_i32_2 = arith.constant 0 : i32
    return %c0_i32, %c0_i32_0, %c0_i32_1 : i32, i32, i32
  }
  func.func @transform_8(%arg0: i32) -> (i32, i32) {
    %c0_i32 = arith.constant 0 : i32
    %c0_i32_0 = arith.constant 0 : i32
    %c0_i32_1 = arith.constant 0 : i32
    return %c0_i32, %c0_i32_0 : i32, i32
  }
  func.func @transform_9(%arg0: i32) -> (i32, i32) {
    %c0_i32 = arith.constant 0 : i32
    %c0_i32_0 = arith.constant 0 : i32
    return %arg0, %c0_i32 : i32, i32
  }
}

</mosaic_0001>

<llo_original>
// kernel: tpu_custom_call.1
$region0: #{tpu_custom_call.1}
  #allocation0 [shape = 'u32[]', space=smem, size = 0x4, offset = 0x4, fixed_abs, tag = 'smem constant byte address 0x4 - core index']
  #allocation1 [shape = 'u32[72,128]{1,0:T(1,128)}', space=vmem, size = 0x9000, scoped, tag = 'internal scratch']
  #allocation2 [shape = 'f32[8,128,32]{2,1,0:T(8,128)}', space=vmem, size = 0x80000, scoped, tag = 'scratch operand']
  %s0 = inlined_call_operand.vmem [shape: f32[8,128,32], index: 0, kind: input, shape index: {}]
  %s1 = inlined_call_operand.vmem [shape: f32[128,32], index: 1, kind: input, shape index: {}]
  %s2 = inlined_call_operand.vmem [shape: f32[1,3,32], index: 2, kind: input, shape index: {}]
  %s3 = inlined_call_operand.vmem [shape: f32[32,8], index: 3, kind: input, shape index: {}]
  %s4 = inlined_call_operand.vmem [shape: f32[1,8], index: 4, kind: input, shape index: {}]
  %s5 = inlined_call_operand.vmem [shape: f32[3,1,8], index: 5, kind: input, shape index: {}]
  %s6 = inlined_call_operand.vmem [shape: f32[3,1,8], index: 6, kind: input, shape index: {}]
  %s7 = inlined_call_operand.vmem [shape: f32[3,8,128], index: 7, kind: input, shape index: {}]
  %s8 = inlined_call_operand.vmem [shape: f32[1,128], index: 8, kind: input, shape index: {}]
  %s9 = inlined_call_operand.hbm [shape: f32[8,128], index: 9, kind: output, shape index: {}]
  %s10 = sld [smem:[#allocation0]]
  $region46: #{tpu_custom_call.1} parent=0
    _
  %s12 = ssub.s32 1, %s10
  %s13 = scalar_select 0, %s12, %s10
  $region1: #{tpu_custom_call.1} parent=0
    #allocation3 [shape = 'u8[4096]{0}', space=vmem, size = 0x1000, scoped, tag = 'output window, operand 0, single buffered']
    #allocation4 [shape = 's32[1]{0}', space=sflag, size = 0x4, scoped, tag = 'scoped memory for tpu_custom_call.1']
    %14 = vsyncpa [#allocation4], 0
    // Predicated region
    $region2: #{tpu_custom_call.1} parent=1 // pred_check
      _
    $region3: #{tpu_custom_call.1} parent=1 // pred_check_branch
      %16 = sbr.rel (0) target = $region5
    $region4: #{tpu_custom_call.1} parent=1 // pred_region
      _
    $region5: #{tpu_custom_call.1} parent=1 // pred_fallthru
      _
    // Predicated region
    $region6: #{tpu_custom_call.1} parent=1 // pred_check
      _
    $region7: #{tpu_custom_call.1} parent=1 // pred_check_branch
      %18 = sbr.rel (0) target = $region9
    $region8: #{tpu_custom_call.1} parent=1 // pred_region
      _
    $region9: #{tpu_custom_call.1} parent=1 // pred_fallthru
      _
    // Predicated region
    $region10: #{tpu_custom_call.1} parent=1 // pred_check
      _
    $region11: #{tpu_custom_call.1} parent=1 // pred_check_branch
      %20 = sbr.rel (0) target = $region13
    $region12: #{tpu_custom_call.1} parent=1 // pred_region
      _
    $region13: #{tpu_custom_call.1} parent=1 // pred_fallthru
      _
    // Predicated region
    $region14: #{tpu_custom_call.1} parent=1 // pred_check
      _
    $region15: #{tpu_custom_call.1} parent=1 // pred_check_branch
      %22 = sbr.rel (0) target = $region17
    $region16: #{tpu_custom_call.1} parent=1 // pred_region
      _
    $region17: #{tpu_custom_call.1} parent=1 // pred_fallthru
      _
    // Predicated region
    $region18: #{tpu_custom_call.1} parent=1 // pred_check
      _
    $region19: #{tpu_custom_call.1} parent=1 // pred_check_branch
      %24 = sbr.rel (0) target = $region21
    $region20: #{tpu_custom_call.1} parent=1 // pred_region
      _
    $region21: #{tpu_custom_call.1} parent=1 // pred_fallthru
      _
    // Predicated region
    $region22: #{tpu_custom_call.1} parent=1 // pred_check
      _
    $region23: #{tpu_custom_call.1} parent=1 // pred_check_branch
      %26 = sbr.rel (0) target = $region25
    $region24: #{tpu_custom_call.1} parent=1 // pred_region
      _
    $region25: #{tpu_custom_call.1} parent=1 // pred_fallthru
      _
    // Predicated region
    $region26: #{tpu_custom_call.1} parent=1 // pred_check
      _
    $region27: #{tpu_custom_call.1} parent=1 // pred_check_branch
      %28 = sbr.rel (0) target = $region29
    $region28: #{tpu_custom_call.1} parent=1 // pred_region
      _
    $region29: #{tpu_custom_call.1} parent=1 // pred_fallthru
      _
    // Predicated region
    $region30: #{tpu_custom_call.1} parent=1 // pred_check
      _
    $region31: #{tpu_custom_call.1} parent=1 // pred_check_branch
      %30 = sbr.rel (0) target = $region33
    $region32: #{tpu_custom_call.1} parent=1 // pred_region
      _
    $region33: #{tpu_custom_call.1} parent=1 // pred_fallthru
      _
    // Predicated region
    $region34: #{tpu_custom_call.1} parent=1 // pred_check
      _
    $region35: #{tpu_custom_call.1} parent=1 // pred_check_branch
      %32 = sbr.rel (0) target = $region37
    $region36: #{tpu_custom_call.1} parent=1 // pred_region
      _
    $region37: #{tpu_custom_call.1} parent=1 // pred_fallthru
      _
    %v33 = vld [vmem:[%s0] sm:$0xff]
    %v34 = vld [vmem:[%s0 + $0x8] sm:$0xff]
    %v35 = vld [vmem:[%s0 + $0x10] sm:$0xff]
    %v36 = vld [vmem:[%s0 + $0x18] sm:$0xff]
    %v37 = vld [vmem:[%s0 + $0x20] sm:$0xff]
    %v38 = vld [vmem:[%s0 + $0x28] sm:$0xff]
    %v39 = vld [vmem:[%s0 + $0x30] sm:$0xff]
    %v40 = vld [vmem:[%s0 + $0x38] sm:$0xff]
    %v41 = vld [vmem:[%s0 + $0x40] sm:$0xff]
    %v42 = vld [vmem:[%s0 + $0x48] sm:$0xff]
    %v43 = vld [vmem:[%s0 + $0x50] sm:$0xff]
    %v44 = vld [vmem:[%s0 + $0x58] sm:$0xff]
    %v45 = vld [vmem:[%s0 + $0x60] sm:$0xff]
    %v46 = vld [vmem:[%s0 + $0x68] sm:$0xff]
    %v47 = vld [vmem:[%s0 + $0x70] sm:$0xff]
    %v48 = vld [vmem:[%s0 + $0x78] sm:$0xff]
    %v49 = vld [vmem:[%s0 + $0x80] sm:$0xff]
    %v50 = vld [vmem:[%s0 + $0x88] sm:$0xff]
    %v51 = vld [vmem:[%s0 + $0x90] sm:$0xff]
    %v52 = vld [vmem:[%s0 + $0x98] sm:$0xff]
    %v53 = vld [vmem:[%s0 + $0xa0] sm:$0xff]
    %v54 = vld [vmem:[%s0 + $0xa8] sm:$0xff]
    %v55 = vld [vmem:[%s0 + $0xb0] sm:$0xff]
    %v56 = vld [vmem:[%s0 + $0xb8] sm:$0xff]
    %v57 = vld [vmem:[%s0 + $0xc0] sm:$0xff]
    %v58 = vld [vmem:[%s0 + $0xc8] sm:$0xff]
    %v59 = vld [vmem:[%s0 + $0xd0] sm:$0xff]
    %v60 = vld [vmem:[%s0 + $0xd8] sm:$0xff]
    %v61 = vld [vmem:[%s0 + $0xe0] sm:$0xff]
    %v62 = vld [vmem:[%s0 + $0xe8] sm:$0xff]
    %v63 = vld [vmem:[%s0 + $0xf0] sm:$0xff]
    %v64 = vld [vmem:[%s0 + $0xf8] sm:$0xff]
    %v65 = vld [vmem:[%s0 + $0x100] sm:$0xff]
    %v66 = vld [vmem:[%s0 + $0x108] sm:$0xff]
    %v67 = vld [vmem:[%s0 + $0x110] sm:$0xff]
    %v68 = vld [vmem:[%s0 + $0x118] sm:$0xff]
    %v69 = vld [vmem:[%s0 + $0x120] sm:$0xff]
    %v70 = vld [vmem:[%s0 + $0x128] sm:$0xff]
    %v71 = vld [vmem:[%s0 + $0x130] sm:$0xff]
    %v72 = vld [vmem:[%s0 + $0x138] sm:$0xff]
    %v73 = vld [vmem:[%s0 + $0x140] sm:$0xff]
    %v74 = vld [vmem:[%s0 + $0x148] sm:$0xff]
    %v75 = vld [vmem:[%s0 + $0x150] sm:$0xff]
    %v76 = vld [vmem:[%s0 + $0x158] sm:$0xff]
    %v77 = vld [vmem:[%s0 + $0x160] sm:$0xff]
    %v78 = vld [vmem:[%s0 + $0x168] sm:$0xff]
    %v79 = vld [vmem:[%s0 + $0x170] sm:$0xff]
    %v80 = vld [vmem:[%s0 + $0x178] sm:$0xff]
    %v81 = vld [vmem:[%s0 + $0x180] sm:$0xff]
    %v82 = vld [vmem:[%s0 + $0x188] sm:$0xff]
    %v83 = vld [vmem:[%s0 + $0x190] sm:$0xff]
    %v84 = vld [vmem:[%s0 + $0x198] sm:$0xff]
    %v85 = vld [vmem:[%s0 + $0x1a0] sm:$0xff]
    %v86 = vld [vmem:[%s0 + $0x1a8] sm:$0xff]
    %v87 = vld [vmem:[%s0 + $0x1b0] sm:$0xff]
    %v88 = vld [vmem:[%s0 + $0x1b8] sm:$0xff]
    %v89 = vld [vmem:[%s0 + $0x1c0] sm:$0xff]
    %v90 = vld [vmem:[%s0 + $0x1c8] sm:$0xff]
    %v91 = vld [vmem:[%s0 + $0x1d0] sm:$0xff]
    %v92 = vld [vmem:[%s0 + $0x1d8] sm:$0xff]
    %v93 = vld [vmem:[%s0 + $0x1e0] sm:$0xff]
    %v94 = vld [vmem:[%s0 + $0x1e8] sm:$0xff]
    %v95 = vld [vmem:[%s0 + $0x1f0] sm:$0xff]
    %v96 = vld [vmem:[%s0 + $0x1f8] sm:$0xff]
    %v97 = vld [vmem:[%s0 + $0x200] sm:$0xff]
    %v98 = vld [vmem:[%s0 + $0x208] sm:$0xff]
    %v99 = vld [vmem:[%s0 + $0x210] sm:$0xff]
    %v100 = vld [vmem:[%s0 + $0x218] sm:$0xff]
    %v101 = vld [vmem:[%s0 + $0x220] sm:$0xff]
    %v102 = vld [vmem:[%s0 + $0x228] sm:$0xff]
    %v103 = vld [vmem:[%s0 + $0x230] sm:$0xff]
    %v104 = vld [vmem:[%s0 + $0x238] sm:$0xff]
    %v105 = vld [vmem:[%s0 + $0x240] sm:$0xff]
    %v106 = vld [vmem:[%s0 + $0x248] sm:$0xff]
    %v107 = vld [vmem:[%s0 + $0x250] sm:$0xff]
    %v108 = vld [vmem:[%s0 + $0x258] sm:$0xff]
    %v109 = vld [vmem:[%s0 + $0x260] sm:$0xff]
    %v110 = vld [vmem:[%s0 + $0x268] sm:$0xff]
    %v111 = vld [vmem:[%s0 + $0x270] sm:$0xff]
    %v112 = vld [vmem:[%s0 + $0x278] sm:$0xff]
    %v113 = vld [vmem:[%s0 + $0x280] sm:$0xff]
    %v114 = vld [vmem:[%s0 + $0x288] sm:$0xff]
    %v115 = vld [vmem:[%s0 + $0x290] sm:$0xff]
    %v116 = vld [vmem:[%s0 + $0x298] sm:$0xff]
    %v117 = vld [vmem:[%s0 + $0x2a0] sm:$0xff]
    %v118 = vld [vmem:[%s0 + $0x2a8] sm:$0xff]
    %v119 = vld [vmem:[%s0 + $0x2b0] sm:$0xff]
    %v120 = vld [vmem:[%s0 + $0x2b8] sm:$0xff]
    %v121 = vld [vmem:[%s0 + $0x2c0] sm:$0xff]
    %v122 = vld [vmem:[%s0 + $0x2c8] sm:$0xff]
    %v123 = vld [vmem:[%s0 + $0x2d0] sm:$0xff]
    %v124 = vld [vmem:[%s0 + $0x2d8] sm:$0xff]
    %v125 = vld [vmem:[%s0 + $0x2e0] sm:$0xff]
    %v126 = vld [vmem:[%s0 + $0x2e8] sm:$0xff]
    %v127 = vld [vmem:[%s0 + $0x2f0] sm:$0xff]
    %v128 = vld [vmem:[%s0 + $0x2f8] sm:$0xff]
    %v129 = vld [vmem:[%s0 + $0x300] sm:$0xff]
    %v130 = vld [vmem:[%s0 + $0x308] sm:$0xff]
    %v131 = vld [vmem:[%s0 + $0x310] sm:$0xff]
    %v132 = vld [vmem:[%s0 + $0x318] sm:$0xff]
    %v133 = vld [vmem:[%s0 + $0x320] sm:$0xff]
    %v134 = vld [vmem:[%s0 + $0x328] sm:$0xff]
    %v135 = vld [vmem:[%s0 + $0x330] sm:$0xff]
    %v136 = vld [vmem:[%s0 + $0x338] sm:$0xff]
    %v137 = vld [vmem:[%s0 + $0x340] sm:$0xff]
    %v138 = vld [vmem:[%s0 + $0x348] sm:$0xff]
    %v139 = vld [vmem:[%s0 + $0x350] sm:$0xff]
    %v140 = vld [vmem:[%s0 + $0x358] sm:$0xff]
    %v141 = vld [vmem:[%s0 + $0x360] sm:$0xff]
    %v142 = vld [vmem:[%s0 + $0x368] sm:$0xff]
    %v143 = vld [vmem:[%s0 + $0x370] sm:$0xff]
    %v144 = vld [vmem:[%s0 + $0x378] sm:$0xff]
    %v145 = vld [vmem:[%s0 + $0x380] sm:$0xff]
    %v146 = vld [vmem:[%s0 + $0x388] sm:$0xff]
    %v147 = vld [vmem:[%s0 + $0x390] sm:$0xff]
    %v148 = vld [vmem:[%s0 + $0x398] sm:$0xff]
    %v149 = vld [vmem:[%s0 + $0x3a0] sm:$0xff]
    %v150 = vld [vmem:[%s0 + $0x3a8] sm:$0xff]
    %v151 = vld [vmem:[%s0 + $0x3b0] sm:$0xff]
    %v152 = vld [vmem:[%s0 + $0x3b8] sm:$0xff]
    %v153 = vld [vmem:[%s0 + $0x3c0] sm:$0xff]
    %v154 = vld [vmem:[%s0 + $0x3c8] sm:$0xff]
    %v155 = vld [vmem:[%s0 + $0x3d0] sm:$0xff]
    %v156 = vld [vmem:[%s0 + $0x3d8] sm:$0xff]
    %v157 = vld [vmem:[%s0 + $0x3e0] sm:$0xff]
    %v158 = vld [vmem:[%s0 + $0x3e8] sm:$0xff]
    %v159 = vld [vmem:[%s0 + $0x3f0] sm:$0xff]
    %v160 = vld [vmem:[%s0 + $0x3f8] sm:$0xff]
    %v161 = vld [vmem:[%s1] sm:$0xff]
    %v162 = vld [vmem:[%s1 + $0x8] sm:$0xff]
    %v163 = vld [vmem:[%s1 + $0x10] sm:$0xff]
    %v164 = vld [vmem:[%s1 + $0x18] sm:$0xff]
    %v165 = vld [vmem:[%s1 + $0x20] sm:$0xff]
    %v166 = vld [vmem:[%s1 + $0x28] sm:$0xff]
    %v167 = vld [vmem:[%s1 + $0x30] sm:$0xff]
    %v168 = vld [vmem:[%s1 + $0x38] sm:$0xff]
    %v169 = vld [vmem:[%s1 + $0x40] sm:$0xff]
    %v170 = vld [vmem:[%s1 + $0x48] sm:$0xff]
    %v171 = vld [vmem:[%s1 + $0x50] sm:$0xff]
    %v172 = vld [vmem:[%s1 + $0x58] sm:$0xff]
    %v173 = vld [vmem:[%s1 + $0x60] sm:$0xff]
    %v174 = vld [vmem:[%s1 + $0x68] sm:$0xff]
    %v175 = vld [vmem:[%s1 + $0x70] sm:$0xff]
    %v176 = vld [vmem:[%s1 + $0x78] sm:$0xff]
    %v177 = vadd.f32 %v33, %v161
    %v178 = vadd.f32 %v34, %v162
    %v179 = vadd.f32 %v35, %v163
    %v180 = vadd.f32 %v36, %v164
    %v181 = vadd.f32 %v37, %v165
    %v182 = vadd.f32 %v38, %v166
    %v183 = vadd.f32 %v39, %v167
    %v184 = vadd.f32 %v40, %v168
    %v185 = vadd.f32 %v41, %v169
    %v186 = vadd.f32 %v42, %v170
    %v187 = vadd.f32 %v43, %v171
    %v188 = vadd.f32 %v44, %v172
    %v189 = vadd.f32 %v45, %v173
    %v190 = vadd.f32 %v46, %v174
    %v191 = vadd.f32 %v47, %v175
    %v192 = vadd.f32 %v48, %v176
    %v193 = vadd.f32 %v49, %v161
    %v194 = vadd.f32 %v50, %v162
    %v195 = vadd.f32 %v51, %v163
    %v196 = vadd.f32 %v52, %v164
    %v197 = vadd.f32 %v53, %v165
    %v198 = vadd.f32 %v54, %v166
    %v199 = vadd.f32 %v55, %v167
    %v200 = vadd.f32 %v56, %v168
    %v201 = vadd.f32 %v57, %v169
    %v202 = vadd.f32 %v58, %v170
    %v203 = vadd.f32 %v59, %v171
    %v204 = vadd.f32 %v60, %v172
    %v205 = vadd.f32 %v61, %v173
    %v206 = vadd.f32 %v62, %v174
    %v207 = vadd.f32 %v63, %v175
    %v208 = vadd.f32 %v64, %v176
    %v209 = vadd.f32 %v65, %v161
    %v210 = vadd.f32 %v66, %v162
    %v211 = vadd.f32 %v67, %v163
    %v212 = vadd.f32 %v68, %v164
    %v213 = vadd.f32 %v69, %v165
    %v214 = vadd.f32 %v70, %v166
    %v215 = vadd.f32 %v71, %v167
    %v216 = vadd.f32 %v72, %v168
    %v217 = vadd.f32 %v73, %v169
    %v218 = vadd.f32 %v74, %v170
    %v219 = vadd.f32 %v75, %v171
    %v220 = vadd.f32 %v76, %v172
    %v221 = vadd.f32 %v77, %v173
    %v222 = vadd.f32 %v78, %v174
    %v223 = vadd.f32 %v79, %v175
    %v224 = vadd.f32 %v80, %v176
    %v225 = vadd.f32 %v81, %v161
    %v226 = vadd.f32 %v82, %v162
    %v227 = vadd.f32 %v83, %v163
    %v228 = vadd.f32 %v84, %v164
    %v229 = vadd.f32 %v85, %v165
    %v230 = vadd.f32 %v86, %v166
    %v231 = vadd.f32 %v87, %v167
    %v232 = vadd.f32 %v88, %v168
    %v233 = vadd.f32 %v89, %v169
    %v234 = vadd.f32 %v90, %v170
    %v235 = vadd.f32 %v91, %v171
    %v236 = vadd.f32 %v92, %v172
    %v237 = vadd.f32 %v93, %v173
    %v238 = vadd.f32 %v94, %v174
    %v239 = vadd.f32 %v95, %v175
    %v240 = vadd.f32 %v96, %v176
    %v241 = vadd.f32 %v97, %v161
    %v242 = vadd.f32 %v98, %v162
    %v243 = vadd.f32 %v99, %v163
    %v244 = vadd.f32 %v100, %v164
    %v245 = vadd.f32 %v101, %v165
    %v246 = vadd.f32 %v102, %v166
    %v247 = vadd.f32 %v103, %v167
    %v248 = vadd.f32 %v104, %v168
    %v249 = vadd.f32 %v105, %v169
    %v250 = vadd.f32 %v106, %v170
    %v251 = vadd.f32 %v107, %v171
    %v252 = vadd.f32 %v108, %v172
    %v253 = vadd.f32 %v109, %v173
    %v254 = vadd.f32 %v110, %v174
    %v255 = vadd.f32 %v111, %v175
    %v256 = vadd.f32 %v112, %v176
    %v257 = vadd.f32 %v113, %v161
    %v258 = vadd.f32 %v114, %v162
    %v259 = vadd.f32 %v115, %v163
    %v260 = vadd.f32 %v116, %v164
    %v261 = vadd.f32 %v117, %v165
    %v262 = vadd.f32 %v118, %v166
    %v263 = vadd.f32 %v119, %v167
    %v264 = vadd.f32 %v120, %v168
    %v265 = vadd.f32 %v121, %v169
    %v266 = vadd.f32 %v122, %v170
    %v267 = vadd.f32 %v123, %v171
    %v268 = vadd.f32 %v124, %v172
    %v269 = vadd.f32 %v125, %v173
    %v270 = vadd.f32 %v126, %v174
    %v271 = vadd.f32 %v127, %v175
    %v272 = vadd.f32 %v128, %v176
    %v273 = vadd.f32 %v129, %v161
    %v274 = vadd.f32 %v130, %v162
    %v275 = vadd.f32 %v131, %v163
    %v276 = vadd.f32 %v132, %v164
    %v277 = vadd.f32 %v133, %v165
    %v278 = vadd.f32 %v134, %v166
    %v279 = vadd.f32 %v135, %v167
    %v280 = vadd.f32 %v136, %v168
    %v281 = vadd.f32 %v137, %v169
    %v282 = vadd.f32 %v138, %v170
    %v283 = vadd.f32 %v139, %v171
    %v284 = vadd.f32 %v140, %v172
    %v285 = vadd.f32 %v141, %v173
    %v286 = vadd.f32 %v142, %v174
    %v287 = vadd.f32 %v143, %v175
    %v288 = vadd.f32 %v144, %v176
    %v289 = vadd.f32 %v145, %v161
    %v290 = vadd.f32 %v146, %v162
    %v291 = vadd.f32 %v147, %v163
    %v292 = vadd.f32 %v148, %v164
    %v293 = vadd.f32 %v149, %v165
    %v294 = vadd.f32 %v150, %v166
    %v295 = vadd.f32 %v151, %v167
    %v296 = vadd.f32 %v152, %v168
    %v297 = vadd.f32 %v153, %v169
    %v298 = vadd.f32 %v154, %v170
    %v299 = vadd.f32 %v155, %v171
    %v300 = vadd.f32 %v156, %v172
    %v301 = vadd.f32 %v157, %v173
    %v302 = vadd.f32 %v158, %v174
    %v303 = vadd.f32 %v159, %v175
    %v304 = vadd.f32 %v160, %v176
    %vm305 = vcmask 261120
    %306 = vst.msk [vmem:[#allocation2] sm:$0xff] %vm305, %v177
    %307 = vst.msk [vmem:[#allocation2 + $0x8] sm:$0xff] %vm305, %v178
    %308 = vst.msk [vmem:[#allocation2 + $0x10] sm:$0xff] %vm305, %v179
    %309 = vst.msk [vmem:[#allocation2 + $0x18] sm:$0xff] %vm305, %v180
    %310 = vst.msk [vmem:[#allocation2 + $0x20] sm:$0xff] %vm305, %v181
    %311 = vst.msk [vmem:[#allocation2 + $0x28] sm:$0xff] %vm305, %v182
    %312 = vst.msk [vmem:[#allocation2 + $0x30] sm:$0xff] %vm305, %v183
    %313 = vst.msk [vmem:[#allocation2 + $0x38] sm:$0xff] %vm305, %v184
    %314 = vst.msk [vmem:[#allocation2 + $0x40] sm:$0xff] %vm305, %v185
    %315 = vst.msk [vmem:[#allocation2 + $0x48] sm:$0xff] %vm305, %v186
    %316 = vst.msk [vmem:[#allocation2 + $0x50] sm:$0xff] %vm305, %v187
    %317 = vst.msk [vmem:[#allocation2 + $0x58] sm:$0xff] %vm305, %v188
    %318 = vst.msk [vmem:[#allocation2 + $0x60] sm:$0xff] %vm305, %v189
    %319 = vst.msk [vmem:[#allocation2 + $0x68] sm:$0xff] %vm305, %v190
    %320 = vst.msk [vmem:[#allocation2 + $0x70] sm:$0xff] %vm305, %v191
    %321 = vst.msk [vmem:[#allocation2 + $0x78] sm:$0xff] %vm305, %v192
    %322 = vst.msk [vmem:[#allocation2 + $0x80] sm:$0xff] %vm305, %v193
    %323 = vst.msk [vmem:[#allocation2 + $0x88] sm:$0xff] %vm305, %v194
    %324 = vst.msk [vmem:[#allocation2 + $0x90] sm:$0xff] %vm305, %v195
    %325 = vst.msk [vmem:[#allocation2 + $0x98] sm:$0xff] %vm305, %v196
    %326 = vst.msk [vmem:[#allocation2 + $0xa0] sm:$0xff] %vm305, %v197
    %327 = vst.msk [vmem:[#allocation2 + $0xa8] sm:$0xff] %vm305, %v198
    %328 = vst.msk [vmem:[#allocation2 + $0xb0] sm:$0xff] %vm305, %v199
    %329 = vst.msk [vmem:[#allocation2 + $0xb8] sm:$0xff] %vm305, %v200
    %330 = vst.msk [vmem:[#allocation2 + $0xc0] sm:$0xff] %vm305, %v201
    %331 = vst.msk [vmem:[#allocation2 + $0xc8] sm:$0xff] %vm305, %v202
    %332 = vst.msk [vmem:[#allocation2 + $0xd0] sm:$0xff] %vm305, %v203
    %333 = vst.msk [vmem:[#allocation2 + $0xd8] sm:$0xff] %vm305, %v204
    %334 = vst.msk [vmem:[#allocation2 + $0xe0] sm:$0xff] %vm305, %v205
    %335 = vst.msk [vmem:[#allocation2 + $0xe8] sm:$0xff] %vm305, %v206
    %336 = vst.msk [vmem:[#allocation2 + $0xf0] sm:$0xff] %vm305, %v207
    %337 = vst.msk [vmem:[#allocation2 + $0xf8] sm:$0xff] %vm305, %v208
    %338 = vst.msk [vmem:[#allocation2 + $0x100] sm:$0xff] %vm305, %v209
    %339 = vst.msk [vmem:[#allocation2 + $0x108] sm:$0xff] %vm305, %v210
    %340 = vst.msk [vmem:[#allocation2 + $0x110] sm:$0xff] %vm305, %v211
    %341 = vst.msk [vmem:[#allocation2 + $0x118] sm:$0xff] %vm305, %v212
    %342 = vst.msk [vmem:[#allocation2 + $0x120] sm:$0xff] %vm305, %v213
    %343 = vst.msk [vmem:[#allocation2 + $0x128] sm:$0xff] %vm305, %v214
    %344 = vst.msk [vmem:[#allocation2 + $0x130] sm:$0xff] %vm305, %v215
    %345 = vst.msk [vmem:[#allocation2 + $0x138] sm:$0xff] %vm305, %v216
    %346 = vst.msk [vmem:[#allocation2 + $0x140] sm:$0xff] %vm305, %v217
    %347 = vst.msk [vmem:[#allocation2 + $0x148] sm:$0xff] %vm305, %v218
    %348 = vst.msk [vmem:[#allocation2 + $0x150] sm:$0xff] %vm305, %v219
    %349 = vst.msk [vmem:[#allocation2 + $0x158] sm:$0xff] %vm305, %v220
    %350 = vst.msk [vmem:[#allocation2 + $0x160] sm:$0xff] %vm305, %v221
    %351 = vst.msk [vmem:[#allocation2 + $0x168] sm:$0xff] %vm305, %v222
    %352 = vst.msk [vmem:[#allocation2 + $0x170] sm:$0xff] %vm305, %v223
    %353 = vst.msk [vmem:[#allocation2 + $0x178] sm:$0xff] %vm305, %v224
    %354 = vst.msk [vmem:[#allocation2 + $0x180] sm:$0xff] %vm305, %v225
    %355 = vst.msk [vmem:[#allocation2 + $0x188] sm:$0xff] %vm305, %v226
    %356 = vst.msk [vmem:[#allocation2 + $0x190] sm:$0xff] %vm305, %v227
    %357 = vst.msk [vmem:[#allocation2 + $0x198] sm:$0xff] %vm305, %v228
    %358 = vst.msk [vmem:[#allocation2 + $0x1a0] sm:$0xff] %vm305, %v229
    %359 = vst.msk [vmem:[#allocation2 + $0x1a8] sm:$0xff] %vm305, %v230
    %360 = vst.msk [vmem:[#allocation2 + $0x1b0] sm:$0xff] %vm305, %v231
    %361 = vst.msk [vmem:[#allocation2 + $0x1b8] sm:$0xff] %vm305, %v232
    %362 = vst.msk [vmem:[#allocation2 + $0x1c0] sm:$0xff] %vm305, %v233
    %363 = vst.msk [vmem:[#allocation2 + $0x1c8] sm:$0xff] %vm305, %v234
    %364 = vst.msk [vmem:[#allocation2 + $0x1d0] sm:$0xff] %vm305, %v235
    %365 = vst.msk [vmem:[#allocation2 + $0x1d8] sm:$0xff] %vm305, %v236
    %366 = vst.msk [vmem:[#allocation2 + $0x1e0] sm:$0xff] %vm305, %v237
    %367 = vst.msk [vmem:[#allocation2 + $0x1e8] sm:$0xff] %vm305, %v238
    %368 = vst.msk [vmem:[#allocation2 + $0x1f0] sm:$0xff] %vm305, %v239
    %369 = vst.msk [vmem:[#allocation2 + $0x1f8] sm:$0xff] %vm305, %v240
    %370 = vst.msk [vmem:[#allocation2 + $0x200] sm:$0xff] %vm305, %v241
    %371 = vst.msk [vmem:[#allocation2 + $0x208] sm:$0xff] %vm305, %v242
    %372 = vst.msk [vmem:[#allocation2 + $0x210] sm:$0xff] %vm305, %v243
    %373 = vst.msk [vmem:[#allocation2 + $0x218] sm:$0xff] %vm305, %v244
    %374 = vst.msk [vmem:[#allocation2 + $0x220] sm:$0xff] %vm305, %v245
    %375 = vst.msk [vmem:[#allocation2 + $0x228] sm:$0xff] %vm305, %v246
    %376 = vst.msk [vmem:[#allocation2 + $0x230] sm:$0xff] %vm305, %v247
    %377 = vst.msk [vmem:[#allocation2 + $0x238] sm:$0xff] %vm305, %v248
    %378 = vst.msk [vmem:[#allocation2 + $0x240] sm:$0xff] %vm305, %v249
    %379 = vst.msk [vmem:[#allocation2 + $0x248] sm:$0xff] %vm305, %v250
    %380 = vst.msk [vmem:[#allocation2 + $0x250] sm:$0xff] %vm305, %v251
    %381 = vst.msk [vmem:[#allocation2 + $0x258] sm:$0xff] %vm305, %v252
    %382 = vst.msk [vmem:[#allocation2 + $0x260] sm:$0xff] %vm305, %v253
    %383 = vst.msk [vmem:[#allocation2 + $0x268] sm:$0xff] %vm305, %v254
    %384 = vst.msk [vmem:[#allocation2 + $0x270] sm:$0xff] %vm305, %v255
    %385 = vst.msk [vmem:[#allocation2 + $0x278] sm:$0xff] %vm305, %v256
    %386 = vst.msk [vmem:[#allocation2 + $0x280] sm:$0xff] %vm305, %v257
    %387 = vst.msk [vmem:[#allocation2 + $0x288] sm:$0xff] %vm305, %v258
    %388 = vst.msk [vmem:[#allocation2 + $0x290] sm:$0xff] %vm305, %v259
    %389 = vst.msk [vmem:[#allocation2 + $0x298] sm:$0xff] %vm305, %v260
    %390 = vst.msk [vmem:[#allocation2 + $0x2a0] sm:$0xff] %vm305, %v261
    %391 = vst.msk [vmem:[#allocation2 + $0x2a8] sm:$0xff] %vm305, %v262
    %392 = vst.msk [vmem:[#allocation2 + $0x2b0] sm:$0xff] %vm305, %v263
    %393 = vst.msk [vmem:[#allocation2 + $0x2b8] sm:$0xff] %vm305, %v264
    %394 = vst.msk [vmem:[#allocation2 + $0x2c0] sm:$0xff] %vm305, %v265
    %395 = vst.msk [vmem:[#allocation2 + $0x2c8] sm:$0xff] %vm305, %v266
    %396 = vst.msk [vmem:[#allocation2 + $0x2d0] sm:$0xff] %vm305, %v267
    %397 = vst.msk [vmem:[#allocation2 + $0x2d8] sm:$0xff] %vm305, %v268
    %398 = vst.msk [vmem:[#allocation2 + $0x2e0] sm:$0xff] %vm305, %v269
    %399 = vst.msk [vmem:[#allocation2 + $0x2e8] sm:$0xff] %vm305, %v270
    %400 = vst.msk [vmem:[#allocation2 + $0x2f0] sm:$0xff] %vm305, %v271
    %401 = vst.msk [vmem:[#allocation2 + $0x2f8] sm:$0xff] %vm305, %v272
    %402 = vst.msk [vmem:[#allocation2 + $0x300] sm:$0xff] %vm305, %v273
    %403 = vst.msk [vmem:[#allocation2 + $0x308] sm:$0xff] %vm305, %v274
    %404 = vst.msk [vmem:[#allocation2 + $0x310] sm:$0xff] %vm305, %v275
    %405 = vst.msk [vmem:[#allocation2 + $0x318] sm:$0xff] %vm305, %v276
    %406 = vst.msk [vmem:[#allocation2 + $0x320] sm:$0xff] %vm305, %v277
    %407 = vst.msk [vmem:[#allocation2 + $0x328] sm:$0xff] %vm305, %v278
    %408 = vst.msk [vmem:[#allocation2 + $0x330] sm:$0xff] %vm305, %v279
    %409 = vst.msk [vmem:[#allocation2 + $0x338] sm:$0xff] %vm305, %v280
    %410 = vst.msk [vmem:[#allocation2 + $0x340] sm:$0xff] %vm305, %v281
    %411 = vst.msk [vmem:[#allocation2 + $0x348] sm:$0xff] %vm305, %v282
    %412 = vst.msk [vmem:[#allocation2 + $0x350] sm:$0xff] %vm305, %v283
    %413 = vst.msk [vmem:[#allocation2 + $0x358] sm:$0xff] %vm305, %v284
    %414 = vst.msk [vmem:[#allocation2 + $0x360] sm:$0xff] %vm305, %v285
    %415 = vst.msk [vmem:[#allocation2 + $0x368] sm:$0xff] %vm305, %v286
    %416 = vst.msk [vmem:[#allocation2 + $0x370] sm:$0xff] %vm305, %v287
    %417 = vst.msk [vmem:[#allocation2 + $0x378] sm:$0xff] %vm305, %v288
    %418 = vst.msk [vmem:[#allocation2 + $0x380] sm:$0xff] %vm305, %v289
    %419 = vst.msk [vmem:[#allocation2 + $0x388] sm:$0xff] %vm305, %v290
    %420 = vst.msk [vmem:[#allocation2 + $0x390] sm:$0xff] %vm305, %v291
    %421 = vst.msk [vmem:[#allocation2 + $0x398] sm:$0xff] %vm305, %v292
    %422 = vst.msk [vmem:[#allocation2 + $0x3a0] sm:$0xff] %vm305, %v293
    %423 = vst.msk [vmem:[#allocation2 + $0x3a8] sm:$0xff] %vm305, %v294
    %424 = vst.msk [vmem:[#allocation2 + $0x3b0] sm:$0xff] %vm305, %v295
    %425 = vst.msk [vmem:[#allocation2 + $0x3b8] sm:$0xff] %vm305, %v296
    %426 = vst.msk [vmem:[#allocation2 + $0x3c0] sm:$0xff] %vm305, %v297
    %427 = vst.msk [vmem:[#allocation2 + $0x3c8] sm:$0xff] %vm305, %v298
    %428 = vst.msk [vmem:[#allocation2 + $0x3d0] sm:$0xff] %vm305, %v299
    %429 = vst.msk [vmem:[#allocation2 + $0x3d8] sm:$0xff] %vm305, %v300
    %430 = vst.msk [vmem:[#allocation2 + $0x3e0] sm:$0xff] %vm305, %v301
    %431 = vst.msk [vmem:[#allocation2 + $0x3e8] sm:$0xff] %vm305, %v302
    %432 = vst.msk [vmem:[#allocation2 + $0x3f0] sm:$0xff] %vm305, %v303
    %433 = vst.msk [vmem:[#allocation2 + $0x3f8] sm:$0xff] %vm305, %v304
    %v434 = vld [vmem:[#allocation2] sm:$0xff]
    %v435 = vld [vmem:[#allocation2 + $0x8] sm:$0xff]
    %v436 = vld [vmem:[#allocation2 + $0x10] sm:$0xff]
    %v437 = vld [vmem:[#allocation2 + $0x18] sm:$0xff]
    %v438 = vld [vmem:[#allocation2 + $0x20] sm:$0xff]
    %v439 = vld [vmem:[#allocation2 + $0x28] sm:$0xff]
    %v440 = vld [vmem:[#allocation2 + $0x30] sm:$0xff]
    %v441 = vld [vmem:[#allocation2 + $0x38] sm:$0xff]
    %v442 = vld [vmem:[#allocation2 + $0x40] sm:$0xff]
    %v443 = vld [vmem:[#allocation2 + $0x48] sm:$0xff]
    %v444 = vld [vmem:[#allocation2 + $0x50] sm:$0xff]
    %v445 = vld [vmem:[#allocation2 + $0x58] sm:$0xff]
    %v446 = vld [vmem:[#allocation2 + $0x60] sm:$0xff]
    %v447 = vld [vmem:[#allocation2 + $0x68] sm:$0xff]
    %v448 = vld [vmem:[#allocation2 + $0x70] sm:$0xff]
    %v449 = vld [vmem:[#allocation2 + $0x78] sm:$0xff]
    %v450 = vld [vmem:[#allocation2 + $0x80] sm:$0xff]
    %v451 = vld [vmem:[#allocation2 + $0x88] sm:$0xff]
    %v452 = vld [vmem:[#allocation2 + $0x90] sm:$0xff]
    %v453 = vld [vmem:[#allocation2 + $0x98] sm:$0xff]
    %v454 = vld [vmem:[#allocation2 + $0xa0] sm:$0xff]
    %v455 = vld [vmem:[#allocation2 + $0xa8] sm:$0xff]
    %v456 = vld [vmem:[#allocation2 + $0xb0] sm:$0xff]
    %v457 = vld [vmem:[#allocation2 + $0xb8] sm:$0xff]
    %v458 = vld [vmem:[#allocation2 + $0xc0] sm:$0xff]
    %v459 = vld [vmem:[#allocation2 + $0xc8] sm:$0xff]
    %v460 = vld [vmem:[#allocation2 + $0xd0] sm:$0xff]
    %v461 = vld [vmem:[#allocation2 + $0xd8] sm:$0xff]
    %v462 = vld [vmem:[#allocation2 + $0xe0] sm:$0xff]
    %v463 = vld [vmem:[#allocation2 + $0xe8] sm:$0xff]
    %v464 = vld [vmem:[#allocation2 + $0xf0] sm:$0xff]
    %v465 = vld [vmem:[#allocation2 + $0xf8] sm:$0xff]
    %v466 = vld [vmem:[#allocation2 + $0x100] sm:$0xff]
    %v467 = vld [vmem:[#allocation2 + $0x108] sm:$0xff]
    %v468 = vld [vmem:[#allocation2 + $0x110] sm:$0xff]
    %v469 = vld [vmem:[#allocation2 + $0x118] sm:$0xff]
    %v470 = vld [vmem:[#allocation2 + $0x120] sm:$0xff]
    %v471 = vld [vmem:[#allocation2 + $0x128] sm:$0xff]
    %v472 = vld [vmem:[#allocation2 + $0x130] sm:$0xff]
    %v473 = vld [vmem:[#allocation2 + $0x138] sm:$0xff]
    %v474 = vld [vmem:[#allocation2 + $0x140] sm:$0xff]
    %v475 = vld [vmem:[#allocation2 + $0x148] sm:$0xff]
    %v476 = vld [vmem:[#allocation2 + $0x150] sm:$0xff]
    %v477 = vld [vmem:[#allocation2 + $0x158] sm:$0xff]
    %v478 = vld [vmem:[#allocation2 + $0x160] sm:$0xff]
    %v479 = vld [vmem:[#allocation2 + $0x168] sm:$0xff]
    %v480 = vld [vmem:[#allocation2 + $0x170] sm:$0xff]
    %v481 = vld [vmem:[#allocation2 + $0x178] sm:$0xff]
    %v482 = vld [vmem:[#allocation2 + $0x180] sm:$0xff]
    %v483 = vld [vmem:[#allocation2 + $0x188] sm:$0xff]
    %v484 = vld [vmem:[#allocation2 + $0x190] sm:$0xff]
    %v485 = vld [vmem:[#allocation2 + $0x198] sm:$0xff]
    %v486 = vld [vmem:[#allocation2 + $0x1a0] sm:$0xff]
    %v487 = vld [vmem:[#allocation2 + $0x1a8] sm:$0xff]
    %v488 = vld [vmem:[#allocation2 + $0x1b0] sm:$0xff]
    %v489 = vld [vmem:[#allocation2 + $0x1b8] sm:$0xff]
    %v490 = vld [vmem:[#allocation2 + $0x1c0] sm:$0xff]
    %v491 = vld [vmem:[#allocation2 + $0x1c8] sm:$0xff]
    %v492 = vld [vmem:[#allocation2 + $0x1d0] sm:$0xff]
    %v493 = vld [vmem:[#allocation2 + $0x1d8] sm:$0xff]
    %v494 = vld [vmem:[#allocation2 + $0x1e0] sm:$0xff]
    %v495 = vld [vmem:[#allocation2 + $0x1e8] sm:$0xff]
    %v496 = vld [vmem:[#allocation2 + $0x1f0] sm:$0xff]
    %v497 = vld [vmem:[#allocation2 + $0x1f8] sm:$0xff]
    %v498 = vld [vmem:[#allocation2 + $0x200] sm:$0xff]
    %v499 = vld [vmem:[#allocation2 + $0x208] sm:$0xff]
    %v500 = vld [vmem:[#allocation2 + $0x210] sm:$0xff]
    %v501 = vld [vmem:[#allocation2 + $0x218] sm:$0xff]
    %v502 = vld [vmem:[#allocation2 + $0x220] sm:$0xff]
    %v503 = vld [vmem:[#allocation2 + $0x228] sm:$0xff]
    %v504 = vld [vmem:[#allocation2 + $0x230] sm:$0xff]
    %v505 = vld [vmem:[#allocation2 + $0x238] sm:$0xff]
    %v506 = vld [vmem:[#allocation2 + $0x240] sm:$0xff]
    %v507 = vld [vmem:[#allocation2 + $0x248] sm:$0xff]
    %v508 = vld [vmem:[#allocation2 + $0x250] sm:$0xff]
    %v509 = vld [vmem:[#allocation2 + $0x258] sm:$0xff]
    %v510 = vld [vmem:[#allocation2 + $0x260] sm:$0xff]
    %v511 = vld [vmem:[#allocation2 + $0x268] sm:$0xff]
    %v512 = vld [vmem:[#allocation2 + $0x270] sm:$0xff]
    %v513 = vld [vmem:[#allocation2 + $0x278] sm:$0xff]
    %v514 = vld [vmem:[#allocation2 + $0x280] sm:$0xff]
    %v515 = vld [vmem:[#allocation2 + $0x288] sm:$0xff]
    %v516 = vld [vmem:[#allocation2 + $0x290] sm:$0xff]
    %v517 = vld [vmem:[#allocation2 + $0x298] sm:$0xff]
    %v518 = vld [vmem:[#allocation2 + $0x2a0] sm:$0xff]
    %v519 = vld [vmem:[#allocation2 + $0x2a8] sm:$0xff]
    %v520 = vld [vmem:[#allocation2 + $0x2b0] sm:$0xff]
    %v521 = vld [vmem:[#allocation2 + $0x2b8] sm:$0xff]
    %v522 = vld [vmem:[#allocation2 + $0x2c0] sm:$0xff]
    %v523 = vld [vmem:[#allocation2 + $0x2c8] sm:$0xff]
    %v524 = vld [vmem:[#allocation2 + $0x2d0] sm:$0xff]
    %v525 = vld [vmem:[#allocation2 + $0x2d8] sm:$0xff]
    %v526 = vld [vmem:[#allocation2 + $0x2e0] sm:$0xff]
    %v527 = vld [vmem:[#allocation2 + $0x2e8] sm:$0xff]
    %v528 = vld [vmem:[#allocation2 + $0x2f0] sm:$0xff]
    %v529 = vld [vmem:[#allocation2 + $0x2f8] sm:$0xff]
    %v530 = vld [vmem:[#allocation2 + $0x300] sm:$0xff]
    %v531 = vld [vmem:[#allocation2 + $0x308] sm:$0xff]
    %v532 = vld [vmem:[#allocation2 + $0x310] sm:$0xff]
    %v533 = vld [vmem:[#allocation2 + $0x318] sm:$0xff]
    %v534 = vld [vmem:[#allocation2 + $0x320] sm:$0xff]
    %v535 = vld [vmem:[#allocation2 + $0x328] sm:$0xff]
    %v536 = vld [vmem:[#allocation2 + $0x330] sm:$0xff]
    %v537 = vld [vmem:[#allocation2 + $0x338] sm:$0xff]
    %v538 = vld [vmem:[#allocation2 + $0x340] sm:$0xff]
    %v539 = vld [vmem:[#allocation2 + $0x348] sm:$0xff]
    %v540 = vld [vmem:[#allocation2 + $0x350] sm:$0xff]
    %v541 = vld [vmem:[#allocation2 + $0x358] sm:$0xff]
    %v542 = vld [vmem:[#allocation2 + $0x360] sm:$0xff]
    %v543 = vld [vmem:[#allocation2 + $0x368] sm:$0xff]
    %v544 = vld [vmem:[#allocation2 + $0x370] sm:$0xff]
    %v545 = vld [vmem:[#allocation2 + $0x378] sm:$0xff]
    %v546 = vld [vmem:[#allocation2 + $0x380] sm:$0xff]
    %v547 = vld [vmem:[#allocation2 + $0x388] sm:$0xff]
    %v548 = vld [vmem:[#allocation2 + $0x390] sm:$0xff]
    %v549 = vld [vmem:[#allocation2 + $0x398] sm:$0xff]
    %v550 = vld [vmem:[#allocation2 + $0x3a0] sm:$0xff]
    %v551 = vld [vmem:[#allocation2 + $0x3a8] sm:$0xff]
    %v552 = vld [vmem:[#allocation2 + $0x3b0] sm:$0xff]
    %v553 = vld [vmem:[#allocation2 + $0x3b8] sm:$0xff]
    %v554 = vld [vmem:[#allocation2 + $0x3c0] sm:$0xff]
    %v555 = vld [vmem:[#allocation2 + $0x3c8] sm:$0xff]
    %v556 = vld [vmem:[#allocation2 + $0x3d0] sm:$0xff]
    %v557 = vld [vmem:[#allocation2 + $0x3d8] sm:$0xff]
    %v558 = vld [vmem:[#allocation2 + $0x3e0] sm:$0xff]
    %v559 = vld [vmem:[#allocation2 + $0x3e8] sm:$0xff]
    %v560 = vld [vmem:[#allocation2 + $0x3f0] sm:$0xff]
    %v561 = vld [vmem:[#allocation2 + $0x3f8] sm:$0xff]
    %v562 = vld [vmem:[%s2] sm:$0x7]
    %v564 = vsel %vm305, %v562, 0
    %v567 = vsel %vm305, %v434, 0
    %v570 = vsel %vm305, %v435, 0
    %v573 = vsel %vm305, %v436, 0
    %v576 = vsel %vm305, %v437, 0
    %v579 = vsel %vm305, %v438, 0
    %v582 = vsel %vm305, %v439, 0
    %v585 = vsel %vm305, %v440, 0
    %v588 = vsel %vm305, %v441, 0
    %v591 = vsel %vm305, %v442, 0
    %v594 = vsel %vm305, %v443, 0
    %v597 = vsel %vm305, %v444, 0
    %v600 = vsel %vm305, %v445, 0
    %v603 = vsel %vm305, %v446, 0
    %v606 = vsel %vm305, %v447, 0
    %v609 = vsel %vm305, %v448, 0
    %v612 = vsel %vm305, %v449, 0
    %614 = vmatpush.xpose.msra.mxu0 %v612
    %615 = vmatpush.xpose.msra.mxu0 %v609
    %616 = vmatpush.xpose.msra.mxu0 %v606
    %617 = vmatpush.xpose.msra.mxu0 %v603
    %618 = vmatpush.xpose.msra.mxu0 %v600
    %619 = vmatpush.xpose.msra.mxu0 %v597
    %620 = vmatpush.xpose.msra.mxu0 %v594
    %621 = vmatpush.xpose.msra.mxu0 %v591
    %622 = vmatpush.xpose.msra.mxu0 %v588
    %623 = vmatpush.xpose.msra.mxu0 %v585
    %624 = vmatpush.xpose.msra.mxu0 %v582
    %625 = vmatpush.xpose.msra.mxu0 %v579
    %626 = vmatpush.xpose.msra.mxu0 %v576
    %627 = vmatpush.xpose.msra.mxu0 %v573
    %628 = vmatpush.xpose.msra.mxu0 %v570
    %629 = vmatpush.xpose.msra.mxu0 %v567
    %630 = vmatmul.f32.gmra.mxu0 %v564
    %v631 = vpop.f32.mrf.mxu0
    %v632 = vadd.f32 0.0, %v631
    %633 = vdwg.mxu0
    %v635 = vsel %vm305, %v450, 0
    %v638 = vsel %vm305, %v451, 0
    %v641 = vsel %vm305, %v452, 0
    %v644 = vsel %vm305, %v453, 0
    %v647 = vsel %vm305, %v454, 0
    %v650 = vsel %vm305, %v455, 0
    %v653 = vsel %vm305, %v456, 0
    %v656 = vsel %vm305, %v457, 0
    %v659 = vsel %vm305, %v458, 0
    %v662 = vsel %vm305, %v459, 0
    %v665 = vsel %vm305, %v460, 0
    %v668 = vsel %vm305, %v461, 0
    %v671 = vsel %vm305, %v462, 0
    %v674 = vsel %vm305, %v463, 0
    %v677 = vsel %vm305, %v464, 0
    %v680 = vsel %vm305, %v465, 0
    %682 = vmatpush.xpose.msra.mxu0 %v680
    %683 = vmatpush.xpose.msra.mxu0 %v677
    %684 = vmatpush.xpose.msra.mxu0 %v674
    %685 = vmatpush.xpose.msra.mxu0 %v671
    %686 = vmatpush.xpose.msra.mxu0 %v668
    %687 = vmatpush.xpose.msra.mxu0 %v665
    %688 = vmatpush.xpose.msra.mxu0 %v662
    %689 = vmatpush.xpose.msra.mxu0 %v659
    %690 = vmatpush.xpose.msra.mxu0 %v656
    %691 = vmatpush.xpose.msra.mxu0 %v653
    %692 = vmatpush.xpose.msra.mxu0 %v650
    %693 = vmatpush.xpose.msra.mxu0 %v647
    %694 = vmatpush.xpose.msra.mxu0 %v644
    %695 = vmatpush.xpose.msra.mxu0 %v641
    %696 = vmatpush.xpose.msra.mxu0 %v638
    %697 = vmatpush.xpose.msra.mxu0 %v635
    %698 = vmatmul.f32.gmra.mxu0 %v564
    %v699 = vpop.f32.mrf.mxu0
    %v700 = vadd.f32 0.0, %v699
    %701 = vdwg.mxu0
    %v703 = vsel %vm305, %v466, 0
    %v706 = vsel %vm305, %v467, 0
    %v709 = vsel %vm305, %v468, 0
    %v712 = vsel %vm305, %v469, 0
    %v715 = vsel %vm305, %v470, 0
    %v718 = vsel %vm305, %v471, 0
    %v721 = vsel %vm305, %v472, 0
    %v724 = vsel %vm305, %v473, 0
    %v727 = vsel %vm305, %v474, 0
    %v730 = vsel %vm305, %v475, 0
    %v733 = vsel %vm305, %v476, 0
    %v736 = vsel %vm305, %v477, 0
    %v739 = vsel %vm305, %v478, 0
    %v742 = vsel %vm305, %v479, 0
    %v745 = vsel %vm305, %v480, 0
    %v748 = vsel %vm305, %v481, 0
    %750 = vmatpush.xpose.msra.mxu0 %v748
    %751 = vmatpush.xpose.msra.mxu0 %v745
    %752 = vmatpush.xpose.msra.mxu0 %v742
    %753 = vmatpush.xpose.msra.mxu0 %v739
    %754 = vmatpush.xpose.msra.mxu0 %v736
    %755 = vmatpush.xpose.msra.mxu0 %v733
    %756 = vmatpush.xpose.msra.mxu0 %v730
    %757 = vmatpush.xpose.msra.mxu0 %v727
    %758 = vmatpush.xpose.msra.mxu0 %v724
    %759 = vmatpush.xpose.msra.mxu0 %v721
    %760 = vmatpush.xpose.msra.mxu0 %v718
    %761 = vmatpush.xpose.msra.mxu0 %v715
    %762 = vmatpush.xpose.msra.mxu0 %v712
    %763 = vmatpush.xpose.msra.mxu0 %v709
    %764 = vmatpush.xpose.msra.mxu0 %v706
    %765 = vmatpush.xpose.msra.mxu0 %v703
    %766 = vmatmul.f32.gmra.mxu0 %v564
    %v767 = vpop.f32.mrf.mxu0
    %v768 = vadd.f32 0.0, %v767
    %769 = vdwg.mxu0
    %v771 = vsel %vm305, %v482, 0
    %v774 = vsel %vm305, %v483, 0
    %v777 = vsel %vm305, %v484, 0
    %v780 = vsel %vm305, %v485, 0
    %v783 = vsel %vm305, %v486, 0
    %v786 = vsel %vm305, %v487, 0
    %v789 = vsel %vm305, %v488, 0
    %v792 = vsel %vm305, %v489, 0
    %v795 = vsel %vm305, %v490, 0
    %v798 = vsel %vm305, %v491, 0
    %v801 = vsel %vm305, %v492, 0
    %v804 = vsel %vm305, %v493, 0
    %v807 = vsel %vm305, %v494, 0
    %v810 = vsel %vm305, %v495, 0
    %v813 = vsel %vm305, %v496, 0
    %v816 = vsel %vm305, %v497, 0
    %818 = vmatpush.xpose.msra.mxu0 %v816
    %819 = vmatpush.xpose.msra.mxu0 %v813
    %820 = vmatpush.xpose.msra.mxu0 %v810
    %821 = vmatpush.xpose.msra.mxu0 %v807
    %822 = vmatpush.xpose.msra.mxu0 %v804
    %823 = vmatpush.xpose.msra.mxu0 %v801
    %824 = vmatpush.xpose.msra.mxu0 %v798
    %825 = vmatpush.xpose.msra.mxu0 %v795
    %826 = vmatpush.xpose.msra.mxu0 %v792
    %827 = vmatpush.xpose.msra.mxu0 %v789
    %828 = vmatpush.xpose.msra.mxu0 %v786
    %829 = vmatpush.xpose.msra.mxu0 %v783
    %830 = vmatpush.xpose.msra.mxu0 %v780
    %831 = vmatpush.xpose.msra.mxu0 %v777
    %832 = vmatpush.xpose.msra.mxu0 %v774
    %833 = vmatpush.xpose.msra.mxu0 %v771
    %834 = vmatmul.f32.gmra.mxu0 %v564
    %v835 = vpop.f32.mrf.mxu0
    %v836 = vadd.f32 0.0, %v835
    %837 = vdwg.mxu0
    %v839 = vsel %vm305, %v498, 0
    %v842 = vsel %vm305, %v499, 0
    %v845 = vsel %vm305, %v500, 0
    %v848 = vsel %vm305, %v501, 0
    %v851 = vsel %vm305, %v502, 0
    %v854 = vsel %vm305, %v503, 0
    %v857 = vsel %vm305, %v504, 0
    %v860 = vsel %vm305, %v505, 0
    %v863 = vsel %vm305, %v506, 0
    %v866 = vsel %vm305, %v507, 0
    %v869 = vsel %vm305, %v508, 0
    %v872 = vsel %vm305, %v509, 0
    %v875 = vsel %vm305, %v510, 0
    %v878 = vsel %vm305, %v511, 0
    %v881 = vsel %vm305, %v512, 0
    %v884 = vsel %vm305, %v513, 0
    %886 = vmatpush.xpose.msra.mxu0 %v884
    %887 = vmatpush.xpose.msra.mxu0 %v881
    %888 = vmatpush.xpose.msra.mxu0 %v878
    %889 = vmatpush.xpose.msra.mxu0 %v875
    %890 = vmatpush.xpose.msra.mxu0 %v872
    %891 = vmatpush.xpose.msra.mxu0 %v869
    %892 = vmatpush.xpose.msra.mxu0 %v866
    %893 = vmatpush.xpose.msra.mxu0 %v863
    %894 = vmatpush.xpose.msra.mxu0 %v860
    %895 = vmatpush.xpose.msra.mxu0 %v857
    %896 = vmatpush.xpose.msra.mxu0 %v854
    %897 = vmatpush.xpose.msra.mxu0 %v851
    %898 = vmatpush.xpose.msra.mxu0 %v848
    %899 = vmatpush.xpose.msra.mxu0 %v845
    %900 = vmatpush.xpose.msra.mxu0 %v842
    %901 = vmatpush.xpose.msra.mxu0 %v839
    %902 = vmatmul.f32.gmra.mxu0 %v564
    %v903 = vpop.f32.mrf.mxu0
    %v904 = vadd.f32 0.0, %v903
    %905 = vdwg.mxu0
    %v907 = vsel %vm305, %v514, 0
    %v910 = vsel %vm305, %v515, 0
    %v913 = vsel %vm305, %v516, 0
    %v916 = vsel %vm305, %v517, 0
    %v919 = vsel %vm305, %v518, 0
    %v922 = vsel %vm305, %v519, 0
    %v925 = vsel %vm305, %v520, 0
    %v928 = vsel %vm305, %v521, 0
    %v931 = vsel %vm305, %v522, 0
    %v934 = vsel %vm305, %v523, 0
    %v937 = vsel %vm305, %v524, 0
    %v940 = vsel %vm305, %v525, 0
    %v943 = vsel %vm305, %v526, 0
    %v946 = vsel %vm305, %v527, 0
    %v949 = vsel %vm305, %v528, 0
    %v952 = vsel %vm305, %v529, 0
    %954 = vmatpush.xpose.msra.mxu0 %v952
    %955 = vmatpush.xpose.msra.mxu0 %v949
    %956 = vmatpush.xpose.msra.mxu0 %v946
    %957 = vmatpush.xpose.msra.mxu0 %v943
    %958 = vmatpush.xpose.msra.mxu0 %v940
    %959 = vmatpush.xpose.msra.mxu0 %v937
    %960 = vmatpush.xpose.msra.mxu0 %v934
    %961 = vmatpush.xpose.msra.mxu0 %v931
    %962 = vmatpush.xpose.msra.mxu0 %v928
    %963 = vmatpush.xpose.msra.mxu0 %v925
    %964 = vmatpush.xpose.msra.mxu0 %v922
    %965 = vmatpush.xpose.msra.mxu0 %v919
    %966 = vmatpush.xpose.msra.mxu0 %v916
    %967 = vmatpush.xpose.msra.mxu0 %v913
    %968 = vmatpush.xpose.msra.mxu0 %v910
    %969 = vmatpush.xpose.msra.mxu0 %v907
    %970 = vmatmul.f32.gmra.mxu0 %v564
    %v971 = vpop.f32.mrf.mxu0
    %v972 = vadd.f32 0.0, %v971
    %973 = vdwg.mxu0
    %v975 = vsel %vm305, %v530, 0
    %v978 = vsel %vm305, %v531, 0
    %v981 = vsel %vm305, %v532, 0
    %v984 = vsel %vm305, %v533, 0
    %v987 = vsel %vm305, %v534, 0
    %v990 = vsel %vm305, %v535, 0
    %v993 = vsel %vm305, %v536, 0
    %v996 = vsel %vm305, %v537, 0
    %v999 = vsel %vm305, %v538, 0
    %v1002 = vsel %vm305, %v539, 0
    %v1005 = vsel %vm305, %v540, 0
    %v1008 = vsel %vm305, %v541, 0
    %v1011 = vsel %vm305, %v542, 0
    %v1014 = vsel %vm305, %v543, 0
    %v1017 = vsel %vm305, %v544, 0
    %v1020 = vsel %vm305, %v545, 0
    %1022 = vmatpush.xpose.msra.mxu0 %v1020
    %1023 = vmatpush.xpose.msra.mxu0 %v1017
    %1024 = vmatpush.xpose.msra.mxu0 %v1014
    %1025 = vmatpush.xpose.msra.mxu0 %v1011
    %1026 = vmatpush.xpose.msra.mxu0 %v1008
    %1027 = vmatpush.xpose.msra.mxu0 %v1005
    %1028 = vmatpush.xpose.msra.mxu0 %v1002
    %1029 = vmatpush.xpose.msra.mxu0 %v999
    %1030 = vmatpush.xpose.msra.mxu0 %v996
    %1031 = vmatpush.xpose.msra.mxu0 %v993
    %1032 = vmatpush.xpose.msra.mxu0 %v990
    %1033 = vmatpush.xpose.msra.mxu0 %v987
    %1034 = vmatpush.xpose.msra.mxu0 %v984
    %1035 = vmatpush.xpose.msra.mxu0 %v981
    %1036 = vmatpush.xpose.msra.mxu0 %v978
    %1037 = vmatpush.xpose.msra.mxu0 %v975
    %1038 = vmatmul.f32.gmra.mxu0 %v564
    %v1039 = vpop.f32.mrf.mxu0
    %v1040 = vadd.f32 0.0, %v1039
    %1041 = vdwg.mxu0
    %v1043 = vsel %vm305, %v546, 0
    %v1046 = vsel %vm305, %v547, 0
    %v1049 = vsel %vm305, %v548, 0
    %v1052 = vsel %vm305, %v549, 0
    %v1055 = vsel %vm305, %v550, 0
    %v1058 = vsel %vm305, %v551, 0
    %v1061 = vsel %vm305, %v552, 0
    %v1064 = vsel %vm305, %v553, 0
    %v1067 = vsel %vm305, %v554, 0
    %v1070 = vsel %vm305, %v555, 0
    %v1073 = vsel %vm305, %v556, 0
    %v1076 = vsel %vm305, %v557, 0
    %v1079 = vsel %vm305, %v558, 0
    %v1082 = vsel %vm305, %v559, 0
    %v1085 = vsel %vm305, %v560, 0
    %v1088 = vsel %vm305, %v561, 0
    %1090 = vmatpush.xpose.msra.mxu0 %v1088
    %1091 = vmatpush.xpose.msra.mxu0 %v1085
    %1092 = vmatpush.xpose.msra.mxu0 %v1082
    %1093 = vmatpush.xpose.msra.mxu0 %v1079
    %1094 = vmatpush.xpose.msra.mxu0 %v1076
    %1095 = vmatpush.xpose.msra.mxu0 %v1073
    %1096 = vmatpush.xpose.msra.mxu0 %v1070
    %1097 = vmatpush.xpose.msra.mxu0 %v1067
    %1098 = vmatpush.xpose.msra.mxu0 %v1064
    %1099 = vmatpush.xpose.msra.mxu0 %v1061
    %1100 = vmatpush.xpose.msra.mxu0 %v1058
    %1101 = vmatpush.xpose.msra.mxu0 %v1055
    %1102 = vmatpush.xpose.msra.mxu0 %v1052
    %1103 = vmatpush.xpose.msra.mxu0 %v1049
    %1104 = vmatpush.xpose.msra.mxu0 %v1046
    %1105 = vmatpush.xpose.msra.mxu0 %v1043
    %1106 = vmatmul.f32.gmra.mxu0 %v564
    %v1107 = vpop.f32.mrf.mxu0
    %v1108 = vadd.f32 0.0, %v1107
    %1109 = vdwg.mxu0
    %vm1110 = vcmask 1042432
    %v1111 = vsel %vm1110, %v632, -inf
    %1112 = vmax.xlane.f32.xlu0 %v1111
    %v1113 = vpop.xlane.xlu0 %1112
    %v1114 = vsel %vm1110, %v700, -inf
    %1115 = vmax.xlane.f32.xlu0 %v1114
    %v1116 = vpop.xlane.xlu0 %1115
    %v1117 = vsel %vm1110, %v768, -inf
    %1118 = vmax.xlane.f32.xlu0 %v1117
    %v1119 = vpop.xlane.xlu0 %1118
    %v1120 = vsel %vm1110, %v836, -inf
    %1121 = vmax.xlane.f32.xlu0 %v1120
    %v1122 = vpop.xlane.xlu0 %1121
    %v1123 = vsel %vm1110, %v904, -inf
    %1124 = vmax.xlane.f32.xlu0 %v1123
    %v1125 = vpop.xlane.xlu0 %1124
    %v1126 = vsel %vm1110, %v972, -inf
    %1127 = vmax.xlane.f32.xlu0 %v1126
    %v1128 = vpop.xlane.xlu0 %1127
    %v1129 = vsel %vm1110, %v1040, -inf
    %1130 = vmax.xlane.f32.xlu0 %v1129
    %v1131 = vpop.xlane.xlu0 %1130
    %v1132 = vsel %vm1110, %v1108, -inf
    %1133 = vmax.xlane.f32.xlu0 %v1132
    %v1134 = vpop.xlane.xlu0 %1133
    %v1135 = vsub.f32 %v632, %v1113
    %v1136 = vsub.f32 %v700, %v1116
    %v1137 = vsub.f32 %v768, %v1119
    %v1138 = vsub.f32 %v836, %v1122
    %v1139 = vsub.f32 %v904, %v1125
    %v1140 = vsub.f32 %v972, %v1128
    %v1141 = vsub.f32 %v1040, %v1131
    %v1142 = vsub.f32 %v1108, %v1134
    %v1143 = vmul.f32 %v1135, 1.442695
    %v1144 = vpow.pop %v1143
    %v1145 = vmul.f32 %v1136, 1.442695
    %v1146 = vpow.pop %v1145
    %v1147 = vmul.f32 %v1137, 1.442695
    %v1148 = vpow.pop %v1147
    %v1149 = vmul.f32 %v1138, 1.442695
    %v1150 = vpow.pop %v1149
    %v1151 = vmul.f32 %v1139, 1.442695
    %v1152 = vpow.pop %v1151
    %v1153 = vmul.f32 %v1140, 1.442695
    %v1154 = vpow.pop %v1153
    %v1155 = vmul.f32 %v1141, 1.442695
    %v1156 = vpow.pop %v1155
    %v1157 = vmul.f32 %v1142, 1.442695
    %v1158 = vpow.pop %v1157
    %v1159 = vsel %vm1110, %v1144, 0.0
    %1160 = vadd.xlane.f32.xlu0 %v1159
    %v1161 = vpop.xlane.xlu0 %1160
    %v1162 = vsel %vm1110, %v1146, 0.0
    %1163 = vadd.xlane.f32.xlu0 %v1162
    %v1164 = vpop.xlane.xlu0 %1163
    %v1165 = vsel %vm1110, %v1148, 0.0
    %1166 = vadd.xlane.f32.xlu0 %v1165
    %v1167 = vpop.xlane.xlu0 %1166
    %v1168 = vsel %vm1110, %v1150, 0.0
    %1169 = vadd.xlane.f32.xlu0 %v1168
    %v1170 = vpop.xlane.xlu0 %1169
    %v1171 = vsel %vm1110, %v1152, 0.0
    %1172 = vadd.xlane.f32.xlu0 %v1171
    %v1173 = vpop.xlane.xlu0 %1172
    %v1174 = vsel %vm1110, %v1154, 0.0
    %1175 = vadd.xlane.f32.xlu0 %v1174
    %v1176 = vpop.xlane.xlu0 %1175
    %v1177 = vsel %vm1110, %v1156, 0.0
    %1178 = vadd.xlane.f32.xlu0 %v1177
    %v1179 = vpop.xlane.xlu0 %1178
    %v1180 = vsel %vm1110, %v1158, 0.0
    %1181 = vadd.xlane.f32.xlu0 %v1180
    %v1182 = vpop.xlane.xlu0 %1181
    %v1183 = vrcp.pop %v1161
    %v1184 = vmul.f32 %v1161, %v1183
    %v1185 = vsub.f32 1.0, %v1184
    %v1186 = vmul.f32 %v1183, %v1185
    %v1187 = vadd.f32 %v1183, %v1186
    %vm1188 = vweird.f32 %v1161
    %vm1189 = vweird.f32 %v1183
    %vm1190 = vmor %vm1188, %vm1189
    %v1191 = vsel %vm1190, %v1183, %v1187
    %v1192 = vand.u32 2147483647, %v1161
    %vm1193 = vcmp.eq.f32.partialorder %v1192, 8.507059e+37
    %v1194 = vand.u32 %v1161, 2147483648
    %v1195 = vor.u32 1.1754944e-38, %v1194
    %v1196 = vsel %vm1193, %v1195, %v1191
    %v1197 = vmul.f32 %v1144, %v1196
    %v1198 = vrcp.pop %v1164
    %v1199 = vmul.f32 %v1164, %v1198
    %v1200 = vsub.f32 1.0, %v1199
    %v1201 = vmul.f32 %v1198, %v1200
    %v1202 = vadd.f32 %v1198, %v1201
    %vm1203 = vweird.f32 %v1164
    %vm1204 = vweird.f32 %v1198
    %vm1205 = vmor %vm1203, %vm1204
    %v1206 = vsel %vm1205, %v1198, %v1202
    %v1207 = vand.u32 2147483647, %v1164
    %vm1208 = vcmp.eq.f32.partialorder %v1207, 8.507059e+37
    %v1209 = vand.u32 %v1164, 2147483648
    %v1210 = vor.u32 1.1754944e-38, %v1209
    %v1211 = vsel %vm1208, %v1210, %v1206
    %v1212 = vmul.f32 %v1146, %v1211
    %v1213 = vrcp.pop %v1167
    %v1214 = vmul.f32 %v1167, %v1213
    %v1215 = vsub.f32 1.0, %v1214
    %v1216 = vmul.f32 %v1213, %v1215
    %v1217 = vadd.f32 %v1213, %v1216
    %vm1218 = vweird.f32 %v1167
    %vm1219 = vweird.f32 %v1213
    %vm1220 = vmor %vm1218, %vm1219
    %v1221 = vsel %vm1220, %v1213, %v1217
    %v1222 = vand.u32 2147483647, %v1167
    %vm1223 = vcmp.eq.f32.partialorder %v1222, 8.507059e+37
    %v1224 = vand.u32 %v1167, 2147483648
    %v1225 = vor.u32 1.1754944e-38, %v1224
    %v1226 = vsel %vm1223, %v1225, %v1221
    %v1227 = vmul.f32 %v1148, %v1226
    %v1228 = vrcp.pop %v1170
    %v1229 = vmul.f32 %v1170, %v1228
    %v1230 = vsub.f32 1.0, %v1229
    %v1231 = vmul.f32 %v1228, %v1230
    %v1232 = vadd.f32 %v1228, %v1231
    %vm1233 = vweird.f32 %v1170
    %vm1234 = vweird.f32 %v1228
    %vm1235 = vmor %vm1233, %vm1234
    %v1236 = vsel %vm1235, %v1228, %v1232
    %v1237 = vand.u32 2147483647, %v1170
    %vm1238 = vcmp.eq.f32.partialorder %v1237, 8.507059e+37
    %v1239 = vand.u32 %v1170, 2147483648
    %v1240 = vor.u32 1.1754944e-38, %v1239
    %v1241 = vsel %vm1238, %v1240, %v1236
    %v1242 = vmul.f32 %v1150, %v1241
    %v1243 = vrcp.pop %v1173
    %v1244 = vmul.f32 %v1173, %v1243
    %v1245 = vsub.f32 1.0, %v1244
    %v1246 = vmul.f32 %v1243, %v1245
    %v1247 = vadd.f32 %v1243, %v1246
    %vm1248 = vweird.f32 %v1173
    %vm1249 = vweird.f32 %v1243
    %vm1250 = vmor %vm1248, %vm1249
    %v1251 = vsel %vm1250, %v1243, %v1247
    %v1252 = vand.u32 2147483647, %v1173
    %vm1253 = vcmp.eq.f32.partialorder %v1252, 8.507059e+37
    %v1254 = vand.u32 %v1173, 2147483648
    %v1255 = vor.u32 1.1754944e-38, %v1254
    %v1256 = vsel %vm1253, %v1255, %v1251
    %v1257 = vmul.f32 %v1152, %v1256
    %v1258 = vrcp.pop %v1176
    %v1259 = vmul.f32 %v1176, %v1258
    %v1260 = vsub.f32 1.0, %v1259
    %v1261 = vmul.f32 %v1258, %v1260
    %v1262 = vadd.f32 %v1258, %v1261
    %vm1263 = vweird.f32 %v1176
    %vm1264 = vweird.f32 %v1258
    %vm1265 = vmor %vm1263, %vm1264
    %v1266 = vsel %vm1265, %v1258, %v1262
    %v1267 = vand.u32 2147483647, %v1176
    %vm1268 = vcmp.eq.f32.partialorder %v1267, 8.507059e+37
    %v1269 = vand.u32 %v1176, 2147483648
    %v1270 = vor.u32 1.1754944e-38, %v1269
    %v1271 = vsel %vm1268, %v1270, %v1266
    %v1272 = vmul.f32 %v1154, %v1271
    %v1273 = vrcp.pop %v1179
    %v1274 = vmul.f32 %v1179, %v1273
    %v1275 = vsub.f32 1.0, %v1274
    %v1276 = vmul.f32 %v1273, %v1275
    %v1277 = vadd.f32 %v1273, %v1276
    %vm1278 = vweird.f32 %v1179
    %vm1279 = vweird.f32 %v1273
    %vm1280 = vmor %vm1278, %vm1279
    %v1281 = vsel %vm1280, %v1273, %v1277
    %v1282 = vand.u32 2147483647, %v1179
    %vm1283 = vcmp.eq.f32.partialorder %v1282, 8.507059e+37
    %v1284 = vand.u32 %v1179, 2147483648
    %v1285 = vor.u32 1.1754944e-38, %v1284
    %v1286 = vsel %vm1283, %v1285, %v1281
    %v1287 = vmul.f32 %v1156, %v1286
    %v1288 = vrcp.pop %v1182
    %v1289 = vmul.f32 %v1182, %v1288
    %v1290 = vsub.f32 1.0, %v1289
    %v1291 = vmul.f32 %v1288, %v1290
    %v1292 = vadd.f32 %v1288, %v1291
    %vm1293 = vweird.f32 %v1182
    %vm1294 = vweird.f32 %v1288
    %vm1295 = vmor %vm1293, %vm1294
    %v1296 = vsel %vm1295, %v1288, %v1292
    %v1297 = vand.u32 2147483647, %v1182
    %vm1298 = vcmp.eq.f32.partialorder %v1297, 8.507059e+37
    %v1299 = vand.u32 %v1182, 2147483648
    %v1300 = vor.u32 1.1754944e-38, %v1299
    %v1301 = vsel %vm1298, %v1300, %v1296
    %v1302 = vmul.f32 %v1158, %v1301
    %1303 = vmatpush.msra.mxu0 %v449
    %1304 = vmatpush.msra.mxu0 %v448
    %1305 = vmatpush.msra.mxu0 %v447
    %1306 = vmatpush.msra.mxu0 %v446
    %1307 = vmatpush.msra.mxu0 %v445
    %1308 = vmatpush.msra.mxu0 %v444
    %1309 = vmatpush.msra.mxu0 %v443
    %1310 = vmatpush.msra.mxu0 %v442
    %1311 = vmatpush.msra.mxu0 %v441
    %1312 = vmatpush.msra.mxu0 %v440
    %1313 = vmatpush.msra.mxu0 %v439
    %1314 = vmatpush.msra.mxu0 %v438
    %1315 = vmatpush.msra.mxu0 %v437
    %1316 = vmatpush.msra.mxu0 %v436
    %1317 = vmatpush.msra.mxu0 %v435
    %1318 = vmatpush.msra.mxu0 %v434
    %1319 = vmatmul.f32.gmra.mxu0 %v1197
    %v1320 = vpop.f32.mrf.mxu0
    %v1321 = vadd.f32 0.0, %v1320
    %1322 = vdwg.mxu0
    %1323 = vmatpush.msra.mxu0 %v465
    %1324 = vmatpush.msra.mxu0 %v464
    %1325 = vmatpush.msra.mxu0 %v463
    %1326 = vmatpush.msra.mxu0 %v462
    %1327 = vmatpush.msra.mxu0 %v461
    %1328 = vmatpush.msra.mxu0 %v460
    %1329 = vmatpush.msra.mxu0 %v459
    %1330 = vmatpush.msra.mxu0 %v458
    %1331 = vmatpush.msra.mxu0 %v457
    %1332 = vmatpush.msra.mxu0 %v456
    %1333 = vmatpush.msra.mxu0 %v455
    %1334 = vmatpush.msra.mxu0 %v454
    %1335 = vmatpush.msra.mxu0 %v453
    %1336 = vmatpush.msra.mxu0 %v452
    %1337 = vmatpush.msra.mxu0 %v451
    %1338 = vmatpush.msra.mxu0 %v450
    %1339 = vmatmul.f32.gmra.mxu0 %v1212
    %v1340 = vpop.f32.mrf.mxu0
    %v1341 = vadd.f32 0.0, %v1340
    %1342 = vdwg.mxu0
    %1343 = vmatpush.msra.mxu0 %v481
    %1344 = vmatpush.msra.mxu0 %v480
    %1345 = vmatpush.msra.mxu0 %v479
    %1346 = vmatpush.msra.mxu0 %v478
    %1347 = vmatpush.msra.mxu0 %v477
    %1348 = vmatpush.msra.mxu0 %v476
    %1349 = vmatpush.msra.mxu0 %v475
    %1350 = vmatpush.msra.mxu0 %v474
    %1351 = vmatpush.msra.mxu0 %v473
    %1352 = vmatpush.msra.mxu0 %v472
    %1353 = vmatpush.msra.mxu0 %v471
    %1354 = vmatpush.msra.mxu0 %v470
    %1355 = vmatpush.msra.mxu0 %v469
    %1356 = vmatpush.msra.mxu0 %v468
    %1357 = vmatpush.msra.mxu0 %v467
    %1358 = vmatpush.msra.mxu0 %v466
    %1359 = vmatmul.f32.gmra.mxu0 %v1227
    %v1360 = vpop.f32.mrf.mxu0
    %v1361 = vadd.f32 0.0, %v1360
    %1362 = vdwg.mxu0
    %1363 = vmatpush.msra.mxu0 %v497
    %1364 = vmatpush.msra.mxu0 %v496
    %1365 = vmatpush.msra.mxu0 %v495
    %1366 = vmatpush.msra.mxu0 %v494
    %1367 = vmatpush.msra.mxu0 %v493
    %1368 = vmatpush.msra.mxu0 %v492
    %1369 = vmatpush.msra.mxu0 %v491
    %1370 = vmatpush.msra.mxu0 %v490
    %1371 = vmatpush.msra.mxu0 %v489
    %1372 = vmatpush.msra.mxu0 %v488
    %1373 = vmatpush.msra.mxu0 %v487
    %1374 = vmatpush.msra.mxu0 %v486
    %1375 = vmatpush.msra.mxu0 %v485
    %1376 = vmatpush.msra.mxu0 %v484
    %1377 = vmatpush.msra.mxu0 %v483
    %1378 = vmatpush.msra.mxu0 %v482
    %1379 = vmatmul.f32.gmra.mxu0 %v1242
    %v1380 = vpop.f32.mrf.mxu0
    %v1381 = vadd.f32 0.0, %v1380
    %1382 = vdwg.mxu0
    %1383 = vmatpush.msra.mxu0 %v513
    %1384 = vmatpush.msra.mxu0 %v512
    %1385 = vmatpush.msra.mxu0 %v511
    %1386 = vmatpush.msra.mxu0 %v510
    %1387 = vmatpush.msra.mxu0 %v509
    %1388 = vmatpush.msra.mxu0 %v508
    %1389 = vmatpush.msra.mxu0 %v507
    %1390 = vmatpush.msra.mxu0 %v506
    %1391 = vmatpush.msra.mxu0 %v505
    %1392 = vmatpush.msra.mxu0 %v504
    %1393 = vmatpush.msra.mxu0 %v503
    %1394 = vmatpush.msra.mxu0 %v502
    %1395 = vmatpush.msra.mxu0 %v501
    %1396 = vmatpush.msra.mxu0 %v500
    %1397 = vmatpush.msra.mxu0 %v499
    %1398 = vmatpush.msra.mxu0 %v498
    %1399 = vmatmul.f32.gmra.mxu0 %v1257
    %v1400 = vpop.f32.mrf.mxu0
    %v1401 = vadd.f32 0.0, %v1400
    %1402 = vdwg.mxu0
    %1403 = vmatpush.msra.mxu0 %v529
    %1404 = vmatpush.msra.mxu0 %v528
    %1405 = vmatpush.msra.mxu0 %v527
    %1406 = vmatpush.msra.mxu0 %v526
    %1407 = vmatpush.msra.mxu0 %v525
    %1408 = vmatpush.msra.mxu0 %v524
    %1409 = vmatpush.msra.mxu0 %v523
    %1410 = vmatpush.msra.mxu0 %v522
    %1411 = vmatpush.msra.mxu0 %v521
    %1412 = vmatpush.msra.mxu0 %v520
    %1413 = vmatpush.msra.mxu0 %v519
    %1414 = vmatpush.msra.mxu0 %v518
    %1415 = vmatpush.msra.mxu0 %v517
    %1416 = vmatpush.msra.mxu0 %v516
    %1417 = vmatpush.msra.mxu0 %v515
    %1418 = vmatpush.msra.mxu0 %v514
    %1419 = vmatmul.f32.gmra.mxu0 %v1272
    %v1420 = vpop.f32.mrf.mxu0
    %v1421 = vadd.f32 0.0, %v1420
    %1422 = vdwg.mxu0
    %1423 = vmatpush.msra.mxu0 %v545
    %1424 = vmatpush.msra.mxu0 %v544
    %1425 = vmatpush.msra.mxu0 %v543
    %1426 = vmatpush.msra.mxu0 %v542
    %1427 = vmatpush.msra.mxu0 %v541
    %1428 = vmatpush.msra.mxu0 %v540
    %1429 = vmatpush.msra.mxu0 %v539
    %1430 = vmatpush.msra.mxu0 %v538
    %1431 = vmatpush.msra.mxu0 %v537
    %1432 = vmatpush.msra.mxu0 %v536
    %1433 = vmatpush.msra.mxu0 %v535
    %1434 = vmatpush.msra.mxu0 %v534
    %1435 = vmatpush.msra.mxu0 %v533
    %1436 = vmatpush.msra.mxu0 %v532
    %1437 = vmatpush.msra.mxu0 %v531
    %1438 = vmatpush.msra.mxu0 %v530
    %1439 = vmatmul.f32.gmra.mxu0 %v1287
    %v1440 = vpop.f32.mrf.mxu0
    %v1441 = vadd.f32 0.0, %v1440
    %1442 = vdwg.mxu0
    %1443 = vmatpush.msra.mxu0 %v561
    %1444 = vmatpush.msra.mxu0 %v560
    %1445 = vmatpush.msra.mxu0 %v559
    %1446 = vmatpush.msra.mxu0 %v558
    %1447 = vmatpush.msra.mxu0 %v557
    %1448 = vmatpush.msra.mxu0 %v556
    %1449 = vmatpush.msra.mxu0 %v555
    %1450 = vmatpush.msra.mxu0 %v554
    %1451 = vmatpush.msra.mxu0 %v553
    %1452 = vmatpush.msra.mxu0 %v552
    %1453 = vmatpush.msra.mxu0 %v551
    %1454 = vmatpush.msra.mxu0 %v550
    %1455 = vmatpush.msra.mxu0 %v549
    %1456 = vmatpush.msra.mxu0 %v548
    %1457 = vmatpush.msra.mxu0 %v547
    %1458 = vmatpush.msra.mxu0 %v546
    %1459 = vmatmul.f32.gmra.mxu0 %v1302
    %v1460 = vpop.f32.mrf.mxu0
    %v1461 = vadd.f32 0.0, %v1460
    %1462 = vdwg.mxu0
    %v1463 = vld [vmem:[%s3] sm:$0xff]
    %v1464 = vld [vmem:[%s3 + $0x8] sm:$0xff]
    %v1465 = vld [vmem:[%s3 + $0x10] sm:$0xff]
    %v1466 = vld [vmem:[%s3 + $0x18] sm:$0xff]
    %v1467 = vld [vmem:[%s4] sm:$0x1]
    %v1469 = vperm.slane %v1467, 0
    %v1479 = vrot.slane %v1341, 7
    %vm1480 = vcmask 1041409
    %v1481 = vsel %vm1480, %v1479, %v1321
    %v1482 = vrot.slane %v1361, 6
    %vm1483 = vcmask 1042434
    %v1484 = vsel %vm1483, %v1482, %v1481
    %v1485 = vrot.slane %v1381, 5
    %vm1486 = vcmask 1043459
    %v1487 = vsel %vm1486, %v1485, %v1484
    %v1488 = vrot.slane %v1401, 4
    %vm1489 = vcmask 1044484
    %v1490 = vsel %vm1489, %v1488, %v1487
    %v1491 = vrot.slane %v1421, 3
    %vm1492 = vcmask 1045509
    %v1493 = vsel %vm1492, %v1491, %v1490
    %v1494 = vrot.slane %v1441, 2
    %vm1495 = vcmask 1046534
    %v1496 = vsel %vm1495, %v1494, %v1493
    %v1497 = vrot.slane %v1461, 1
    %vm1498 = vcmask 1047559
    %v1499 = vsel %vm1498, %v1497, %v1496
    %v1500 = vsel %vm305, %v1499, 0
    %1502 = vmatpush.msra.mxu0 0.0
    %1503 = vmatpush.msra.mxu0 0.0
    %1504 = vmatpush.msra.mxu0 0.0
    %1505 = vmatpush.msra.mxu0 0.0
    %1506 = vmatpush.msra.mxu0 0.0
    %1507 = vmatpush.msra.mxu0 0.0
    %1508 = vmatpush.msra.mxu0 0.0
    %1509 = vmatpush.msra.mxu0 0.0
    %1510 = vmatpush.msra.mxu0 0.0
    %1511 = vmatpush.msra.mxu0 0.0
    %1512 = vmatpush.msra.mxu0 0.0
    %1513 = vmatpush.msra.mxu0 0.0
    %1514 = vmatpush.msra.mxu0 %v1466
    %1515 = vmatpush.msra.mxu0 %v1465
    %1516 = vmatpush.msra.mxu0 %v1464
    %1517 = vmatpush.msra.mxu0 %v1463
    %1518 = vmatmul.f32.gmra.mxu0 %v1500
    %v1519 = vpop.f32.mrf.mxu0
    %v1520 = vadd.f32 %v1469, %v1519
    %1521 = vdwg.mxu0
    %v1522 = vmax.f32 %v1520, 0.0
    %v1523 = vrot.slane %v1321, 1
    %v1524 = vsel %vm1480, %v1341, %v1523
    %v1525 = vrot.slane %v1361, 7
    %v1526 = vsel %vm1483, %v1525, %v1524
    %v1527 = vrot.slane %v1381, 6
    %v1528 = vsel %vm1486, %v1527, %v1526
    %v1529 = vrot.slane %v1401, 5
    %v1530 = vsel %vm1489, %v1529, %v1528
    %v1531 = vrot.slane %v1421, 4
    %v1532 = vsel %vm1492, %v1531, %v1530
    %v1533 = vrot.slane %v1441, 3
    %v1534 = vsel %vm1495, %v1533, %v1532
    %v1535 = vrot.slane %v1461, 2
    %v1536 = vsel %vm1498, %v1535, %v1534
    %v1537 = vsel %vm305, %v1536, 0
    %1539 = vmatpush.msra.mxu0 0.0
    %1540 = vmatpush.msra.mxu0 0.0
    %1541 = vmatpush.msra.mxu0 0.0
    %1542 = vmatpush.msra.mxu0 0.0
    %1543 = vmatpush.msra.mxu0 0.0
    %1544 = vmatpush.msra.mxu0 0.0
    %1545 = vmatpush.msra.mxu0 0.0
    %1546 = vmatpush.msra.mxu0 0.0
    %1547 = vmatpush.msra.mxu0 0.0
    %1548 = vmatpush.msra.mxu0 0.0
    %1549 = vmatpush.msra.mxu0 0.0
    %1550 = vmatpush.msra.mxu0 0.0
    %1551 = vmatpush.msra.mxu0 %v1466
    %1552 = vmatpush.msra.mxu0 %v1465
    %1553 = vmatpush.msra.mxu0 %v1464
    %1554 = vmatpush.msra.mxu0 %v1463
    %1555 = vmatmul.f32.gmra.mxu0 %v1537
    %v1556 = vpop.f32.mrf.mxu0
    %v1557 = vadd.f32 %v1469, %v1556
    %1558 = vdwg.mxu0
    %v1559 = vmax.f32 %v1557, 0.0
    %v1560 = vrot.slane %v1321, 2
    %v1561 = vrot.slane %v1341, 1
    %v1562 = vsel %vm1480, %v1561, %v1560
    %v1563 = vsel %vm1483, %v1361, %v1562
    %v1564 = vrot.slane %v1381, 7
    %v1565 = vsel %vm1486, %v1564, %v1563
    %v1566 = vrot.slane %v1401, 6
    %v1567 = vsel %vm1489, %v1566, %v1565
    %v1568 = vrot.slane %v1421, 5
    %v1569 = vsel %vm1492, %v1568, %v1567
    %v1570 = vrot.slane %v1441, 4
    %v1571 = vsel %vm1495, %v1570, %v1569
    %v1572 = vrot.slane %v1461, 3
    %v1573 = vsel %vm1498, %v1572, %v1571
    %v1574 = vsel %vm305, %v1573, 0
    %1576 = vmatpush.msra.mxu0 0.0
    %1577 = vmatpush.msra.mxu0 0.0
    %1578 = vmatpush.msra.mxu0 0.0
    %1579 = vmatpush.msra.mxu0 0.0
    %1580 = vmatpush.msra.mxu0 0.0
    %1581 = vmatpush.msra.mxu0 0.0
    %1582 = vmatpush.msra.mxu0 0.0
    %1583 = vmatpush.msra.mxu0 0.0
    %1584 = vmatpush.msra.mxu0 0.0
    %1585 = vmatpush.msra.mxu0 0.0
    %1586 = vmatpush.msra.mxu0 0.0
    %1587 = vmatpush.msra.mxu0 0.0
    %1588 = vmatpush.msra.mxu0 %v1466
    %1589 = vmatpush.msra.mxu0 %v1465
    %1590 = vmatpush.msra.mxu0 %v1464
    %1591 = vmatpush.msra.mxu0 %v1463
    %1592 = vmatmul.f32.gmra.mxu0 %v1574
    %v1593 = vpop.f32.mrf.mxu0
    %v1594 = vadd.f32 %v1469, %v1593
    %1595 = vdwg.mxu0
    %v1596 = vmax.f32 %v1594, 0.0
    %v1597 = vadd.f32 %v1522, %v1559
    %v1598 = vadd.f32 %v1597, %v1596
    %v1599 = vmul.f32 %v1598, 0.33333334
    %v1600 = vsub.f32 %v1522, %v1599
    %v1601 = vmul.f32 %v1600, %v1600
    %v1602 = vadd.f32 %v1601, 0.0
    %v1603 = vsub.f32 %v1559, %v1599
    %v1604 = vmul.f32 %v1603, %v1603
    %v1605 = vadd.f32 %v1602, %v1604
    %v1606 = vsub.f32 %v1596, %v1599
    %v1607 = vmul.f32 %v1606, %v1606
    %v1608 = vadd.f32 %v1605, %v1607
    %v1609 = vmul.f32 %v1608, 0.33333334
    %v1610 = vadd.f32 %v1609, 1e-05
    %v1611 = vrsqrt.pop %v1610
    %v1612 = vmul.f32 %v1611, %v1610
    %v1613 = vmul.f32 %v1612, %v1611
    %v1614 = vmul.f32 0.5, %v1613
    %v1615 = vsub.f32 1.5, %v1614
    %v1616 = vmul.f32 %v1611, %v1615
    %vm1617 = vweird.f32 %v1610
    %vm1618 = vweird.f32 %v1611
    %vm1619 = vmor %vm1617, %vm1618
    %v1620 = vsel %vm1619, %v1611, %v1616
    %v1621 = vld [vmem:[%s8] sm:$0x1]
    %v1622 = vmul.f32 %v1600, %v1620
    %v1623 = vld [vmem:[%s5] sm:$0x1]
    %v1625 = vperm.slane %v1623, 0
    %v1627 = vmul.f32 %v1622, %v1625
    %v1628 = vld [vmem:[%s6] sm:$0x1]
    %v1630 = vperm.slane %v1628, 0
    %v1632 = vadd.f32 %v1627, %v1630
    %v1633 = vld [vmem:[%s7] sm:$0xff]
    %vm1634 = vcmask 64512
    %v1636 = vsel %vm1634, %v1632, 0
    %1638 = vmatpush.msra.mxu0 0.0
    %1639 = vmatpush.msra.mxu0 0.0
    %1640 = vmatpush.msra.mxu0 0.0
    %1641 = vmatpush.msra.mxu0 0.0
    %1642 = vmatpush.msra.mxu0 0.0
    %1643 = vmatpush.msra.mxu0 0.0
    %1644 = vmatpush.msra.mxu0 0.0
    %1645 = vmatpush.msra.mxu0 0.0
    %1646 = vmatpush.msra.mxu0 0.0
    %1647 = vmatpush.msra.mxu0 0.0
    %1648 = vmatpush.msra.mxu0 0.0
    %1649 = vmatpush.msra.mxu0 0.0
    %1650 = vmatpush.msra.mxu0 0.0
    %1651 = vmatpush.msra.mxu0 0.0
    %1652 = vmatpush.msra.mxu0 0.0
    %1653 = vmatpush.msra.mxu0 %v1633
    %1654 = vmatmul.f32.gmra.mxu0 %v1636
    %v1655 = vpop.f32.mrf.mxu0
    %v1656 = vadd.f32 0.0, %v1655
    %1657 = vdwg.mxu0
    %v1659 = vperm.slane %v1621, 0
    %v1661 = vadd.f32 %v1659, %v1656
    %v1662 = vmul.f32 %v1603, %v1620
    %s1663 = scalar_lea.vmem %s5, 1
    %v1664 = vld [vmem:[%s1663] sm:$0x1]
    %v1666 = vperm.slane %v1664, 0
    %v1668 = vmul.f32 %v1662, %v1666
    %s1669 = scalar_lea.vmem %s6, 1
    %v1670 = vld [vmem:[%s1669] sm:$0x1]
    %v1672 = vperm.slane %v1670, 0
    %v1674 = vadd.f32 %v1668, %v1672
    %s1675 = scalar_lea.vmem %s7, 8
    %v1676 = vld [vmem:[%s1675] sm:$0xff]
    %v1678 = vsel %vm1634, %v1674, 0
    %1680 = vmatpush.msra.mxu0 0.0
    %1681 = vmatpush.msra.mxu0 0.0
    %1682 = vmatpush.msra.mxu0 0.0
    %1683 = vmatpush.msra.mxu0 0.0
    %1684 = vmatpush.msra.mxu0 0.0
    %1685 = vmatpush.msra.mxu0 0.0
    %1686 = vmatpush.msra.mxu0 0.0
    %1687 = vmatpush.msra.mxu0 0.0
    %1688 = vmatpush.msra.mxu0 0.0
    %1689 = vmatpush.msra.mxu0 0.0
    %1690 = vmatpush.msra.mxu0 0.0
    %1691 = vmatpush.msra.mxu0 0.0
    %1692 = vmatpush.msra.mxu0 0.0
    %1693 = vmatpush.msra.mxu0 0.0
    %1694 = vmatpush.msra.mxu0 0.0
    %1695 = vmatpush.msra.mxu0 %v1676
    %1696 = vmatmul.f32.gmra.mxu0 %v1678
    %v1697 = vpop.f32.mrf.mxu0
    %v1698 = vadd.f32 0.0, %v1697
    %1699 = vdwg.mxu0
    %v1700 = vadd.f32 %v1661, %v1698
    %v1701 = vmul.f32 %v1606, %v1620
    %s1702 = scalar_lea.vmem %s5, 2
    %v1703 = vld [vmem:[%s1702] sm:$0x1]
    %v1705 = vperm.slane %v1703, 0
    %v1707 = vmul.f32 %v1701, %v1705
    %s1708 = scalar_lea.vmem %s6, 2
    %v1709 = vld [vmem:[%s1708] sm:$0x1]
    %v1711 = vperm.slane %v1709, 0
    %v1713 = vadd.f32 %v1707, %v1711
    %s1714 = scalar_lea.vmem %s7, 16
    %v1715 = vld [vmem:[%s1714] sm:$0xff]
    %v1717 = vsel %vm1634, %v1713, 0
    %1719 = vmatpush.msra.mxu0 0.0
    %1720 = vmatpush.msra.mxu0 0.0
    %1721 = vmatpush.msra.mxu0 0.0
    %1722 = vmatpush.msra.mxu0 0.0
    %1723 = vmatpush.msra.mxu0 0.0
    %1724 = vmatpush.msra.mxu0 0.0
    %1725 = vmatpush.msra.mxu0 0.0
    %1726 = vmatpush.msra.mxu0 0.0
    %1727 = vmatpush.msra.mxu0 0.0
    %1728 = vmatpush.msra.mxu0 0.0
    %1729 = vmatpush.msra.mxu0 0.0
    %1730 = vmatpush.msra.mxu0 0.0
    %1731 = vmatpush.msra.mxu0 0.0
    %1732 = vmatpush.msra.mxu0 0.0
    %1733 = vmatpush.msra.mxu0 0.0
    %1734 = vmatpush.msra.mxu0 %v1715
    %1735 = vmatmul.f32.gmra.mxu0 %v1717
    %v1736 = vpop.f32.mrf.mxu0
    %v1737 = vadd.f32 0.0, %v1736
    %1738 = vdwg.mxu0
    %v1739 = vadd.f32 %v1700, %v1737
    %1740 = vst [vmem:[#allocation3] sm:$0xff] %v1739
    // Predicated region
    $region38: #{tpu_custom_call.1} parent=1 // pred_check
      _
    $region39: #{tpu_custom_call.1} parent=1 // pred_check_branch
      %1742 = sbr.rel (0) target = $region41
    $region40: #{tpu_custom_call.1} parent=1 // pred_region
      %1744 = vsyncadd [#allocation4], 0
      %s1746 = sshll.u32 [#allocation3], 4
      %s1747 = int_to_ptr.vmem [resolvable:$true] %s1746
      %s1748 = sshll.u32 %s9, 4
      %s1749 = int_to_ptr.hbm [resolvable:$true] %s1748
      %1751 = dma.vmem_to_hbm [thread:$0]  %s1747, 128, %s1749, [#allocation4]
    $region41: #{tpu_custom_call.1} parent=1 // pred_fallthru
      _
    // Predicated region
    $region42: #{tpu_custom_call.1} parent=1 // pred_check
      _
    $region43: #{tpu_custom_call.1} parent=1 // pred_check_branch
      %1753 = sbr.rel (0) target = $region45
    $region44: #{tpu_custom_call.1} parent=1 // pred_region
      %1755 = dma.done [#allocation4], 128
    $region45: #{tpu_custom_call.1} parent=1 // pred_fallthru
      _
    %1756 = vsyncpa [#allocation4], 1

// kernel: tpu_custom_call.1
$region0: #{tpu_custom_call.1}
  #allocation0 [shape = 'u32[]', space=smem, size = 0x4, offset = 0x4, fixed_abs, tag = 'smem constant byte address 0x4 - core index']
  #allocation1 [shape = 'u32[72,128]{1,0:T(1,128)}', space=vmem, size = 0x9000, scoped, tag = 'internal scratch']
  #allocation2 [shape = 'f32[8,128,32]{2,1,0:T(8,128)}', space=vmem, size = 0x80000, scoped, tag = 'scratch operand']
  %s0 = inlined_call_operand.vmem [shape: f32[8,128,32], index: 0, kind: input, shape index: {}]
  %s1 = inlined_call_operand.vmem [shape: f32[128,32], index: 1, kind: input, shape index: {}]
  %s2 = inlined_call_operand.vmem [shape: f32[1,3,32], index: 2, kind: input, shape index: {}]
  %s3 = inlined_call_operand.vmem [shape: f32[32,8], index: 3, kind: input, shape index: {}]
  %s4 = inlined_call_operand.vmem [shape: f32[1,8], index: 4, kind: input, shape index: {}]
  %s5 = inlined_call_operand.vmem [shape: f32[3,1,8], index: 5, kind: input, shape index: {}]
  %s6 = inlined_call_operand.vmem [shape: f32[3,1,8], index: 6, kind: input, shape index: {}]
  %s7 = inlined_call_operand.vmem [shape: f32[3,8,128], index: 7, kind: input, shape index: {}]
  %s8 = inlined_call_operand.vmem [shape: f32[1,128], index: 8, kind: input, shape index: {}]
  %s9 = inlined_call_operand.hbm [shape: f32[8,128], index: 9, kind: output, shape index: {}]
  %s10 = sld [smem:[#allocation0]]
  $region46: #{tpu_custom_call.1} parent=0
    _
  %s12 = ssub.s32 1, %s10
  %s13 = scalar_select 0, %s12, %s10
  $region1: #{tpu_custom_call.1} parent=0
    #allocation3 [shape = 'u8[4096]{0}', space=vmem, size = 0x1000, scoped, tag = 'output window, operand 0, single buffered']
    #allocation4 [shape = 's32[1]{0}', space=sflag, size = 0x4, scoped, tag = 'scoped memory for tpu_custom_call.1']
    %14 = vsyncpa [#allocation4], 0
    // Predicated region
    $region2: #{tpu_custom_call.1} parent=1 // pred_check
      _
    $region3: #{tpu_custom_call.1} parent=1 // pred_check_branch
      %16 = sbr.rel (0) target = $region5
    $region4: #{tpu_custom_call.1} parent=1 // pred_region
      _
    $region5: #{tpu_custom_call.1} parent=1 // pred_fallthru
      _
    // Predicated region
    $region6: #{tpu_custom_call.1} parent=1 // pred_check
      _
    $region7: #{tpu_custom_call.1} parent=1 // pred_check_branch
      %18 = sbr.rel (0) target = $region9
    $region8: #{tpu_custom_call.1} parent=1 // pred_region
      _
    $region9: #{tpu_custom_call.1} parent=1 // pred_fallthru
      _
    // Predicated region
    $region10: #{tpu_custom_call.1} parent=1 // pred_check
      _
    $region11: #{tpu_custom_call.1} parent=1 // pred_check_branch
      %20 = sbr.rel (0) target = $region13
    $region12: #{tpu_custom_call.1} parent=1 // pred_region
      _
    $region13: #{tpu_custom_call.1} parent=1 // pred_fallthru
      _
    // Predicated region
    $region14: #{tpu_custom_call.1} parent=1 // pred_check
      _
    $region15: #{tpu_custom_call.1} parent=1 // pred_check_branch
      %22 = sbr.rel (0) target = $region17
    $region16: #{tpu_custom_call.1} parent=1 // pred_region
      _
    $region17: #{tpu_custom_call.1} parent=1 // pred_fallthru
      _
    // Predicated region
    $region18: #{tpu_custom_call.1} parent=1 // pred_check
      _
    $region19: #{tpu_custom_call.1} parent=1 // pred_check_branch
      %24 = sbr.rel (0) target = $region21
    $region20: #{tpu_custom_call.1} parent=1 // pred_region
      _
    $region21: #{tpu_custom_call.1} parent=1 // pred_fallthru
      _
    // Predicated region
    $region22: #{tpu_custom_call.1} parent=1 // pred_check
      _
    $region23: #{tpu_custom_call.1} parent=1 // pred_check_branch
      %26 = sbr.rel (0) target = $region25
    $region24: #{tpu_custom_call.1} parent=1 // pred_region
      _
    $region25: #{tpu_custom_call.1} parent=1 // pred_fallthru
      _
    // Predicated region
    $region26: #{tpu_custom_call.1} parent=1 // pred_check
      _
    $region27: #{tpu_custom_call.1} parent=1 // pred_check_branch
      %28 = sbr.rel (0) target = $region29
    $region28: #{tpu_custom_call.1} parent=1 // pred_region
      _
    $region29: #{tpu_custom_call.1} parent=1 // pred_fallthru
      _
    // Predicated region
    $region30: #{tpu_custom_call.1} parent=1 // pred_check
      _
    $region31: #{tpu_custom_call.1} parent=1 // pred_check_branch
      %30 = sbr.rel (0) target = $region33
    $region32: #{tpu_custom_call.1} parent=1 // pred_region
      _
    $region33: #{tpu_custom_call.1} parent=1 // pred_fallthru
      _
    // Predicated region
    $region34: #{tpu_custom_call.1} parent=1 // pred_check
      _
    $region35: #{tpu_custom_call.1} parent=1 // pred_check_branch
      %32 = sbr.rel (0) target = $region37
    $region36: #{tpu_custom_call.1} parent=1 // pred_region
      _
    $region37: #{tpu_custom_call.1} parent=1 // pred_fallthru
      _
    %v33 = vld [vmem:[%s0] sm:$0xff]
    %v34 = vld [vmem:[%s0 + $0x8] sm:$0xff]
    %v35 = vld [vmem:[%s0 + $0x10] sm:$0xff]
    %v36 = vld [vmem:[%s0 + $0x18] sm:$0xff]
    %v37 = vld [vmem:[%s0 + $0x20] sm:$0xff]
    %v38 = vld [vmem:[%s0 + $0x28] sm:$0xff]
    %v39 = vld [vmem:[%s0 + $0x30] sm:$0xff]
    %v40 = vld [vmem:[%s0 + $0x38] sm:$0xff]
    %v41 = vld [vmem:[%s0 + $0x40] sm:$0xff]
    %v42 = vld [vmem:[%s0 + $0x48] sm:$0xff]
    %v43 = vld [vmem:[%s0 + $0x50] sm:$0xff]
    %v44 = vld [vmem:[%s0 + $0x58] sm:$0xff]
    %v45 = vld [vmem:[%s0 + $0x60] sm:$0xff]
    %v46 = vld [vmem:[%s0 + $0x68] sm:$0xff]
    %v47 = vld [vmem:[%s0 + $0x70] sm:$0xff]
    %v48 = vld [vmem:[%s0 + $0x78] sm:$0xff]
    %v49 = vld [vmem:[%s0 + $0x80] sm:$0xff]
    %v50 = vld [vmem:[%s0 + $0x88] sm:$0xff]
    %v51 = vld [vmem:[%s0 + $0x90] sm:$0xff]
    %v52 = vld [vmem:[%s0 + $0x98] sm:$0xff]
    %v53 = vld [vmem:[%s0 + $0xa0] sm:$0xff]
    %v54 = vld [vmem:[%s0 + $0xa8] sm:$0xff]
    %v55 = vld [vmem:[%s0 + $0xb0] sm:$0xff]
    %v56 = vld [vmem:[%s0 + $0xb8] sm:$0xff]
    %v57 = vld [vmem:[%s0 + $0xc0] sm:$0xff]
    %v58 = vld [vmem:[%s0 + $0xc8] sm:$0xff]
    %v59 = vld [vmem:[%s0 + $0xd0] sm:$0xff]
    %v60 = vld [vmem:[%s0 + $0xd8] sm:$0xff]
    %v61 = vld [vmem:[%s0 + $0xe0] sm:$0xff]
    %v62 = vld [vmem:[%s0 + $0xe8] sm:$0xff]
    %v63 = vld [vmem:[%s0 + $0xf0] sm:$0xff]
    %v64 = vld [vmem:[%s0 + $0xf8] sm:$0xff]
    %v65 = vld [vmem:[%s0 + $0x100] sm:$0xff]
    %v66 = vld [vmem:[%s0 + $0x108] sm:$0xff]
    %v67 = vld [vmem:[%s0 + $0x110] sm:$0xff]
    %v68 = vld [vmem:[%s0 + $0x118] sm:$0xff]
    %v69 = vld [vmem:[%s0 + $0x120] sm:$0xff]
    %v70 = vld [vmem:[%s0 + $0x128] sm:$0xff]
    %v71 = vld [vmem:[%s0 + $0x130] sm:$0xff]
    %v72 = vld [vmem:[%s0 + $0x138] sm:$0xff]
    %v73 = vld [vmem:[%s0 + $0x140] sm:$0xff]
    %v74 = vld [vmem:[%s0 + $0x148] sm:$0xff]
    %v75 = vld [vmem:[%s0 + $0x150] sm:$0xff]
    %v76 = vld [vmem:[%s0 + $0x158] sm:$0xff]
    %v77 = vld [vmem:[%s0 + $0x160] sm:$0xff]
    %v78 = vld [vmem:[%s0 + $0x168] sm:$0xff]
    %v79 = vld [vmem:[%s0 + $0x170] sm:$0xff]
    %v80 = vld [vmem:[%s0 + $0x178] sm:$0xff]
    %v81 = vld [vmem:[%s0 + $0x180] sm:$0xff]
    %v82 = vld [vmem:[%s0 + $0x188] sm:$0xff]
    %v83 = vld [vmem:[%s0 + $0x190] sm:$0xff]
    %v84 = vld [vmem:[%s0 + $0x198] sm:$0xff]
    %v85 = vld [vmem:[%s0 + $0x1a0] sm:$0xff]
    %v86 = vld [vmem:[%s0 + $0x1a8] sm:$0xff]
    %v87 = vld [vmem:[%s0 + $0x1b0] sm:$0xff]
    %v88 = vld [vmem:[%s0 + $0x1b8] sm:$0xff]
    %v89 = vld [vmem:[%s0 + $0x1c0] sm:$0xff]
    %v90 = vld [vmem:[%s0 + $0x1c8] sm:$0xff]
    %v91 = vld [vmem:[%s0 + $0x1d0] sm:$0xff]
    %v92 = vld [vmem:[%s0 + $0x1d8] sm:$0xff]
    %v93 = vld [vmem:[%s0 + $0x1e0] sm:$0xff]
    %v94 = vld [vmem:[%s0 + $0x1e8] sm:$0xff]
    %v95 = vld [vmem:[%s0 + $0x1f0] sm:$0xff]
    %v96 = vld [vmem:[%s0 + $0x1f8] sm:$0xff]
    %v97 = vld [vmem:[%s0 + $0x200] sm:$0xff]
    %v98 = vld [vmem:[%s0 + $0x208] sm:$0xff]
    %v99 = vld [vmem:[%s0 + $0x210] sm:$0xff]
    %v100 = vld [vmem:[%s0 + $0x218] sm:$0xff]
    %v101 = vld [vmem:[%s0 + $0x220] sm:$0xff]
    %v102 = vld [vmem:[%s0 + $0x228] sm:$0xff]
    %v103 = vld [vmem:[%s0 + $0x230] sm:$0xff]
    %v104 = vld [vmem:[%s0 + $0x238] sm:$0xff]
    %v105 = vld [vmem:[%s0 + $0x240] sm:$0xff]
    %v106 = vld [vmem:[%s0 + $0x248] sm:$0xff]
    %v107 = vld [vmem:[%s0 + $0x250] sm:$0xff]
    %v108 = vld [vmem:[%s0 + $0x258] sm:$0xff]
    %v109 = vld [vmem:[%s0 + $0x260] sm:$0xff]
    %v110 = vld [vmem:[%s0 + $0x268] sm:$0xff]
    %v111 = vld [vmem:[%s0 + $0x270] sm:$0xff]
    %v112 = vld [vmem:[%s0 + $0x278] sm:$0xff]
    %v113 = vld [vmem:[%s0 + $0x280] sm:$0xff]
    %v114 = vld [vmem:[%s0 + $0x288] sm:$0xff]
    %v115 = vld [vmem:[%s0 + $0x290] sm:$0xff]
    %v116 = vld [vmem:[%s0 + $0x298] sm:$0xff]
    %v117 = vld [vmem:[%s0 + $0x2a0] sm:$0xff]
    %v118 = vld [vmem:[%s0 + $0x2a8] sm:$0xff]
    %v119 = vld [vmem:[%s0 + $0x2b0] sm:$0xff]
    %v120 = vld [vmem:[%s0 + $0x2b8] sm:$0xff]
    %v121 = vld [vmem:[%s0 + $0x2c0] sm:$0xff]
    %v122 = vld [vmem:[%s0 + $0x2c8] sm:$0xff]
    %v123 = vld [vmem:[%s0 + $0x2d0] sm:$0xff]
    %v124 = vld [vmem:[%s0 + $0x2d8] sm:$0xff]
    %v125 = vld [vmem:[%s0 + $0x2e0] sm:$0xff]
    %v126 = vld [vmem:[%s0 + $0x2e8] sm:$0xff]
    %v127 = vld [vmem:[%s0 + $0x2f0] sm:$0xff]
    %v128 = vld [vmem:[%s0 + $0x2f8] sm:$0xff]
    %v129 = vld [vmem:[%s0 + $0x300] sm:$0xff]
    %v130 = vld [vmem:[%s0 + $0x308] sm:$0xff]
    %v131 = vld [vmem:[%s0 + $0x310] sm:$0xff]
    %v132 = vld [vmem:[%s0 + $0x318] sm:$0xff]
    %v133 = vld [vmem:[%s0 + $0x320] sm:$0xff]
    %v134 = vld [vmem:[%s0 + $0x328] sm:$0xff]
    %v135 = vld [vmem:[%s0 + $0x330] sm:$0xff]
    %v136 = vld [vmem:[%s0 + $0x338] sm:$0xff]
    %v137 = vld [vmem:[%s0 + $0x340] sm:$0xff]
    %v138 = vld [vmem:[%s0 + $0x348] sm:$0xff]
    %v139 = vld [vmem:[%s0 + $0x350] sm:$0xff]
    %v140 = vld [vmem:[%s0 + $0x358] sm:$0xff]
    %v141 = vld [vmem:[%s0 + $0x360] sm:$0xff]
    %v142 = vld [vmem:[%s0 + $0x368] sm:$0xff]
    %v143 = vld [vmem:[%s0 + $0x370] sm:$0xff]
    %v144 = vld [vmem:[%s0 + $0x378] sm:$0xff]
    %v145 = vld [vmem:[%s0 + $0x380] sm:$0xff]
    %v146 = vld [vmem:[%s0 + $0x388] sm:$0xff]
    %v147 = vld [vmem:[%s0 + $0x390] sm:$0xff]
    %v148 = vld [vmem:[%s0 + $0x398] sm:$0xff]
    %v149 = vld [vmem:[%s0 + $0x3a0] sm:$0xff]
    %v150 = vld [vmem:[%s0 + $0x3a8] sm:$0xff]
    %v151 = vld [vmem:[%s0 + $0x3b0] sm:$0xff]
    %v152 = vld [vmem:[%s0 + $0x3b8] sm:$0xff]
    %v153 = vld [vmem:[%s0 + $0x3c0] sm:$0xff]
    %v154 = vld [vmem:[%s0 + $0x3c8] sm:$0xff]
    %v155 = vld [vmem:[%s0 + $0x3d0] sm:$0xff]
    %v156 = vld [vmem:[%s0 + $0x3d8] sm:$0xff]
    %v157 = vld [vmem:[%s0 + $0x3e0] sm:$0xff]
    %v158 = vld [vmem:[%s0 + $0x3e8] sm:$0xff]
    %v159 = vld [vmem:[%s0 + $0x3f0] sm:$0xff]
    %v160 = vld [vmem:[%s0 + $0x3f8] sm:$0xff]
    %v161 = vld [vmem:[%s1] sm:$0xff]
    %v162 = vld [vmem:[%s1 + $0x8] sm:$0xff]
    %v163 = vld [vmem:[%s1 + $0x10] sm:$0xff]
    %v164 = vld [vmem:[%s1 + $0x18] sm:$0xff]
    %v165 = vld [vmem:[%s1 + $0x20] sm:$0xff]
    %v166 = vld [vmem:[%s1 + $0x28] sm:$0xff]
    %v167 = vld [vmem:[%s1 + $0x30] sm:$0xff]
    %v168 = vld [vmem:[%s1 + $0x38] sm:$0xff]
    %v169 = vld [vmem:[%s1 + $0x40] sm:$0xff]
    %v170 = vld [vmem:[%s1 + $0x48] sm:$0xff]
    %v171 = vld [vmem:[%s1 + $0x50] sm:$0xff]
    %v172 = vld [vmem:[%s1 + $0x58] sm:$0xff]
    %v173 = vld [vmem:[%s1 + $0x60] sm:$0xff]
    %v174 = vld [vmem:[%s1 + $0x68] sm:$0xff]
    %v175 = vld [vmem:[%s1 + $0x70] sm:$0xff]
    %v176 = vld [vmem:[%s1 + $0x78] sm:$0xff]
    %v177 = vadd.f32 %v33, %v161
    %v178 = vadd.f32 %v34, %v162
    %v179 = vadd.f32 %v35, %v163
    %v180 = vadd.f32 %v36, %v164
    %v181 = vadd.f32 %v37, %v165
    %v182 = vadd.f32 %v38, %v166
    %v183 = vadd.f32 %v39, %v167
    %v184 = vadd.f32 %v40, %v168
    %v185 = vadd.f32 %v41, %v169
    %v186 = vadd.f32 %v42, %v170
    %v187 = vadd.f32 %v43, %v171
    %v188 = vadd.f32 %v44, %v172
    %v189 = vadd.f32 %v45, %v173
    %v190 = vadd.f32 %v46, %v174
    %v191 = vadd.f32 %v47, %v175
    %v192 = vadd.f32 %v48, %v176
    %v193 = vadd.f32 %v49, %v161
    %v194 = vadd.f32 %v50, %v162
    %v195 = vadd.f32 %v51, %v163
    %v196 = vadd.f32 %v52, %v164
    %v197 = vadd.f32 %v53, %v165
    %v198 = vadd.f32 %v54, %v166
    %v199 = vadd.f32 %v55, %v167
    %v200 = vadd.f32 %v56, %v168
    %v201 = vadd.f32 %v57, %v169
    %v202 = vadd.f32 %v58, %v170
    %v203 = vadd.f32 %v59, %v171
    %v204 = vadd.f32 %v60, %v172
    %v205 = vadd.f32 %v61, %v173
    %v206 = vadd.f32 %v62, %v174
    %v207 = vadd.f32 %v63, %v175
    %v208 = vadd.f32 %v64, %v176
    %v209 = vadd.f32 %v65, %v161
    %v210 = vadd.f32 %v66, %v162
    %v211 = vadd.f32 %v67, %v163
    %v212 = vadd.f32 %v68, %v164
    %v213 = vadd.f32 %v69, %v165
    %v214 = vadd.f32 %v70, %v166
    %v215 = vadd.f32 %v71, %v167
    %v216 = vadd.f32 %v72, %v168
    %v217 = vadd.f32 %v73, %v169
    %v218 = vadd.f32 %v74, %v170
    %v219 = vadd.f32 %v75, %v171
    %v220 = vadd.f32 %v76, %v172
    %v221 = vadd.f32 %v77, %v173
    %v222 = vadd.f32 %v78, %v174
    %v223 = vadd.f32 %v79, %v175
    %v224 = vadd.f32 %v80, %v176
    %v225 = vadd.f32 %v81, %v161
    %v226 = vadd.f32 %v82, %v162
    %v227 = vadd.f32 %v83, %v163
    %v228 = vadd.f32 %v84, %v164
    %v229 = vadd.f32 %v85, %v165
    %v230 = vadd.f32 %v86, %v166
    %v231 = vadd.f32 %v87, %v167
    %v232 = vadd.f32 %v88, %v168
    %v233 = vadd.f32 %v89, %v169
    %v234 = vadd.f32 %v90, %v170
    %v235 = vadd.f32 %v91, %v171
    %v236 = vadd.f32 %v92, %v172
    %v237 = vadd.f32 %v93, %v173
    %v238 = vadd.f32 %v94, %v174
    %v239 = vadd.f32 %v95, %v175
    %v240 = vadd.f32 %v96, %v176
    %v241 = vadd.f32 %v97, %v161
    %v242 = vadd.f32 %v98, %v162
    %v243 = vadd.f32 %v99, %v163
    %v244 = vadd.f32 %v100, %v164
    %v245 = vadd.f32 %v101, %v165
    %v246 = vadd.f32 %v102, %v166
    %v247 = vadd.f32 %v103, %v167
    %v248 = vadd.f32 %v104, %v168
    %v249 = vadd.f32 %v105, %v169
    %v250 = vadd.f32 %v106, %v170
    %v251 = vadd.f32 %v107, %v171
    %v252 = vadd.f32 %v108, %v172
    %v253 = vadd.f32 %v109, %v173
    %v254 = vadd.f32 %v110, %v174
    %v255 = vadd.f32 %v111, %v175
    %v256 = vadd.f32 %v112, %v176
    %v257 = vadd.f32 %v113, %v161
    %v258 = vadd.f32 %v114, %v162
    %v259 = vadd.f32 %v115, %v163
    %v260 = vadd.f32 %v116, %v164
    %v261 = vadd.f32 %v117, %v165
    %v262 = vadd.f32 %v118, %v166
    %v263 = vadd.f32 %v119, %v167
    %v264 = vadd.f32 %v120, %v168
    %v265 = vadd.f32 %v121, %v169
    %v266 = vadd.f32 %v122, %v170
    %v267 = vadd.f32 %v123, %v171
    %v268 = vadd.f32 %v124, %v172
    %v269 = vadd.f32 %v125, %v173
    %v270 = vadd.f32 %v126, %v174
    %v271 = vadd.f32 %v127, %v175
    %v272 = vadd.f32 %v128, %v176
    %v273 = vadd.f32 %v129, %v161
    %v274 = vadd.f32 %v130, %v162
    %v275 = vadd.f32 %v131, %v163
    %v276 = vadd.f32 %v132, %v164
    %v277 = vadd.f32 %v133, %v165
    %v278 = vadd.f32 %v134, %v166
    %v279 = vadd.f32 %v135, %v167
    %v280 = vadd.f32 %v136, %v168
    %v281 = vadd.f32 %v137, %v169
    %v282 = vadd.f32 %v138, %v170
    %v283 = vadd.f32 %v139, %v171
    %v284 = vadd.f32 %v140, %v172
    %v285 = vadd.f32 %v141, %v173
    %v286 = vadd.f32 %v142, %v174
    %v287 = vadd.f32 %v143, %v175
    %v288 = vadd.f32 %v144, %v176
    %v289 = vadd.f32 %v145, %v161
    %v290 = vadd.f32 %v146, %v162
    %v291 = vadd.f32 %v147, %v163
    %v292 = vadd.f32 %v148, %v164
    %v293 = vadd.f32 %v149, %v165
    %v294 = vadd.f32 %v150, %v166
    %v295 = vadd.f32 %v151, %v167
    %v296 = vadd.f32 %v152, %v168
    %v297 = vadd.f32 %v153, %v169
    %v298 = vadd.f32 %v154, %v170
    %v299 = vadd.f32 %v155, %v171
    %v300 = vadd.f32 %v156, %v172
    %v301 = vadd.f32 %v157, %v173
    %v302 = vadd.f32 %v158, %v174
    %v303 = vadd.f32 %v159, %v175
    %v304 = vadd.f32 %v160, %v176
    %vm305 = vcmask 261120
    %306 = vst.msk [vmem:[#allocation2] sm:$0xff] %vm305, %v177
    %307 = vst.msk [vmem:[#allocation2 + $0x8] sm:$0xff] %vm305, %v178
    %308 = vst.msk [vmem:[#allocation2 + $0x10] sm:$0xff] %vm305, %v179
    %309 = vst.msk [vmem:[#allocation2 + $0x18] sm:$0xff] %vm305, %v180
    %310 = vst.msk [vmem:[#allocation2 + $0x20] sm:$0xff] %vm305, %v181
    %311 = vst.msk [vmem:[#allocation2 + $0x28] sm:$0xff] %vm305, %v182
    %312 = vst.msk [vmem:[#allocation2 + $0x30] sm:$0xff] %vm305, %v183
    %313 = vst.msk [vmem:[#allocation2 + $0x38] sm:$0xff] %vm305, %v184
    %314 = vst.msk [vmem:[#allocation2 + $0x40] sm:$0xff] %vm305, %v185
    %315 = vst.msk [vmem:[#allocation2 + $0x48] sm:$0xff] %vm305, %v186
    %316 = vst.msk [vmem:[#allocation2 + $0x50] sm:$0xff] %vm305, %v187
    %317 = vst.msk [vmem:[#allocation2 + $0x58] sm:$0xff] %vm305, %v188
    %318 = vst.msk [vmem:[#allocation2 + $0x60] sm:$0xff] %vm305, %v189
    %319 = vst.msk [vmem:[#allocation2 + $0x68] sm:$0xff] %vm305, %v190
    %320 = vst.msk [vmem:[#allocation2 + $0x70] sm:$0xff] %vm305, %v191
    %321 = vst.msk [vmem:[#allocation2 + $0x78] sm:$0xff] %vm305, %v192
    %322 = vst.msk [vmem:[#allocation2 + $0x80] sm:$0xff] %vm305, %v193
    %323 = vst.msk [vmem:[#allocation2 + $0x88] sm:$0xff] %vm305, %v194
    %324 = vst.msk [vmem:[#allocation2 + $0x90] sm:$0xff] %vm305, %v195
    %325 = vst.msk [vmem:[#allocation2 + $0x98] sm:$0xff] %vm305, %v196
    %326 = vst.msk [vmem:[#allocation2 + $0xa0] sm:$0xff] %vm305, %v197
    %327 = vst.msk [vmem:[#allocation2 + $0xa8] sm:$0xff] %vm305, %v198
    %328 = vst.msk [vmem:[#allocation2 + $0xb0] sm:$0xff] %vm305, %v199
    %329 = vst.msk [vmem:[#allocation2 + $0xb8] sm:$0xff] %vm305, %v200
    %330 = vst.msk [vmem:[#allocation2 + $0xc0] sm:$0xff] %vm305, %v201
    %331 = vst.msk [vmem:[#allocation2 + $0xc8] sm:$0xff] %vm305, %v202
    %332 = vst.msk [vmem:[#allocation2 + $0xd0] sm:$0xff] %vm305, %v203
    %333 = vst.msk [vmem:[#allocation2 + $0xd8] sm:$0xff] %vm305, %v204
    %334 = vst.msk [vmem:[#allocation2 + $0xe0] sm:$0xff] %vm305, %v205
    %335 = vst.msk [vmem:[#allocation2 + $0xe8] sm:$0xff] %vm305, %v206
    %336 = vst.msk [vmem:[#allocation2 + $0xf0] sm:$0xff] %vm305, %v207
    %337 = vst.msk [vmem:[#allocation2 + $0xf8] sm:$0xff] %vm305, %v208
    %338 = vst.msk [vmem:[#allocation2 + $0x100] sm:$0xff] %vm305, %v209
    %339 = vst.msk [vmem:[#allocation2 + $0x108] sm:$0xff] %vm305, %v210
    %340 = vst.msk [vmem:[#allocation2 + $0x110] sm:$0xff] %vm305, %v211
    %341 = vst.msk [vmem:[#allocation2 + $0x118] sm:$0xff] %vm305, %v212
    %342 = vst.msk [vmem:[#allocation2 + $0x120] sm:$0xff] %vm305, %v213
    %343 = vst.msk [vmem:[#allocation2 + $0x128] sm:$0xff] %vm305, %v214
    %344 = vst.msk [vmem:[#allocation2 + $0x130] sm:$0xff] %vm305, %v215
    %345 = vst.msk [vmem:[#allocation2 + $0x138] sm:$0xff] %vm305, %v216
    %346 = vst.msk [vmem:[#allocation2 + $0x140] sm:$0xff] %vm305, %v217
    %347 = vst.msk [vmem:[#allocation2 + $0x148] sm:$0xff] %vm305, %v218
    %348 = vst.msk [vmem:[#allocation2 + $0x150] sm:$0xff] %vm305, %v219
    %349 = vst.msk [vmem:[#allocation2 + $0x158] sm:$0xff] %vm305, %v220
    %350 = vst.msk [vmem:[#allocation2 + $0x160] sm:$0xff] %vm305, %v221
    %351 = vst.msk [vmem:[#allocation2 + $0x168] sm:$0xff] %vm305, %v222
    %352 = vst.msk [vmem:[#allocation2 + $0x170] sm:$0xff] %vm305, %v223
    %353 = vst.msk [vmem:[#allocation2 + $0x178] sm:$0xff] %vm305, %v224
    %354 = vst.msk [vmem:[#allocation2 + $0x180] sm:$0xff] %vm305, %v225
    %355 = vst.msk [vmem:[#allocation2 + $0x188] sm:$0xff] %vm305, %v226
    %356 = vst.msk [vmem:[#allocation2 + $0x190] sm:$0xff] %vm305, %v227
    %357 = vst.msk [vmem:[#allocation2 + $0x198] sm:$0xff] %vm305, %v228
    %358 = vst.msk [vmem:[#allocation2 + $0x1a0] sm:$0xff] %vm305, %v229
    %359 = vst.msk [vmem:[#allocation2 + $0x1a8] sm:$0xff] %vm305, %v230
    %360 = vst.msk [vmem:[#allocation2 + $0x1b0] sm:$0xff] %vm305, %v231
    %361 = vst.msk [vmem:[#allocation2 + $0x1b8] sm:$0xff] %vm305, %v232
    %362 = vst.msk [vmem:[#allocation2 + $0x1c0] sm:$0xff] %vm305, %v233
    %363 = vst.msk [vmem:[#allocation2 + $0x1c8] sm:$0xff] %vm305, %v234
    %364 = vst.msk [vmem:[#allocation2 + $0x1d0] sm:$0xff] %vm305, %v235
    %365 = vst.msk [vmem:[#allocation2 + $0x1d8] sm:$0xff] %vm305, %v236
    %366 = vst.msk [vmem:[#allocation2 + $0x1e0] sm:$0xff] %vm305, %v237
    %367 = vst.msk [vmem:[#allocation2 + $0x1e8] sm:$0xff] %vm305, %v238
    %368 = vst.msk [vmem:[#allocation2 + $0x1f0] sm:$0xff] %vm305, %v239
    %369 = vst.msk [vmem:[#allocation2 + $0x1f8] sm:$0xff] %vm305, %v240
    %370 = vst.msk [vmem:[#allocation2 + $0x200] sm:$0xff] %vm305, %v241
    %371 = vst.msk [vmem:[#allocation2 + $0x208] sm:$0xff] %vm305, %v242
    %372 = vst.msk [vmem:[#allocation2 + $0x210] sm:$0xff] %vm305, %v243
    %373 = vst.msk [vmem:[#allocation2 + $0x218] sm:$0xff] %vm305, %v244
    %374 = vst.msk [vmem:[#allocation2 + $0x220] sm:$0xff] %vm305, %v245
    %375 = vst.msk [vmem:[#allocation2 + $0x228] sm:$0xff] %vm305, %v246
    %376 = vst.msk [vmem:[#allocation2 + $0x230] sm:$0xff] %vm305, %v247
    %377 = vst.msk [vmem:[#allocation2 + $0x238] sm:$0xff] %vm305, %v248
    %378 = vst.msk [vmem:[#allocation2 + $0x240] sm:$0xff] %vm305, %v249
    %379 = vst.msk [vmem:[#allocation2 + $0x248] sm:$0xff] %vm305, %v250
    %380 = vst.msk [vmem:[#allocation2 + $0x250] sm:$0xff] %vm305, %v251
    %381 = vst.msk [vmem:[#allocation2 + $0x258] sm:$0xff] %vm305, %v252
    %382 = vst.msk [vmem:[#allocation2 + $0x260] sm:$0xff] %vm305, %v253
    %383 = vst.msk [vmem:[#allocation2 + $0x268] sm:$0xff] %vm305, %v254
    %384 = vst.msk [vmem:[#allocation2 + $0x270] sm:$0xff] %vm305, %v255
    %385 = vst.msk [vmem:[#allocation2 + $0x278] sm:$0xff] %vm305, %v256
    %386 = vst.msk [vmem:[#allocation2 + $0x280] sm:$0xff] %vm305, %v257
    %387 = vst.msk [vmem:[#allocation2 + $0x288] sm:$0xff] %vm305, %v258
    %388 = vst.msk [vmem:[#allocation2 + $0x290] sm:$0xff] %vm305, %v259
    %389 = vst.msk [vmem:[#allocation2 + $0x298] sm:$0xff] %vm305, %v260
    %390 = vst.msk [vmem:[#allocation2 + $0x2a0] sm:$0xff] %vm305, %v261
    %391 = vst.msk [vmem:[#allocation2 + $0x2a8] sm:$0xff] %vm305, %v262
    %392 = vst.msk [vmem:[#allocation2 + $0x2b0] sm:$0xff] %vm305, %v263
    %393 = vst.msk [vmem:[#allocation2 + $0x2b8] sm:$0xff] %vm305, %v264
    %394 = vst.msk [vmem:[#allocation2 + $0x2c0] sm:$0xff] %vm305, %v265
    %395 = vst.msk [vmem:[#allocation2 + $0x2c8] sm:$0xff] %vm305, %v266
    %396 = vst.msk [vmem:[#allocation2 + $0x2d0] sm:$0xff] %vm305, %v267
    %397 = vst.msk [vmem:[#allocation2 + $0x2d8] sm:$0xff] %vm305, %v268
    %398 = vst.msk [vmem:[#allocation2 + $0x2e0] sm:$0xff] %vm305, %v269
    %399 = vst.msk [vmem:[#allocation2 + $0x2e8] sm:$0xff] %vm305, %v270
    %400 = vst.msk [vmem:[#allocation2 + $0x2f0] sm:$0xff] %vm305, %v271
    %401 = vst.msk [vmem:[#allocation2 + $0x2f8] sm:$0xff] %vm305, %v272
    %402 = vst.msk [vmem:[#allocation2 + $0x300] sm:$0xff] %vm305, %v273
    %403 = vst.msk [vmem:[#allocation2 + $0x308] sm:$0xff] %vm305, %v274
    %404 = vst.msk [vmem:[#allocation2 + $0x310] sm:$0xff] %vm305, %v275
    %405 = vst.msk [vmem:[#allocation2 + $0x318] sm:$0xff] %vm305, %v276
    %406 = vst.msk [vmem:[#allocation2 + $0x320] sm:$0xff] %vm305, %v277
    %407 = vst.msk [vmem:[#allocation2 + $0x328] sm:$0xff] %vm305, %v278
    %408 = vst.msk [vmem:[#allocation2 + $0x330] sm:$0xff] %vm305, %v279
    %409 = vst.msk [vmem:[#allocation2 + $0x338] sm:$0xff] %vm305, %v280
    %410 = vst.msk [vmem:[#allocation2 + $0x340] sm:$0xff] %vm305, %v281
    %411 = vst.msk [vmem:[#allocation2 + $0x348] sm:$0xff] %vm305, %v282
    %412 = vst.msk [vmem:[#allocation2 + $0x350] sm:$0xff] %vm305, %v283
    %413 = vst.msk [vmem:[#allocation2 + $0x358] sm:$0xff] %vm305, %v284
    %414 = vst.msk [vmem:[#allocation2 + $0x360] sm:$0xff] %vm305, %v285
    %415 = vst.msk [vmem:[#allocation2 + $0x368] sm:$0xff] %vm305, %v286
    %416 = vst.msk [vmem:[#allocation2 + $0x370] sm:$0xff] %vm305, %v287
    %417 = vst.msk [vmem:[#allocation2 + $0x378] sm:$0xff] %vm305, %v288
    %418 = vst.msk [vmem:[#allocation2 + $0x380] sm:$0xff] %vm305, %v289
    %419 = vst.msk [vmem:[#allocation2 + $0x388] sm:$0xff] %vm305, %v290
    %420 = vst.msk [vmem:[#allocation2 + $0x390] sm:$0xff] %vm305, %v291
    %421 = vst.msk [vmem:[#allocation2 + $0x398] sm:$0xff] %vm305, %v292
    %422 = vst.msk [vmem:[#allocation2 + $0x3a0] sm:$0xff] %vm305, %v293
    %423 = vst.msk [vmem:[#allocation2 + $0x3a8] sm:$0xff] %vm305, %v294
    %424 = vst.msk [vmem:[#allocation2 + $0x3b0] sm:$0xff] %vm305, %v295
    %425 = vst.msk [vmem:[#allocation2 + $0x3b8] sm:$0xff] %vm305, %v296
    %426 = vst.msk [vmem:[#allocation2 + $0x3c0] sm:$0xff] %vm305, %v297
    %427 = vst.msk [vmem:[#allocation2 + $0x3c8] sm:$0xff] %vm305, %v298
    %428 = vst.msk [vmem:[#allocation2 + $0x3d0] sm:$0xff] %vm305, %v299
    %429 = vst.msk [vmem:[#allocation2 + $0x3d8] sm:$0xff] %vm305, %v300
    %430 = vst.msk [vmem:[#allocation2 + $0x3e0] sm:$0xff] %vm305, %v301
    %431 = vst.msk [vmem:[#allocation2 + $0x3e8] sm:$0xff] %vm305, %v302
    %432 = vst.msk [vmem:[#allocation2 + $0x3f0] sm:$0xff] %vm305, %v303
    %433 = vst.msk [vmem:[#allocation2 + $0x3f8] sm:$0xff] %vm305, %v304
    %v434 = vld [vmem:[#allocation2] sm:$0xff]
    %v435 = vld [vmem:[#allocation2 + $0x8] sm:$0xff]
    %v436 = vld [vmem:[#allocation2 + $0x10] sm:$0xff]
    %v437 = vld [vmem:[#allocation2 + $0x18] sm:$0xff]
    %v438 = vld [vmem:[#allocation2 + $0x20] sm:$0xff]
    %v439 = vld [vmem:[#allocation2 + $0x28] sm:$0xff]
    %v440 = vld [vmem:[#allocation2 + $0x30] sm:$0xff]
    %v441 = vld [vmem:[#allocation2 + $0x38] sm:$0xff]
    %v442 = vld [vmem:[#allocation2 + $0x40] sm:$0xff]
    %v443 = vld [vmem:[#allocation2 + $0x48] sm:$0xff]
    %v444 = vld [vmem:[#allocation2 + $0x50] sm:$0xff]
    %v445 = vld [vmem:[#allocation2 + $0x58] sm:$0xff]
    %v446 = vld [vmem:[#allocation2 + $0x60] sm:$0xff]
    %v447 = vld [vmem:[#allocation2 + $0x68] sm:$0xff]
    %v448 = vld [vmem:[#allocation2 + $0x70] sm:$0xff]
    %v449 = vld [vmem:[#allocation2 + $0x78] sm:$0xff]
    %v450 = vld [vmem:[#allocation2 + $0x80] sm:$0xff]
    %v451 = vld [vmem:[#allocation2 + $0x88] sm:$0xff]
    %v452 = vld [vmem:[#allocation2 + $0x90] sm:$0xff]
    %v453 = vld [vmem:[#allocation2 + $0x98] sm:$0xff]
    %v454 = vld [vmem:[#allocation2 + $0xa0] sm:$0xff]
    %v455 = vld [vmem:[#allocation2 + $0xa8] sm:$0xff]
    %v456 = vld [vmem:[#allocation2 + $0xb0] sm:$0xff]
    %v457 = vld [vmem:[#allocation2 + $0xb8] sm:$0xff]
    %v458 = vld [vmem:[#allocation2 + $0xc0] sm:$0xff]
    %v459 = vld [vmem:[#allocation2 + $0xc8] sm:$0xff]
    %v460 = vld [vmem:[#allocation2 + $0xd0] sm:$0xff]
    %v461 = vld [vmem:[#allocation2 + $0xd8] sm:$0xff]
    %v462 = vld [vmem:[#allocation2 + $0xe0] sm:$0xff]
    %v463 = vld [vmem:[#allocation2 + $0xe8] sm:$0xff]
    %v464 = vld [vmem:[#allocation2 + $0xf0] sm:$0xff]
    %v465 = vld [vmem:[#allocation2 + $0xf8] sm:$0xff]
    %v466 = vld [vmem:[#allocation2 + $0x100] sm:$0xff]
    %v467 = vld [vmem:[#allocation2 + $0x108] sm:$0xff]
    %v468 = vld [vmem:[#allocation2 + $0x110] sm:$0xff]
    %v469 = vld [vmem:[#allocation2 + $0x118] sm:$0xff]
    %v470 = vld [vmem:[#allocation2 + $0x120] sm:$0xff]
    %v471 = vld [vmem:[#allocation2 + $0x128] sm:$0xff]
    %v472 = vld [vmem:[#allocation2 + $0x130] sm:$0xff]
    %v473 = vld [vmem:[#allocation2 + $0x138] sm:$0xff]
    %v474 = vld [vmem:[#allocation2 + $0x140] sm:$0xff]
    %v475 = vld [vmem:[#allocation2 + $0x148] sm:$0xff]
    %v476 = vld [vmem:[#allocation2 + $0x150] sm:$0xff]
    %v477 = vld [vmem:[#allocation2 + $0x158] sm:$0xff]
    %v478 = vld [vmem:[#allocation2 + $0x160] sm:$0xff]
    %v479 = vld [vmem:[#allocation2 + $0x168] sm:$0xff]
    %v480 = vld [vmem:[#allocation2 + $0x170] sm:$0xff]
    %v481 = vld [vmem:[#allocation2 + $0x178] sm:$0xff]
    %v482 = vld [vmem:[#allocation2 + $0x180] sm:$0xff]
    %v483 = vld [vmem:[#allocation2 + $0x188] sm:$0xff]
    %v484 = vld [vmem:[#allocation2 + $0x190] sm:$0xff]
    %v485 = vld [vmem:[#allocation2 + $0x198] sm:$0xff]
    %v486 = vld [vmem:[#allocation2 + $0x1a0] sm:$0xff]
    %v487 = vld [vmem:[#allocation2 + $0x1a8] sm:$0xff]
    %v488 = vld [vmem:[#allocation2 + $0x1b0] sm:$0xff]
    %v489 = vld [vmem:[#allocation2 + $0x1b8] sm:$0xff]
    %v490 = vld [vmem:[#allocation2 + $0x1c0] sm:$0xff]
    %v491 = vld [vmem:[#allocation2 + $0x1c8] sm:$0xff]
    %v492 = vld [vmem:[#allocation2 + $0x1d0] sm:$0xff]
    %v493 = vld [vmem:[#allocation2 + $0x1d8] sm:$0xff]
    %v494 = vld [vmem:[#allocation2 + $0x1e0] sm:$0xff]
    %v495 = vld [vmem:[#allocation2 + $0x1e8] sm:$0xff]
    %v496 = vld [vmem:[#allocation2 + $0x1f0] sm:$0xff]
    %v497 = vld [vmem:[#allocation2 + $0x1f8] sm:$0xff]
    %v498 = vld [vmem:[#allocation2 + $0x200] sm:$0xff]
    %v499 = vld [vmem:[#allocation2 + $0x208] sm:$0xff]
    %v500 = vld [vmem:[#allocation2 + $0x210] sm:$0xff]
    %v501 = vld [vmem:[#allocation2 + $0x218] sm:$0xff]
    %v502 = vld [vmem:[#allocation2 + $0x220] sm:$0xff]
    %v503 = vld [vmem:[#allocation2 + $0x228] sm:$0xff]
    %v504 = vld [vmem:[#allocation2 + $0x230] sm:$0xff]
    %v505 = vld [vmem:[#allocation2 + $0x238] sm:$0xff]
    %v506 = vld [vmem:[#allocation2 + $0x240] sm:$0xff]
    %v507 = vld [vmem:[#allocation2 + $0x248] sm:$0xff]
    %v508 = vld [vmem:[#allocation2 + $0x250] sm:$0xff]
    %v509 = vld [vmem:[#allocation2 + $0x258] sm:$0xff]
    %v510 = vld [vmem:[#allocation2 + $0x260] sm:$0xff]
    %v511 = vld [vmem:[#allocation2 + $0x268] sm:$0xff]
    %v512 = vld [vmem:[#allocation2 + $0x270] sm:$0xff]
    %v513 = vld [vmem:[#allocation2 + $0x278] sm:$0xff]
    %v514 = vld [vmem:[#allocation2 + $0x280] sm:$0xff]
    %v515 = vld [vmem:[#allocation2 + $0x288] sm:$0xff]
    %v516 = vld [vmem:[#allocation2 + $0x290] sm:$0xff]
    %v517 = vld [vmem:[#allocation2 + $0x298] sm:$0xff]
    %v518 = vld [vmem:[#allocation2 + $0x2a0] sm:$0xff]
    %v519 = vld [vmem:[#allocation2 + $0x2a8] sm:$0xff]
    %v520 = vld [vmem:[#allocation2 + $0x2b0] sm:$0xff]
    %v521 = vld [vmem:[#allocation2 + $0x2b8] sm:$0xff]
    %v522 = vld [vmem:[#allocation2 + $0x2c0] sm:$0xff]
    %v523 = vld [vmem:[#allocation2 + $0x2c8] sm:$0xff]
    %v524 = vld [vmem:[#allocation2 + $0x2d0] sm:$0xff]
    %v525 = vld [vmem:[#allocation2 + $0x2d8] sm:$0xff]
    %v526 = vld [vmem:[#allocation2 + $0x2e0] sm:$0xff]
    %v527 = vld [vmem:[#allocation2 + $0x2e8] sm:$0xff]
    %v528 = vld [vmem:[#allocation2 + $0x2f0] sm:$0xff]
    %v529 = vld [vmem:[#allocation2 + $0x2f8] sm:$0xff]
    %v530 = vld [vmem:[#allocation2 + $0x300] sm:$0xff]
    %v531 = vld [vmem:[#allocation2 + $0x308] sm:$0xff]
    %v532 = vld [vmem:[#allocation2 + $0x310] sm:$0xff]
    %v533 = vld [vmem:[#allocation2 + $0x318] sm:$0xff]
    %v534 = vld [vmem:[#allocation2 + $0x320] sm:$0xff]
    %v535 = vld [vmem:[#allocation2 + $0x328] sm:$0xff]
    %v536 = vld [vmem:[#allocation2 + $0x330] sm:$0xff]
    %v537 = vld [vmem:[#allocation2 + $0x338] sm:$0xff]
    %v538 = vld [vmem:[#allocation2 + $0x340] sm:$0xff]
    %v539 = vld [vmem:[#allocation2 + $0x348] sm:$0xff]
    %v540 = vld [vmem:[#allocation2 + $0x350] sm:$0xff]
    %v541 = vld [vmem:[#allocation2 + $0x358] sm:$0xff]
    %v542 = vld [vmem:[#allocation2 + $0x360] sm:$0xff]
    %v543 = vld [vmem:[#allocation2 + $0x368] sm:$0xff]
    %v544 = vld [vmem:[#allocation2 + $0x370] sm:$0xff]
    %v545 = vld [vmem:[#allocation2 + $0x378] sm:$0xff]
    %v546 = vld [vmem:[#allocation2 + $0x380] sm:$0xff]
    %v547 = vld [vmem:[#allocation2 + $0x388] sm:$0xff]
    %v548 = vld [vmem:[#allocation2 + $0x390] sm:$0xff]
    %v549 = vld [vmem:[#allocation2 + $0x398] sm:$0xff]
    %v550 = vld [vmem:[#allocation2 + $0x3a0] sm:$0xff]
    %v551 = vld [vmem:[#allocation2 + $0x3a8] sm:$0xff]
    %v552 = vld [vmem:[#allocation2 + $0x3b0] sm:$0xff]
    %v553 = vld [vmem:[#allocation2 + $0x3b8] sm:$0xff]
    %v554 = vld [vmem:[#allocation2 + $0x3c0] sm:$0xff]
    %v555 = vld [vmem:[#allocation2 + $0x3c8] sm:$0xff]
    %v556 = vld [vmem:[#allocation2 + $0x3d0] sm:$0xff]
    %v557 = vld [vmem:[#allocation2 + $0x3d8] sm:$0xff]
    %v558 = vld [vmem:[#allocation2 + $0x3e0] sm:$0xff]
    %v559 = vld [vmem:[#allocation2 + $0x3e8] sm:$0xff]
    %v560 = vld [vmem:[#allocation2 + $0x3f0] sm:$0xff]
    %v561 = vld [vmem:[#allocation2 + $0x3f8] sm:$0xff]
    %v562 = vld [vmem:[%s2] sm:$0x7]
    %v564 = vsel %vm305, %v562, 0
    %v567 = vsel %vm305, %v434, 0
    %v570 = vsel %vm305, %v435, 0
    %v573 = vsel %vm305, %v436, 0
    %v576 = vsel %vm305, %v437, 0
    %v579 = vsel %vm305, %v438, 0
    %v582 = vsel %vm305, %v439, 0
    %v585 = vsel %vm305, %v440, 0
    %v588 = vsel %vm305, %v441, 0
    %v591 = vsel %vm305, %v442, 0
    %v594 = vsel %vm305, %v443, 0
    %v597 = vsel %vm305, %v444, 0
    %v600 = vsel %vm305, %v445, 0
    %v603 = vsel %vm305, %v446, 0
    %v606 = vsel %vm305, %v447, 0
    %v609 = vsel %vm305, %v448, 0
    %v612 = vsel %vm305, %v449, 0
    %614 = vmatpush.xpose.msra.mxu0 %v612
    %615 = vmatpush.xpose.msra.mxu0 %v609
    %616 = vmatpush.xpose.msra.mxu0 %v606
    %617 = vmatpush.xpose.msra.mxu0 %v603
    %618 = vmatpush.xpose.msra.mxu0 %v600
    %619 = vmatpush.xpose.msra.mxu0 %v597
    %620 = vmatpush.xpose.msra.mxu0 %v594
    %621 = vmatpush.xpose.msra.mxu0 %v591
    %622 = vmatpush.xpose.msra.mxu0 %v588
    %623 = vmatpush.xpose.msra.mxu0 %v585
    %624 = vmatpush.xpose.msra.mxu0 %v582
    %625 = vmatpush.xpose.msra.mxu0 %v579
    %626 = vmatpush.xpose.msra.mxu0 %v576
    %627 = vmatpush.xpose.msra.mxu0 %v573
    %628 = vmatpush.xpose.msra.mxu0 %v570
    %629 = vmatpush.xpose.msra.mxu0 %v567
    %630 = vmatmul.f32.gmra.mxu0 %v564
    %v631 = vpop.f32.mrf.mxu0
    %v632 = vadd.f32 0.0, %v631
    %633 = vdwg.mxu0
    %v635 = vsel %vm305, %v450, 0
    %v638 = vsel %vm305, %v451, 0
    %v641 = vsel %vm305, %v452, 0
    %v644 = vsel %vm305, %v453, 0
    %v647 = vsel %vm305, %v454, 0
    %v650 = vsel %vm305, %v455, 0
    %v653 = vsel %vm305, %v456, 0
    %v656 = vsel %vm305, %v457, 0
    %v659 = vsel %vm305, %v458, 0
    %v662 = vsel %vm305, %v459, 0
    %v665 = vsel %vm305, %v460, 0
    %v668 = vsel %vm305, %v461, 0
    %v671 = vsel %vm305, %v462, 0
    %v674 = vsel %vm305, %v463, 0
    %v677 = vsel %vm305, %v464, 0
    %v680 = vsel %vm305, %v465, 0
    %682 = vmatpush.xpose.msra.mxu0 %v680
    %683 = vmatpush.xpose.msra.mxu0 %v677
    %684 = vmatpush.xpose.msra.mxu0 %v674
    %685 = vmatpush.xpose.msra.mxu0 %v671
    %686 = vmatpush.xpose.msra.mxu0 %v668
    %687 = vmatpush.xpose.msra.mxu0 %v665
    %688 = vmatpush.xpose.msra.mxu0 %v662
    %689 = vmatpush.xpose.msra.mxu0 %v659
    %690 = vmatpush.xpose.msra.mxu0 %v656
    %691 = vmatpush.xpose.msra.mxu0 %v653
    %692 = vmatpush.xpose.msra.mxu0 %v650
    %693 = vmatpush.xpose.msra.mxu0 %v647
    %694 = vmatpush.xpose.msra.mxu0 %v644
    %695 = vmatpush.xpose.msra.mxu0 %v641
    %696 = vmatpush.xpose.msra.mxu0 %v638
    %697 = vmatpush.xpose.msra.mxu0 %v635
    %698 = vmatmul.f32.gmra.mxu0 %v564
    %v699 = vpop.f32.mrf.mxu0
    %v700 = vadd.f32 0.0, %v699
    %701 = vdwg.mxu0
    %v703 = vsel %vm305, %v466, 0
    %v706 = vsel %vm305, %v467, 0
    %v709 = vsel %vm305, %v468, 0
    %v712 = vsel %vm305, %v469, 0
    %v715 = vsel %vm305, %v470, 0
    %v718 = vsel %vm305, %v471, 0
    %v721 = vsel %vm305, %v472, 0
    %v724 = vsel %vm305, %v473, 0
    %v727 = vsel %vm305, %v474, 0
    %v730 = vsel %vm305, %v475, 0
    %v733 = vsel %vm305, %v476, 0
    %v736 = vsel %vm305, %v477, 0
    %v739 = vsel %vm305, %v478, 0
    %v742 = vsel %vm305, %v479, 0
    %v745 = vsel %vm305, %v480, 0
    %v748 = vsel %vm305, %v481, 0
    %750 = vmatpush.xpose.msra.mxu0 %v748
    %751 = vmatpush.xpose.msra.mxu0 %v745
    %752 = vmatpush.xpose.msra.mxu0 %v742
    %753 = vmatpush.xpose.msra.mxu0 %v739
    %754 = vmatpush.xpose.msra.mxu0 %v736
    %755 = vmatpush.xpose.msra.mxu0 %v733
    %756 = vmatpush.xpose.msra.mxu0 %v730
    %757 = vmatpush.xpose.msra.mxu0 %v727
    %758 = vmatpush.xpose.msra.mxu0 %v724
    %759 = vmatpush.xpose.msra.mxu0 %v721
    %760 = vmatpush.xpose.msra.mxu0 %v718
    %761 = vmatpush.xpose.msra.mxu0 %v715
    %762 = vmatpush.xpose.msra.mxu0 %v712
    %763 = vmatpush.xpose.msra.mxu0 %v709
    %764 = vmatpush.xpose.msra.mxu0 %v706
    %765 = vmatpush.xpose.msra.mxu0 %v703
    %766 = vmatmul.f32.gmra.mxu0 %v564
    %v767 = vpop.f32.mrf.mxu0
    %v768 = vadd.f32 0.0, %v767
    %769 = vdwg.mxu0
    %v771 = vsel %vm305, %v482, 0
    %v774 = vsel %vm305, %v483, 0
    %v777 = vsel %vm305, %v484, 0
    %v780 = vsel %vm305, %v485, 0
    %v783 = vsel %vm305, %v486, 0
    %v786 = vsel %vm305, %v487, 0
    %v789 = vsel %vm305, %v488, 0
    %v792 = vsel %vm305, %v489, 0
    %v795 = vsel %vm305, %v490, 0
    %v798 = vsel %vm305, %v491, 0
    %v801 = vsel %vm305, %v492, 0
    %v804 = vsel %vm305, %v493, 0
    %v807 = vsel %vm305, %v494, 0
    %v810 = vsel %vm305, %v495, 0
    %v813 = vsel %vm305, %v496, 0
    %v816 = vsel %vm305, %v497, 0
    %818 = vmatpush.xpose.msra.mxu0 %v816
    %819 = vmatpush.xpose.msra.mxu0 %v813
    %820 = vmatpush.xpose.msra.mxu0 %v810
    %821 = vmatpush.xpose.msra.mxu0 %v807
    %822 = vmatpush.xpose.msra.mxu0 %v804
    %823 = vmatpush.xpose.msra.mxu0 %v801
    %824 = vmatpush.xpose.msra.mxu0 %v798
    %825 = vmatpush.xpose.msra.mxu0 %v795
    %826 = vmatpush.xpose.msra.mxu0 %v792
    %827 = vmatpush.xpose.msra.mxu0 %v789
    %828 = vmatpush.xpose.msra.mxu0 %v786
    %829 = vmatpush.xpose.msra.mxu0 %v783
    %830 = vmatpush.xpose.msra.mxu0 %v780
    %831 = vmatpush.xpose.msra.mxu0 %v777
    %832 = vmatpush.xpose.msra.mxu0 %v774
    %833 = vmatpush.xpose.msra.mxu0 %v771
    %834 = vmatmul.f32.gmra.mxu0 %v564
    %v835 = vpop.f32.mrf.mxu0
    %v836 = vadd.f32 0.0, %v835
    %837 = vdwg.mxu0
    %v839 = vsel %vm305, %v498, 0
    %v842 = vsel %vm305, %v499, 0
    %v845 = vsel %vm305, %v500, 0
    %v848 = vsel %vm305, %v501, 0
    %v851 = vsel %vm305, %v502, 0
    %v854 = vsel %vm305, %v503, 0
    %v857 = vsel %vm305, %v504, 0
    %v860 = vsel %vm305, %v505, 0
    %v863 = vsel %vm305, %v506, 0
    %v866 = vsel %vm305, %v507, 0
    %v869 = vsel %vm305, %v508, 0
    %v872 = vsel %vm305, %v509, 0
    %v875 = vsel %vm305, %v510, 0
    %v878 = vsel %vm305, %v511, 0
    %v881 = vsel %vm305, %v512, 0
    %v884 = vsel %vm305, %v513, 0
    %886 = vmatpush.xpose.msra.mxu0 %v884
    %887 = vmatpush.xpose.msra.mxu0 %v881
    %888 = vmatpush.xpose.msra.mxu0 %v878
    %889 = vmatpush.xpose.msra.mxu0 %v875
    %890 = vmatpush.xpose.msra.mxu0 %v872
    %891 = vmatpush.xpose.msra.mxu0 %v869
    %892 = vmatpush.xpose.msra.mxu0 %v866
    %893 = vmatpush.xpose.msra.mxu0 %v863
    %894 = vmatpush.xpose.msra.mxu0 %v860
    %895 = vmatpush.xpose.msra.mxu0 %v857
    %896 = vmatpush.xpose.msra.mxu0 %v854
    %897 = vmatpush.xpose.msra.mxu0 %v851
    %898 = vmatpush.xpose.msra.mxu0 %v848
    %899 = vmatpush.xpose.msra.mxu0 %v845
    %900 = vmatpush.xpose.msra.mxu0 %v842
    %901 = vmatpush.xpose.msra.mxu0 %v839
    %902 = vmatmul.f32.gmra.mxu0 %v564
    %v903 = vpop.f32.mrf.mxu0
    %v904 = vadd.f32 0.0, %v903
    %905 = vdwg.mxu0
    %v907 = vsel %vm305, %v514, 0
    %v910 = vsel %vm305, %v515, 0
    %v913 = vsel %vm305, %v516, 0
    %v916 = vsel %vm305, %v517, 0
    %v919 = vsel %vm305, %v518, 0
    %v922 = vsel %vm305, %v519, 0
    %v925 = vsel %vm305, %v520, 0
    %v928 = vsel %vm305, %v521, 0
    %v931 = vsel %vm305, %v522, 0
    %v934 = vsel %vm305, %v523, 0
    %v937 = vsel %vm305, %v524, 0
    %v940 = vsel %vm305, %v525, 0
    %v943 = vsel %vm305, %v526, 0
    %v946 = vsel %vm305, %v527, 0
    %v949 = vsel %vm305, %v528, 0
    %v952 = vsel %vm305, %v529, 0
    %954 = vmatpush.xpose.msra.mxu0 %v952
    %955 = vmatpush.xpose.msra.mxu0 %v949
    %956 = vmatpush.xpose.msra.mxu0 %v946
    %957 = vmatpush.xpose.msra.mxu0 %v943
    %958 = vmatpush.xpose.msra.mxu0 %v940
    %959 = vmatpush.xpose.msra.mxu0 %v937
    %960 = vmatpush.xpose.msra.mxu0 %v934
    %961 = vmatpush.xpose.msra.mxu0 %v931
    %962 = vmatpush.xpose.msra.mxu0 %v928
    %963 = vmatpush.xpose.msra.mxu0 %v925
    %964 = vmatpush.xpose.msra.mxu0 %v922
    %965 = vmatpush.xpose.msra.mxu0 %v919
    %966 = vmatpush.xpose.msra.mxu0 %v916
    %967 = vmatpush.xpose.msra.mxu0 %v913
    %968 = vmatpush.xpose.msra.mxu0 %v910
    %969 = vmatpush.xpose.msra.mxu0 %v907
    %970 = vmatmul.f32.gmra.mxu0 %v564
    %v971 = vpop.f32.mrf.mxu0
    %v972 = vadd.f32 0.0, %v971
    %973 = vdwg.mxu0
    %v975 = vsel %vm305, %v530, 0
    %v978 = vsel %vm305, %v531, 0
    %v981 = vsel %vm305, %v532, 0
    %v984 = vsel %vm305, %v533, 0
    %v987 = vsel %vm305, %v534, 0
    %v990 = vsel %vm305, %v535, 0
    %v993 = vsel %vm305, %v536, 0
    %v996 = vsel %vm305, %v537, 0
    %v999 = vsel %vm305, %v538, 0
    %v1002 = vsel %vm305, %v539, 0
    %v1005 = vsel %vm305, %v540, 0
    %v1008 = vsel %vm305, %v541, 0
    %v1011 = vsel %vm305, %v542, 0
    %v1014 = vsel %vm305, %v543, 0
    %v1017 = vsel %vm305, %v544, 0
    %v1020 = vsel %vm305, %v545, 0
    %1022 = vmatpush.xpose.msra.mxu0 %v1020
    %1023 = vmatpush.xpose.msra.mxu0 %v1017
    %1024 = vmatpush.xpose.msra.mxu0 %v1014
    %1025 = vmatpush.xpose.msra.mxu0 %v1011
    %1026 = vmatpush.xpose.msra.mxu0 %v1008
    %1027 = vmatpush.xpose.msra.mxu0 %v1005
    %1028 = vmatpush.xpose.msra.mxu0 %v1002
    %1029 = vmatpush.xpose.msra.mxu0 %v999
    %1030 = vmatpush.xpose.msra.mxu0 %v996
    %1031 = vmatpush.xpose.msra.mxu0 %v993
    %1032 = vmatpush.xpose.msra.mxu0 %v990
    %1033 = vmatpush.xpose.msra.mxu0 %v987
    %1034 = vmatpush.xpose.msra.mxu0 %v984
    %1035 = vmatpush.xpose.msra.mxu0 %v981
    %1036 = vmatpush.xpose.msra.mxu0 %v978
    %1037 = vmatpush.xpose.msra.mxu0 %v975
    %1038 = vmatmul.f32.gmra.mxu0 %v564
    %v1039 = vpop.f32.mrf.mxu0
    %v1040 = vadd.f32 0.0, %v1039
    %1041 = vdwg.mxu0
    %v1043 = vsel %vm305, %v546, 0
    %v1046 = vsel %vm305, %v547, 0
    %v1049 = vsel %vm305, %v548, 0
    %v1052 = vsel %vm305, %v549, 0
    %v1055 = vsel %vm305, %v550, 0
    %v1058 = vsel %vm305, %v551, 0
    %v1061 = vsel %vm305, %v552, 0
    %v1064 = vsel %vm305, %v553, 0
    %v1067 = vsel %vm305, %v554, 0
    %v1070 = vsel %vm305, %v555, 0
    %v1073 = vsel %vm305, %v556, 0
    %v1076 = vsel %vm305, %v557, 0
    %v1079 = vsel %vm305, %v558, 0
    %v1082 = vsel %vm305, %v559, 0
    %v1085 = vsel %vm305, %v560, 0
    %v1088 = vsel %vm305, %v561, 0
    %1090 = vmatpush.xpose.msra.mxu0 %v1088
    %1091 = vmatpush.xpose.msra.mxu0 %v1085
    %1092 = vmatpush.xpose.msra.mxu0 %v1082
    %1093 = vmatpush.xpose.msra.mxu0 %v1079
    %1094 = vmatpush.xpose.msra.mxu0 %v1076
    %1095 = vmatpush.xpose.msra.mxu0 %v1073
    %1096 = vmatpush.xpose.msra.mxu0 %v1070
    %1097 = vmatpush.xpose.msra.mxu0 %v1067
    %1098 = vmatpush.xpose.msra.mxu0 %v1064
    %1099 = vmatpush.xpose.msra.mxu0 %v1061
    %1100 = vmatpush.xpose.msra.mxu0 %v1058
    %1101 = vmatpush.xpose.msra.mxu0 %v1055
    %1102 = vmatpush.xpose.msra.mxu0 %v1052
    %1103 = vmatpush.xpose.msra.mxu0 %v1049
    %1104 = vmatpush.xpose.msra.mxu0 %v1046
    %1105 = vmatpush.xpose.msra.mxu0 %v1043
    %1106 = vmatmul.f32.gmra.mxu0 %v564
    %v1107 = vpop.f32.mrf.mxu0
    %v1108 = vadd.f32 0.0, %v1107
    %1109 = vdwg.mxu0
    %vm1110 = vcmask 1042432
    %v1111 = vsel %vm1110, %v632, -inf
    %1112 = vmax.xlane.f32.xlu0 %v1111
    %v1113 = vpop.xlane.xlu0 %1112
    %v1114 = vsel %vm1110, %v700, -inf
    %1115 = vmax.xlane.f32.xlu0 %v1114
    %v1116 = vpop.xlane.xlu0 %1115
    %v1117 = vsel %vm1110, %v768, -inf
    %1118 = vmax.xlane.f32.xlu0 %v1117
    %v1119 = vpop.xlane.xlu0 %1118
    %v1120 = vsel %vm1110, %v836, -inf
    %1121 = vmax.xlane.f32.xlu0 %v1120
    %v1122 = vpop.xlane.xlu0 %1121
    %v1123 = vsel %vm1110, %v904, -inf
    %1124 = vmax.xlane.f32.xlu0 %v1123
    %v1125 = vpop.xlane.xlu0 %1124
    %v1126 = vsel %vm1110, %v972, -inf
    %1127 = vmax.xlane.f32.xlu0 %v1126
    %v1128 = vpop.xlane.xlu0 %1127
    %v1129 = vsel %vm1110, %v1040, -inf
    %1130 = vmax.xlane.f32.xlu0 %v1129
    %v1131 = vpop.xlane.xlu0 %1130
    %v1132 = vsel %vm1110, %v1108, -inf
    %1133 = vmax.xlane.f32.xlu0 %v1132
    %v1134 = vpop.xlane.xlu0 %1133
    %v1135 = vsub.f32 %v632, %v1113
    %v1136 = vsub.f32 %v700, %v1116
    %v1137 = vsub.f32 %v768, %v1119
    %v1138 = vsub.f32 %v836, %v1122
    %v1139 = vsub.f32 %v904, %v1125
    %v1140 = vsub.f32 %v972, %v1128
    %v1141 = vsub.f32 %v1040, %v1131
    %v1142 = vsub.f32 %v1108, %v1134
    %v1143 = vmul.f32 %v1135, 1.442695
    %v1144 = vpow.pop %v1143
    %v1145 = vmul.f32 %v1136, 1.442695
    %v1146 = vpow.pop %v1145
    %v1147 = vmul.f32 %v1137, 1.442695
    %v1148 = vpow.pop %v1147
    %v1149 = vmul.f32 %v1138, 1.442695
    %v1150 = vpow.pop %v1149
    %v1151 = vmul.f32 %v1139, 1.442695
    %v1152 = vpow.pop %v1151
    %v1153 = vmul.f32 %v1140, 1.442695
    %v1154 = vpow.pop %v1153
    %v1155 = vmul.f32 %v1141, 1.442695
    %v1156 = vpow.pop %v1155
    %v1157 = vmul.f32 %v1142, 1.442695
    %v1158 = vpow.pop %v1157
    %v1159 = vsel %vm1110, %v1144, 0.0
    %1160 = vadd.xlane.f32.xlu0 %v1159
    %v1161 = vpop.xlane.xlu0 %1160
    %v1162 = vsel %vm1110, %v1146, 0.0
    %1163 = vadd.xlane.f32.xlu0 %v1162
    %v1164 = vpop.xlane.xlu0 %1163
    %v1165 = vsel %vm1110, %v1148, 0.0
    %1166 = vadd.xlane.f32.xlu0 %v1165
    %v1167 = vpop.xlane.xlu0 %1166
    %v1168 = vsel %vm1110, %v1150, 0.0
    %1169 = vadd.xlane.f32.xlu0 %v1168
    %v1170 = vpop.xlane.xlu0 %1169
    %v1171 = vsel %vm1110, %v1152, 0.0
    %1172 = vadd.xlane.f32.xlu0 %v1171
    %v1173 = vpop.xlane.xlu0 %1172
    %v1174 = vsel %vm1110, %v1154, 0.0
    %1175 = vadd.xlane.f32.xlu0 %v1174
    %v1176 = vpop.xlane.xlu0 %1175
    %v1177 = vsel %vm1110, %v1156, 0.0
    %1178 = vadd.xlane.f32.xlu0 %v1177
    %v1179 = vpop.xlane.xlu0 %1178
    %v1180 = vsel %vm1110, %v1158, 0.0
    %1181 = vadd.xlane.f32.xlu0 %v1180
    %v1182 = vpop.xlane.xlu0 %1181
    %v1183 = vrcp.pop %v1161
    %v1184 = vmul.f32 %v1161, %v1183
    %v1185 = vsub.f32 1.0, %v1184
    %v1186 = vmul.f32 %v1183, %v1185
    %v1187 = vadd.f32 %v1183, %v1186
    %vm1188 = vweird.f32 %v1161
    %vm1189 = vweird.f32 %v1183
    %vm1190 = vmor %vm1188, %vm1189
    %v1191 = vsel %vm1190, %v1183, %v1187
    %v1192 = vand.u32 2147483647, %v1161
    %vm1193 = vcmp.eq.f32.partialorder %v1192, 8.507059e+37
    %v1194 = vand.u32 %v1161, 2147483648
    %v1195 = vor.u32 1.1754944e-38, %v1194
    %v1196 = vsel %vm1193, %v1195, %v1191
    %v1197 = vmul.f32 %v1144, %v1196
    %v1198 = vrcp.pop %v1164
    %v1199 = vmul.f32 %v1164, %v1198
    %v1200 = vsub.f32 1.0, %v1199
    %v1201 = vmul.f32 %v1198, %v1200
    %v1202 = vadd.f32 %v1198, %v1201
    %vm1203 = vweird.f32 %v1164
    %vm1204 = vweird.f32 %v1198
    %vm1205 = vmor %vm1203, %vm1204
    %v1206 = vsel %vm1205, %v1198, %v1202
    %v1207 = vand.u32 2147483647, %v1164
    %vm1208 = vcmp.eq.f32.partialorder %v1207, 8.507059e+37
    %v1209 = vand.u32 %v1164, 2147483648
    %v1210 = vor.u32 1.1754944e-38, %v1209
    %v1211 = vsel %vm1208, %v1210, %v1206
    %v1212 = vmul.f32 %v1146, %v1211
    %v1213 = vrcp.pop %v1167
    %v1214 = vmul.f32 %v1167, %v1213
    %v1215 = vsub.f32 1.0, %v1214
    %v1216 = vmul.f32 %v1213, %v1215
    %v1217 = vadd.f32 %v1213, %v1216
    %vm1218 = vweird.f32 %v1167
    %vm1219 = vweird.f32 %v1213
    %vm1220 = vmor %vm1218, %vm1219
    %v1221 = vsel %vm1220, %v1213, %v1217
    %v1222 = vand.u32 2147483647, %v1167
    %vm1223 = vcmp.eq.f32.partialorder %v1222, 8.507059e+37
    %v1224 = vand.u32 %v1167, 2147483648
    %v1225 = vor.u32 1.1754944e-38, %v1224
    %v1226 = vsel %vm1223, %v1225, %v1221
    %v1227 = vmul.f32 %v1148, %v1226
    %v1228 = vrcp.pop %v1170
    %v1229 = vmul.f32 %v1170, %v1228
    %v1230 = vsub.f32 1.0, %v1229
    %v1231 = vmul.f32 %v1228, %v1230
    %v1232 = vadd.f32 %v1228, %v1231
    %vm1233 = vweird.f32 %v1170
    %vm1234 = vweird.f32 %v1228
    %vm1235 = vmor %vm1233, %vm1234
    %v1236 = vsel %vm1235, %v1228, %v1232
    %v1237 = vand.u32 2147483647, %v1170
    %vm1238 = vcmp.eq.f32.partialorder %v1237, 8.507059e+37
    %v1239 = vand.u32 %v1170, 2147483648
    %v1240 = vor.u32 1.1754944e-38, %v1239
    %v1241 = vsel %vm1238, %v1240, %v1236
    %v1242 = vmul.f32 %v1150, %v1241
    %v1243 = vrcp.pop %v1173
    %v1244 = vmul.f32 %v1173, %v1243
    %v1245 = vsub.f32 1.0, %v1244
    %v1246 = vmul.f32 %v1243, %v1245
    %v1247 = vadd.f32 %v1243, %v1246
    %vm1248 = vweird.f32 %v1173
    %vm1249 = vweird.f32 %v1243
    %vm1250 = vmor %vm1248, %vm1249
    %v1251 = vsel %vm1250, %v1243, %v1247
    %v1252 = vand.u32 2147483647, %v1173
    %vm1253 = vcmp.eq.f32.partialorder %v1252, 8.507059e+37
    %v1254 = vand.u32 %v1173, 2147483648
    %v1255 = vor.u32 1.1754944e-38, %v1254
    %v1256 = vsel %vm1253, %v1255, %v1251
    %v1257 = vmul.f32 %v1152, %v1256
    %v1258 = vrcp.pop %v1176
    %v1259 = vmul.f32 %v1176, %v1258
    %v1260 = vsub.f32 1.0, %v1259
    %v1261 = vmul.f32 %v1258, %v1260
    %v1262 = vadd.f32 %v1258, %v1261
    %vm1263 = vweird.f32 %v1176
    %vm1264 = vweird.f32 %v1258
    %vm1265 = vmor %vm1263, %vm1264
    %v1266 = vsel %vm1265, %v1258, %v1262
    %v1267 = vand.u32 2147483647, %v1176
    %vm1268 = vcmp.eq.f32.partialorder %v1267, 8.507059e+37
    %v1269 = vand.u32 %v1176, 2147483648
    %v1270 = vor.u32 1.1754944e-38, %v1269
    %v1271 = vsel %vm1268, %v1270, %v1266
    %v1272 = vmul.f32 %v1154, %v1271
    %v1273 = vrcp.pop %v1179
    %v1274 = vmul.f32 %v1179, %v1273
    %v1275 = vsub.f32 1.0, %v1274
    %v1276 = vmul.f32 %v1273, %v1275
    %v1277 = vadd.f32 %v1273, %v1276
    %vm1278 = vweird.f32 %v1179
    %vm1279 = vweird.f32 %v1273
    %vm1280 = vmor %vm1278, %vm1279
    %v1281 = vsel %vm1280, %v1273, %v1277
    %v1282 = vand.u32 2147483647, %v1179
    %vm1283 = vcmp.eq.f32.partialorder %v1282, 8.507059e+37
    %v1284 = vand.u32 %v1179, 2147483648
    %v1285 = vor.u32 1.1754944e-38, %v1284
    %v1286 = vsel %vm1283, %v1285, %v1281
    %v1287 = vmul.f32 %v1156, %v1286
    %v1288 = vrcp.pop %v1182
    %v1289 = vmul.f32 %v1182, %v1288
    %v1290 = vsub.f32 1.0, %v1289
    %v1291 = vmul.f32 %v1288, %v1290
    %v1292 = vadd.f32 %v1288, %v1291
    %vm1293 = vweird.f32 %v1182
    %vm1294 = vweird.f32 %v1288
    %vm1295 = vmor %vm1293, %vm1294
    %v1296 = vsel %vm1295, %v1288, %v1292
    %v1297 = vand.u32 2147483647, %v1182
    %vm1298 = vcmp.eq.f32.partialorder %v1297, 8.507059e+37
    %v1299 = vand.u32 %v1182, 2147483648
    %v1300 = vor.u32 1.1754944e-38, %v1299
    %v1301 = vsel %vm1298, %v1300, %v1296
    %v1302 = vmul.f32 %v1158, %v1301
    %1303 = vmatpush.msra.mxu0 %v449
    %1304 = vmatpush.msra.mxu0 %v448
    %1305 = vmatpush.msra.mxu0 %v447
    %1306 = vmatpush.msra.mxu0 %v446
    %1307 = vmatpush.msra.mxu0 %v445
    %1308 = vmatpush.msra.mxu0 %v444
    %1309 = vmatpush.msra.mxu0 %v443
    %1310 = vmatpush.msra.mxu0 %v442
    %1311 = vmatpush.msra.mxu0 %v441
    %1312 = vmatpush.msra.mxu0 %v440
    %1313 = vmatpush.msra.mxu0 %v439
    %1314 = vmatpush.msra.mxu0 %v438
    %1315 = vmatpush.msra.mxu0 %v437
    %1316 = vmatpush.msra.mxu0 %v436
    %1317 = vmatpush.msra.mxu0 %v435
    %1318 = vmatpush.msra.mxu0 %v434
    %1319 = vmatmul.f32.gmra.mxu0 %v1197
    %v1320 = vpop.f32.mrf.mxu0
    %v1321 = vadd.f32 0.0, %v1320
    %1322 = vdwg.mxu0
    %1323 = vmatpush.msra.mxu0 %v465
    %1324 = vmatpush.msra.mxu0 %v464
    %1325 = vmatpush.msra.mxu0 %v463
    %1326 = vmatpush.msra.mxu0 %v462
    %1327 = vmatpush.msra.mxu0 %v461
    %1328 = vmatpush.msra.mxu0 %v460
    %1329 = vmatpush.msra.mxu0 %v459
    %1330 = vmatpush.msra.mxu0 %v458
    %1331 = vmatpush.msra.mxu0 %v457
    %1332 = vmatpush.msra.mxu0 %v456
    %1333 = vmatpush.msra.mxu0 %v455
    %1334 = vmatpush.msra.mxu0 %v454
    %1335 = vmatpush.msra.mxu0 %v453
    %1336 = vmatpush.msra.mxu0 %v452
    %1337 = vmatpush.msra.mxu0 %v451
    %1338 = vmatpush.msra.mxu0 %v450
    %1339 = vmatmul.f32.gmra.mxu0 %v1212
    %v1340 = vpop.f32.mrf.mxu0
    %v1341 = vadd.f32 0.0, %v1340
    %1342 = vdwg.mxu0
    %1343 = vmatpush.msra.mxu0 %v481
    %1344 = vmatpush.msra.mxu0 %v480
    %1345 = vmatpush.msra.mxu0 %v479
    %1346 = vmatpush.msra.mxu0 %v478
    %1347 = vmatpush.msra.mxu0 %v477
    %1348 = vmatpush.msra.mxu0 %v476
    %1349 = vmatpush.msra.mxu0 %v475
    %1350 = vmatpush.msra.mxu0 %v474
    %1351 = vmatpush.msra.mxu0 %v473
    %1352 = vmatpush.msra.mxu0 %v472
    %1353 = vmatpush.msra.mxu0 %v471
    %1354 = vmatpush.msra.mxu0 %v470
    %1355 = vmatpush.msra.mxu0 %v469
    %1356 = vmatpush.msra.mxu0 %v468
    %1357 = vmatpush.msra.mxu0 %v467
    %1358 = vmatpush.msra.mxu0 %v466
    %1359 = vmatmul.f32.gmra.mxu0 %v1227
    %v1360 = vpop.f32.mrf.mxu0
    %v1361 = vadd.f32 0.0, %v1360
    %1362 = vdwg.mxu0
    %1363 = vmatpush.msra.mxu0 %v497
    %1364 = vmatpush.msra.mxu0 %v496
    %1365 = vmatpush.msra.mxu0 %v495
    %1366 = vmatpush.msra.mxu0 %v494
    %1367 = vmatpush.msra.mxu0 %v493
    %1368 = vmatpush.msra.mxu0 %v492
    %1369 = vmatpush.msra.mxu0 %v491
    %1370 = vmatpush.msra.mxu0 %v490
    %1371 = vmatpush.msra.mxu0 %v489
    %1372 = vmatpush.msra.mxu0 %v488
    %1373 = vmatpush.msra.mxu0 %v487
    %1374 = vmatpush.msra.mxu0 %v486
    %1375 = vmatpush.msra.mxu0 %v485
    %1376 = vmatpush.msra.mxu0 %v484
    %1377 = vmatpush.msra.mxu0 %v483
    %1378 = vmatpush.msra.mxu0 %v482
    %1379 = vmatmul.f32.gmra.mxu0 %v1242
    %v1380 = vpop.f32.mrf.mxu0
    %v1381 = vadd.f32 0.0, %v1380
    %1382 = vdwg.mxu0
    %1383 = vmatpush.msra.mxu0 %v513
    %1384 = vmatpush.msra.mxu0 %v512
    %1385 = vmatpush.msra.mxu0 %v511
    %1386 = vmatpush.msra.mxu0 %v510
    %1387 = vmatpush.msra.mxu0 %v509
    %1388 = vmatpush.msra.mxu0 %v508
    %1389 = vmatpush.msra.mxu0 %v507
    %1390 = vmatpush.msra.mxu0 %v506
    %1391 = vmatpush.msra.mxu0 %v505
    %1392 = vmatpush.msra.mxu0 %v504
    %1393 = vmatpush.msra.mxu0 %v503
    %1394 = vmatpush.msra.mxu0 %v502
    %1395 = vmatpush.msra.mxu0 %v501
    %1396 = vmatpush.msra.mxu0 %v500
    %1397 = vmatpush.msra.mxu0 %v499
    %1398 = vmatpush.msra.mxu0 %v498
    %1399 = vmatmul.f32.gmra.mxu0 %v1257
    %v1400 = vpop.f32.mrf.mxu0
    %v1401 = vadd.f32 0.0, %v1400
    %1402 = vdwg.mxu0
    %1403 = vmatpush.msra.mxu0 %v529
    %1404 = vmatpush.msra.mxu0 %v528
    %1405 = vmatpush.msra.mxu0 %v527
    %1406 = vmatpush.msra.mxu0 %v526
    %1407 = vmatpush.msra.mxu0 %v525
    %1408 = vmatpush.msra.mxu0 %v524
    %1409 = vmatpush.msra.mxu0 %v523
    %1410 = vmatpush.msra.mxu0 %v522
    %1411 = vmatpush.msra.mxu0 %v521
    %1412 = vmatpush.msra.mxu0 %v520
    %1413 = vmatpush.msra.mxu0 %v519
    %1414 = vmatpush.msra.mxu0 %v518
    %1415 = vmatpush.msra.mxu0 %v517
    %1416 = vmatpush.msra.mxu0 %v516
    %1417 = vmatpush.msra.mxu0 %v515
    %1418 = vmatpush.msra.mxu0 %v514
    %1419 = vmatmul.f32.gmra.mxu0 %v1272
    %v1420 = vpop.f32.mrf.mxu0
    %v1421 = vadd.f32 0.0, %v1420
    %1422 = vdwg.mxu0
    %1423 = vmatpush.msra.mxu0 %v545
    %1424 = vmatpush.msra.mxu0 %v544
    %1425 = vmatpush.msra.mxu0 %v543
    %1426 = vmatpush.msra.mxu0 %v542
    %1427 = vmatpush.msra.mxu0 %v541
    %1428 = vmatpush.msra.mxu0 %v540
    %1429 = vmatpush.msra.mxu0 %v539
    %1430 = vmatpush.msra.mxu0 %v538
    %1431 = vmatpush.msra.mxu0 %v537
    %1432 = vmatpush.msra.mxu0 %v536
    %1433 = vmatpush.msra.mxu0 %v535
    %1434 = vmatpush.msra.mxu0 %v534
    %1435 = vmatpush.msra.mxu0 %v533
    %1436 = vmatpush.msra.mxu0 %v532
    %1437 = vmatpush.msra.mxu0 %v531
    %1438 = vmatpush.msra.mxu0 %v530
    %1439 = vmatmul.f32.gmra.mxu0 %v1287
    %v1440 = vpop.f32.mrf.mxu0
    %v1441 = vadd.f32 0.0, %v1440
    %1442 = vdwg.mxu0
    %1443 = vmatpush.msra.mxu0 %v561
    %1444 = vmatpush.msra.mxu0 %v560
    %1445 = vmatpush.msra.mxu0 %v559
    %1446 = vmatpush.msra.mxu0 %v558
    %1447 = vmatpush.msra.mxu0 %v557
    %1448 = vmatpush.msra.mxu0 %v556
    %1449 = vmatpush.msra.mxu0 %v555
    %1450 = vmatpush.msra.mxu0 %v554
    %1451 = vmatpush.msra.mxu0 %v553
    %1452 = vmatpush.msra.mxu0 %v552
    %1453 = vmatpush.msra.mxu0 %v551
    %1454 = vmatpush.msra.mxu0 %v550
    %1455 = vmatpush.msra.mxu0 %v549
    %1456 = vmatpush.msra.mxu0 %v548
    %1457 = vmatpush.msra.mxu0 %v547
    %1458 = vmatpush.msra.mxu0 %v546
    %1459 = vmatmul.f32.gmra.mxu0 %v1302
    %v1460 = vpop.f32.mrf.mxu0
    %v1461 = vadd.f32 0.0, %v1460
    %1462 = vdwg.mxu0
    %v1463 = vld [vmem:[%s3] sm:$0xff]
    %v1464 = vld [vmem:[%s3 + $0x8] sm:$0xff]
    %v1465 = vld [vmem:[%s3 + $0x10] sm:$0xff]
    %v1466 = vld [vmem:[%s3 + $0x18] sm:$0xff]
    %v1467 = vld [vmem:[%s4] sm:$0x1]
    %v1469 = vperm.slane %v1467, 0
    %v1479 = vrot.slane %v1341, 7
    %vm1480 = vcmask 1041409
    %v1481 = vsel %vm1480, %v1479, %v1321
    %v1482 = vrot.slane %v1361, 6
    %vm1483 = vcmask 1042434
    %v1484 = vsel %vm1483, %v1482, %v1481
    %v1485 = vrot.slane %v1381, 5
    %vm1486 = vcmask 1043459
    %v1487 = vsel %vm1486, %v1485, %v1484
    %v1488 = vrot.slane %v1401, 4
    %vm1489 = vcmask 1044484
    %v1490 = vsel %vm1489, %v1488, %v1487
    %v1491 = vrot.slane %v1421, 3
    %vm1492 = vcmask 1045509
    %v1493 = vsel %vm1492, %v1491, %v1490
    %v1494 = vrot.slane %v1441, 2
    %vm1495 = vcmask 1046534
    %v1496 = vsel %vm1495, %v1494, %v1493
    %v1497 = vrot.slane %v1461, 1
    %vm1498 = vcmask 1047559
    %v1499 = vsel %vm1498, %v1497, %v1496
    %v1500 = vsel %vm305, %v1499, 0
    %1502 = vmatpush.msra.mxu0 0.0
    %1503 = vmatpush.msra.mxu0 0.0
    %1504 = vmatpush.msra.mxu0 0.0
    %1505 = vmatpush.msra.mxu0 0.0
    %1506 = vmatpush.msra.mxu0 0.0
    %1507 = vmatpush.msra.mxu0 0.0
    %1508 = vmatpush.msra.mxu0 0.0
    %1509 = vmatpush.msra.mxu0 0.0
    %1510 = vmatpush.msra.mxu0 0.0
    %1511 = vmatpush.msra.mxu0 0.0
    %1512 = vmatpush.msra.mxu0 0.0
    %1513 = vmatpush.msra.mxu0 0.0
    %1514 = vmatpush.msra.mxu0 %v1466
    %1515 = vmatpush.msra.mxu0 %v1465
    %1516 = vmatpush.msra.mxu0 %v1464
    %1517 = vmatpush.msra.mxu0 %v1463
    %1518 = vmatmul.f32.gmra.mxu0 %v1500
    %v1519 = vpop.f32.mrf.mxu0
    %v1520 = vadd.f32 %v1469, %v1519
    %1521 = vdwg.mxu0
    %v1522 = vmax.f32 %v1520, 0.0
    %v1523 = vrot.slane %v1321, 1
    %v1524 = vsel %vm1480, %v1341, %v1523
    %v1525 = vrot.slane %v1361, 7
    %v1526 = vsel %vm1483, %v1525, %v1524
    %v1527 = vrot.slane %v1381, 6
    %v1528 = vsel %vm1486, %v1527, %v1526
    %v1529 = vrot.slane %v1401, 5
    %v1530 = vsel %vm1489, %v1529, %v1528
    %v1531 = vrot.slane %v1421, 4
    %v1532 = vsel %vm1492, %v1531, %v1530
    %v1533 = vrot.slane %v1441, 3
    %v1534 = vsel %vm1495, %v1533, %v1532
    %v1535 = vrot.slane %v1461, 2
    %v1536 = vsel %vm1498, %v1535, %v1534
    %v1537 = vsel %vm305, %v1536, 0
    %1539 = vmatpush.msra.mxu0 0.0
    %1540 = vmatpush.msra.mxu0 0.0
    %1541 = vmatpush.msra.mxu0 0.0
    %1542 = vmatpush.msra.mxu0 0.0
    %1543 = vmatpush.msra.mxu0 0.0
    %1544 = vmatpush.msra.mxu0 0.0
    %1545 = vmatpush.msra.mxu0 0.0
    %1546 = vmatpush.msra.mxu0 0.0
    %1547 = vmatpush.msra.mxu0 0.0
    %1548 = vmatpush.msra.mxu0 0.0
    %1549 = vmatpush.msra.mxu0 0.0
    %1550 = vmatpush.msra.mxu0 0.0
    %1551 = vmatpush.msra.mxu0 %v1466
    %1552 = vmatpush.msra.mxu0 %v1465
    %1553 = vmatpush.msra.mxu0 %v1464
    %1554 = vmatpush.msra.mxu0 %v1463
    %1555 = vmatmul.f32.gmra.mxu0 %v1537
    %v1556 = vpop.f32.mrf.mxu0
    %v1557 = vadd.f32 %v1469, %v1556
    %1558 = vdwg.mxu0
    %v1559 = vmax.f32 %v1557, 0.0
    %v1560 = vrot.slane %v1321, 2
    %v1561 = vrot.slane %v1341, 1
    %v1562 = vsel %vm1480, %v1561, %v1560
    %v1563 = vsel %vm1483, %v1361, %v1562
    %v1564 = vrot.slane %v1381, 7
    %v1565 = vsel %vm1486, %v1564, %v1563
    %v1566 = vrot.slane %v1401, 6
    %v1567 = vsel %vm1489, %v1566, %v1565
    %v1568 = vrot.slane %v1421, 5
    %v1569 = vsel %vm1492, %v1568, %v1567
    %v1570 = vrot.slane %v1441, 4
    %v1571 = vsel %vm1495, %v1570, %v1569
    %v1572 = vrot.slane %v1461, 3
    %v1573 = vsel %vm1498, %v1572, %v1571
    %v1574 = vsel %vm305, %v1573, 0
    %1576 = vmatpush.msra.mxu0 0.0
    %1577 = vmatpush.msra.mxu0 0.0
    %1578 = vmatpush.msra.mxu0 0.0
    %1579 = vmatpush.msra.mxu0 0.0
    %1580 = vmatpush.msra.mxu0 0.0
    %1581 = vmatpush.msra.mxu0 0.0
    %1582 = vmatpush.msra.mxu0 0.0
    %1583 = vmatpush.msra.mxu0 0.0
    %1584 = vmatpush.msra.mxu0 0.0
    %1585 = vmatpush.msra.mxu0 0.0
    %1586 = vmatpush.msra.mxu0 0.0
    %1587 = vmatpush.msra.mxu0 0.0
    %1588 = vmatpush.msra.mxu0 %v1466
    %1589 = vmatpush.msra.mxu0 %v1465
    %1590 = vmatpush.msra.mxu0 %v1464
    %1591 = vmatpush.msra.mxu0 %v1463
    %1592 = vmatmul.f32.gmra.mxu0 %v1574
    %v1593 = vpop.f32.mrf.mxu0
    %v1594 = vadd.f32 %v1469, %v1593
    %1595 = vdwg.mxu0
    %v1596 = vmax.f32 %v1594, 0.0
    %v1597 = vadd.f32 %v1522, %v1559
    %v1598 = vadd.f32 %v1597, %v1596
    %v1599 = vmul.f32 %v1598, 0.33333334
    %v1600 = vsub.f32 %v1522, %v1599
    %v1601 = vmul.f32 %v1600, %v1600
    %v1602 = vadd.f32 %v1601, 0.0
    %v1603 = vsub.f32 %v1559, %v1599
    %v1604 = vmul.f32 %v1603, %v1603
    %v1605 = vadd.f32 %v1602, %v1604
    %v1606 = vsub.f32 %v1596, %v1599
    %v1607 = vmul.f32 %v1606, %v1606
    %v1608 = vadd.f32 %v1605, %v1607
    %v1609 = vmul.f32 %v1608, 0.33333334
    %v1610 = vadd.f32 %v1609, 1e-05
    %v1611 = vrsqrt.pop %v1610
    %v1612 = vmul.f32 %v1611, %v1610
    %v1613 = vmul.f32 %v1612, %v1611
    %v1614 = vmul.f32 0.5, %v1613
    %v1615 = vsub.f32 1.5, %v1614
    %v1616 = vmul.f32 %v1611, %v1615
    %vm1617 = vweird.f32 %v1610
    %vm1618 = vweird.f32 %v1611
    %vm1619 = vmor %vm1617, %vm1618
    %v1620 = vsel %vm1619, %v1611, %v1616
    %v1621 = vld [vmem:[%s8] sm:$0x1]
    %v1622 = vmul.f32 %v1600, %v1620
    %v1623 = vld [vmem:[%s5] sm:$0x1]
    %v1625 = vperm.slane %v1623, 0
    %v1627 = vmul.f32 %v1622, %v1625
    %v1628 = vld [vmem:[%s6] sm:$0x1]
    %v1630 = vperm.slane %v1628, 0
    %v1632 = vadd.f32 %v1627, %v1630
    %v1633 = vld [vmem:[%s7] sm:$0xff]
    %vm1634 = vcmask 64512
    %v1636 = vsel %vm1634, %v1632, 0
    %1638 = vmatpush.msra.mxu0 0.0
    %1639 = vmatpush.msra.mxu0 0.0
    %1640 = vmatpush.msra.mxu0 0.0
    %1641 = vmatpush.msra.mxu0 0.0
    %1642 = vmatpush.msra.mxu0 0.0
    %1643 = vmatpush.msra.mxu0 0.0
    %1644 = vmatpush.msra.mxu0 0.0
    %1645 = vmatpush.msra.mxu0 0.0
    %1646 = vmatpush.msra.mxu0 0.0
    %1647 = vmatpush.msra.mxu0 0.0
    %1648 = vmatpush.msra.mxu0 0.0
    %1649 = vmatpush.msra.mxu0 0.0
    %1650 = vmatpush.msra.mxu0 0.0
    %1651 = vmatpush.msra.mxu0 0.0
    %1652 = vmatpush.msra.mxu0 0.0
    %1653 = vmatpush.msra.mxu0 %v1633
    %1654 = vmatmul.f32.gmra.mxu0 %v1636
    %v1655 = vpop.f32.mrf.mxu0
    %v1656 = vadd.f32 0.0, %v1655
    %1657 = vdwg.mxu0
    %v1659 = vperm.slane %v1621, 0
    %v1661 = vadd.f32 %v1659, %v1656
    %v1662 = vmul.f32 %v1603, %v1620
    %s1663 = scalar_lea.vmem %s5, 1
    %v1664 = vld [vmem:[%s1663] sm:$0x1]
    %v1666 = vperm.slane %v1664, 0
    %v1668 = vmul.f32 %v1662, %v1666
    %s1669 = scalar_lea.vmem %s6, 1
    %v1670 = vld [vmem:[%s1669] sm:$0x1]
    %v1672 = vperm.slane %v1670, 0
    %v1674 = vadd.f32 %v1668, %v1672
    %s1675 = scalar_lea.vmem %s7, 8
    %v1676 = vld [vmem:[%s1675] sm:$0xff]
    %v1678 = vsel %vm1634, %v1674, 0
    %1680 = vmatpush.msra.mxu0 0.0
    %1681 = vmatpush.msra.mxu0 0.0
    %1682 = vmatpush.msra.mxu0 0.0
    %1683 = vmatpush.msra.mxu0 0.0
    %1684 = vmatpush.msra.mxu0 0.0
    %1685 = vmatpush.msra.mxu0 0.0
    %1686 = vmatpush.msra.mxu0 0.0
    %1687 = vmatpush.msra.mxu0 0.0
    %1688 = vmatpush.msra.mxu0 0.0
    %1689 = vmatpush.msra.mxu0 0.0
    %1690 = vmatpush.msra.mxu0 0.0
    %1691 = vmatpush.msra.mxu0 0.0
    %1692 = vmatpush.msra.mxu0 0.0
    %1693 = vmatpush.msra.mxu0 0.0
    %1694 = vmatpush.msra.mxu0 0.0
    %1695 = vmatpush.msra.mxu0 %v1676
    %1696 = vmatmul.f32.gmra.mxu0 %v1678
    %v1697 = vpop.f32.mrf.mxu0
    %v1698 = vadd.f32 0.0, %v1697
    %1699 = vdwg.mxu0
    %v1700 = vadd.f32 %v1661, %v1698
    %v1701 = vmul.f32 %v1606, %v1620
    %s1702 = scalar_lea.vmem %s5, 2
    %v1703 = vld [vmem:[%s1702] sm:$0x1]
    %v1705 = vperm.slane %v1703, 0
    %v1707 = vmul.f32 %v1701, %v1705
    %s1708 = scalar_lea.vmem %s6, 2
    %v1709 = vld [vmem:[%s1708] sm:$0x1]
    %v1711 = vperm.slane %v1709, 0
    %v1713 = vadd.f32 %v1707, %v1711
    %s1714 = scalar_lea.vmem %s7, 16
    %v1715 = vld [vmem:[%s1714] sm:$0xff]
    %v1717 = vsel %vm1634, %v1713, 0
    %1719 = vmatpush.msra.mxu0 0.0
    %1720 = vmatpush.msra.mxu0 0.0
    %1721 = vmatpush.msra.mxu0 0.0
    %1722 = vmatpush.msra.mxu0 0.0
    %1723 = vmatpush.msra.mxu0 0.0
    %1724 = vmatpush.msra.mxu0 0.0
    %1725 = vmatpush.msra.mxu0 0.0
    %1726 = vmatpush.msra.mxu0 0.0
    %1727 = vmatpush.msra.mxu0 0.0
    %1728 = vmatpush.msra.mxu0 0.0
    %1729 = vmatpush.msra.mxu0 0.0
    %1730 = vmatpush.msra.mxu0 0.0
    %1731 = vmatpush.msra.mxu0 0.0
    %1732 = vmatpush.msra.mxu0 0.0
    %1733 = vmatpush.msra.mxu0 0.0
    %1734 = vmatpush.msra.mxu0 %v1715
    %1735 = vmatmul.f32.gmra.mxu0 %v1717
    %v1736 = vpop.f32.mrf.mxu0
    %v1737 = vadd.f32 0.0, %v1736
    %1738 = vdwg.mxu0
    %v1739 = vadd.f32 %v1700, %v1737
    %1740 = vst [vmem:[#allocation3] sm:$0xff] %v1739
    // Predicated region
    $region38: #{tpu_custom_call.1} parent=1 // pred_check
      _
    $region39: #{tpu_custom_call.1} parent=1 // pred_check_branch
      %1742 = sbr.rel (0) target = $region41
    $region40: #{tpu_custom_call.1} parent=1 // pred_region
      %1744 = vsyncadd [#allocation4], 0
      %s1746 = sshll.u32 [#allocation3], 4
      %s1747 = int_to_ptr.vmem [resolvable:$true] %s1746
      %s1748 = sshll.u32 %s9, 4
      %s1749 = int_to_ptr.hbm [resolvable:$true] %s1748
      %1751 = dma.vmem_to_hbm [thread:$0]  %s1747, 128, %s1749, [#allocation4]
    $region41: #{tpu_custom_call.1} parent=1 // pred_fallthru
      _
    // Predicated region
    $region42: #{tpu_custom_call.1} parent=1 // pred_check
      _
    $region43: #{tpu_custom_call.1} parent=1 // pred_check_branch
      %1753 = sbr.rel (0) target = $region45
    $region44: #{tpu_custom_call.1} parent=1 // pred_region
      %1755 = dma.done [#allocation4], 128
    $region45: #{tpu_custom_call.1} parent=1 // pred_fallthru
      _
    %1756 = vsyncpa [#allocation4], 1

</llo_original>
